<compile_context>
chip_gen: v6e
topology: v6e:2x2x1
jax: 0.10.0
libtpu: 0.0.40
codegen_flags: <defaults>
</compile_context>

<pallas_src>
import functools

import jax
import jax.numpy as jnp
from jax.experimental import pallas as pl
from jax.experimental.pallas import tpu as pltpu

# Geometry implied by the PyTorch module.  Module batch N is taken as 2 so that
# softmax(dim=0) is non-trivial (the module's forward works for any batch).
N, C_IN, C_OUT, H, W, K = 2, 8, 1, 5, 5, 3
PAD = 1  # conv-equivalent padding for ConvTranspose2d(k=3, s=1, p=1): k - 1 - p = 1


def _convt_tanh_softmax_kernel(x_ref, w_ref, b_ref, o_ref, *, n, c_in, h, w, k):
    """One B_TILE-wide slab of independent problems per grid step.

    x_ref: (n*c_in, h+2, w+2, BT) f32 VMEM  -- zero-padded input, problems on lanes
    w_ref: (c_in*k*k,) f32 SMEM             -- flattened (unflipped) ConvTranspose2d weight
    b_ref: (1,)        f32 SMEM             -- bias (C_OUT == 1)
    o_ref: (n, h, w, BT) f32 VMEM           -- softmax(tanh(convT), axis=0)
    """
    bt = o_ref.shape[-1]
    bias = b_ref[0]
    kk = k * k

    # ConvTranspose2d(s=1, p=1) == conv over the 1-zero-padded input with the kernel
    # flipped spatially; the flip is folded into the static weight index below.
    v2 = []
    for ni in range(n):
        acc = jnp.full((h, w, bt), bias, dtype=jnp.float32)
        for c in range(c_in):
            x_nc = x_ref[ni * c_in + c]                    # (h+2, w+2, BT)
            for kh in range(k):
                for kw in range(k):
                    wgt = w_ref[c * kk + (k - 1 - kh) * k + (k - 1 - kw)]
                    acc = acc + x_nc[kh:kh + h, kw:kw + w, :] * wgt
        v2.append(jnp.tanh(acc))

    # Numerically-stable softmax over the module's batch axis (dim=0): purely
    # elementwise across the n slabs (VPU/EUP only, no cross-lane work).
    m = v2[0]
    for ni in range(1, n):
        m = jnp.maximum(m, v2[ni])
    e = [jnp.exp(v - m) for v in v2]
    s = e[0]
    for ni in range(1, n):
        s = s + e[ni]
    inv = 1.0 / s
    for ni in range(n):
        o_ref[ni] = e[ni] * inv


def _round_up(x, m):
    return ((x + m - 1) // m) * m


def model_forward_batched(xs, weight, bias, b_tile=None):
    """xs: (B, N, C_IN, H, W) -- B independent invocations of the module.

    weight: (C_IN, C_OUT, K, K) (PyTorch ConvTranspose2d layout); bias: (C_OUT,).
    Returns (B, N, C_OUT, H, W).
    """
    xs = jnp.asarray(xs, jnp.float32)
    b, n, c_in, h, w = xs.shape
    assert (c_in, h, w) == (C_IN, H, W)
    assert weight.shape == (C_IN, C_OUT, K, K) and bias.shape == (C_OUT,)

    if b_tile is None:
        # Lane-dense (>=128, multiple of 128) and VMEM-safe on v5e/v6e/v7x.
        b_tile = min(512, _round_up(b, 128))
    assert b_tile % 128 == 0
    bp = _round_up(b, b_tile)
    num_tiles = bp // b_tile

    # Problems-on-lanes + fold the ConvTranspose2d implicit zero padding here.
    xt = jnp.moveaxis(xs, 0, -1)                               # (N, C_IN, H, W, B)
    xp = jnp.pad(xt, ((0, 0), (0, 0), (PAD, PAD), (PAD, PAD), (0, bp - b)))
    hp, wp = h + 2 * PAD, w + 2 * PAD
    xp = xp.reshape(n * c_in, hp, wp, bp)                      # (N*C_IN, H+2, W+2, Bp)

    w_flat = jnp.asarray(weight, jnp.float32)[:, 0, :, :].reshape(C_IN * K * K)
    b_vec = jnp.asarray(bias, jnp.float32).reshape(1)

    kernel = functools.partial(
        _convt_tanh_softmax_kernel, n=n, c_in=c_in, h=h, w=w, k=K)

    out_flat = pl.pallas_call(
        kernel,
        out_shape=jax.ShapeDtypeStruct((n, h, w, bp), jnp.float32),
        grid=(num_tiles,),
        in_specs=[
            pl.BlockSpec((n * c_in, hp, wp, b_tile), lambda i: (0, 0, 0, i)),
            pl.BlockSpec(memory_space=pltpu.MemorySpace.SMEM),
            pl.BlockSpec(memory_space=pltpu.MemorySpace.SMEM),
        ],
        out_specs=pl.BlockSpec((n, h, w, b_tile), lambda i: (0, 0, 0, i)),
        compiler_params=pltpu.CompilerParams(
            dimension_semantics=("parallel",)),   # v7x: tiles split across the 2 TCs
    )(xp, w_flat, b_vec)

    out = jnp.moveaxis(out_flat[..., :b], -1, 0)               # (B, N, H, W)
    return out[:, :, None, :, :]                               # (B, N, C_OUT=1, H, W)


def model_forward(x, weight, bias):
    """Single problem (N, C_IN, H, W), matching the PyTorch module's forward."""
    return model_forward_batched(x[None], weight, bias)[0]


def model_forward_ref(x, weight, bias):
    """Pure-JAX reference: ConvTranspose2d(stride=1, padding=1) + tanh + softmax(dim=0)."""
    w_eff = jnp.transpose(weight, (1, 0, 2, 3))[:, :, ::-1, ::-1]   # OIHW, flipped
    v1 = jax.lax.conv_general_dilated(
        x, w_eff, window_strides=(1, 1), padding=((PAD, PAD), (PAD, PAD)),
        dimension_numbers=("NCHW", "OIHW", "NCHW"),
    ) + bias[None, :, None, None]
    return jax.nn.softmax(jnp.tanh(v1), axis=0)


if __name__ == "__main__":
    key = jax.random.PRNGKey(0)
    kx, kw, kb = jax.random.split(key, 3)

    B = 256  # batch of independent problem instances (amortizes fixed costs)
    xs = jax.random.normal(kx, (B, N, C_IN, H, W), dtype=jnp.float32)
    # ConvTranspose2d weight layout: (in_channels, out_channels, kH, kW)
    weight = 0.1 * jax.random.normal(kw, (C_IN, C_OUT, K, K), dtype=jnp.float32)
    bias = 0.1 * jax.random.normal(kb, (C_OUT,), dtype=jnp.float32)

    # Two-step grid (b_tile=128) exercises the blocked, lane-dense pipeline.
    out = jax.block_until_ready(model_forward_batched(xs, weight, bias, b_tile=128))
    ref = jax.block_until_ready(
        jax.vmap(lambda xi: model_forward_ref(xi, weight, bias))(xs))

    assert out.shape == (B, N, C_OUT, H, W)
    assert jnp.allclose(out, ref, atol=1e-5, rtol=1e-5)

    # Single-problem path (exact module signature) runs through the same kernel
    # (B=1 padded to one 128-lane tile, grid=(1,)).
    out1 = jax.block_until_ready(model_forward(xs[0], weight, bias))
    assert out1.shape == (N, C_OUT, H, W)
    assert jnp.allclose(out1, ref[0], atol=1e-5, rtol=1e-5)

    print("KERNEL_OK")
</pallas_src>

<mosaic_0001>
module attributes {stable_mosaic.version = 11 : i64} {
  func.func @_convt_tanh_softmax_kernel(%arg0: i32, %arg1: memref<16x7x7x128xf32, #tpu.memory_space<vmem>>, %arg2: memref<72xf32, #tpu.memory_space<smem>>, %arg3: memref<1xf32, #tpu.memory_space<smem>>, %arg4: memref<2x5x5x128xf32, #tpu.memory_space<vmem>>) attributes {dimension_semantics = [#tpu.dimension_semantics<parallel>], iteration_bounds = array<i64: 2>, scalar_prefetch = 0 : i64, scratch_operands = 0 : i64, tpu.core_type = #tpu.core_type<tc>, window_params = [{transform_indices = @transform_0, window_bounds = array<i64: 16, 7, 7, 128>}, {transform_indices = @transform_1, window_bounds = array<i64: 72>}, {transform_indices = @transform_2, window_bounds = array<i64: 1>}, {transform_indices = @transform_3, window_bounds = array<i64: 2, 5, 5, 128>}]} {
    %c0 = arith.constant 0 : index
    %0 = memref.load %arg3[%c0] : memref<1xf32, #tpu.memory_space<smem>>
    %1 = vector.broadcast %0 : f32 to vector<5x5x128xf32>
    %c0_0 = arith.constant 0 : index
    %c0_1 = arith.constant 0 : index
    %c0_2 = arith.constant 0 : index
    %c0_3 = arith.constant 0 : index
    %2 = vector.load %arg1[%c0_0, %c0_1, %c0_2, %c0_3] : memref<16x7x7x128xf32, #tpu.memory_space<vmem>>, vector<1x7x7x128xf32>
    %3 = vector.shape_cast %2 : vector<1x7x7x128xf32> to vector<7x7x128xf32>
    %c8 = arith.constant 8 : index
    %4 = memref.load %arg2[%c8] : memref<72xf32, #tpu.memory_space<smem>>
    %5 = vector.extract_strided_slice %3 {offsets = [0, 0, 0], sizes = [5, 5, 128], strides = [1, 1, 1]} : vector<7x7x128xf32> to vector<5x5x128xf32>
    %6 = vector.broadcast %4 : f32 to vector<5x5x128xf32>
    %7 = arith.mulf %5, %6 : vector<5x5x128xf32>
    %8 = arith.addf %1, %7 : vector<5x5x128xf32>
    %c7 = arith.constant 7 : index
    %9 = memref.load %arg2[%c7] : memref<72xf32, #tpu.memory_space<smem>>
    %10 = vector.extract_strided_slice %3 {offsets = [0, 1, 0], sizes = [5, 5, 128], strides = [1, 1, 1]} : vector<7x7x128xf32> to vector<5x5x128xf32>
    %11 = vector.broadcast %9 : f32 to vector<5x5x128xf32>
    %12 = arith.mulf %10, %11 : vector<5x5x128xf32>
    %13 = arith.addf %8, %12 : vector<5x5x128xf32>
    %c6 = arith.constant 6 : index
    %14 = memref.load %arg2[%c6] : memref<72xf32, #tpu.memory_space<smem>>
    %15 = vector.extract_strided_slice %3 {offsets = [0, 2, 0], sizes = [5, 5, 128], strides = [1, 1, 1]} : vector<7x7x128xf32> to vector<5x5x128xf32>
    %16 = vector.broadcast %14 : f32 to vector<5x5x128xf32>
    %17 = arith.mulf %15, %16 : vector<5x5x128xf32>
    %18 = arith.addf %13, %17 : vector<5x5x128xf32>
    %c5 = arith.constant 5 : index
    %19 = memref.load %arg2[%c5] : memref<72xf32, #tpu.memory_space<smem>>
    %20 = vector.extract_strided_slice %3 {offsets = [1, 0, 0], sizes = [5, 5, 128], strides = [1, 1, 1]} : vector<7x7x128xf32> to vector<5x5x128xf32>
    %21 = vector.broadcast %19 : f32 to vector<5x5x128xf32>
    %22 = arith.mulf %20, %21 : vector<5x5x128xf32>
    %23 = arith.addf %18, %22 : vector<5x5x128xf32>
    %c4 = arith.constant 4 : index
    %24 = memref.load %arg2[%c4] : memref<72xf32, #tpu.memory_space<smem>>
    %25 = vector.extract_strided_slice %3 {offsets = [1, 1, 0], sizes = [5, 5, 128], strides = [1, 1, 1]} : vector<7x7x128xf32> to vector<5x5x128xf32>
    %26 = vector.broadcast %24 : f32 to vector<5x5x128xf32>
    %27 = arith.mulf %25, %26 : vector<5x5x128xf32>
    %28 = arith.addf %23, %27 : vector<5x5x128xf32>
    %c3 = arith.constant 3 : index
    %29 = memref.load %arg2[%c3] : memref<72xf32, #tpu.memory_space<smem>>
    %30 = vector.extract_strided_slice %3 {offsets = [1, 2, 0], sizes = [5, 5, 128], strides = [1, 1, 1]} : vector<7x7x128xf32> to vector<5x5x128xf32>
    %31 = vector.broadcast %29 : f32 to vector<5x5x128xf32>
    %32 = arith.mulf %30, %31 : vector<5x5x128xf32>
    %33 = arith.addf %28, %32 : vector<5x5x128xf32>
    %c2 = arith.constant 2 : index
    %34 = memref.load %arg2[%c2] : memref<72xf32, #tpu.memory_space<smem>>
    %35 = vector.extract_strided_slice %3 {offsets = [2, 0, 0], sizes = [5, 5, 128], strides = [1, 1, 1]} : vector<7x7x128xf32> to vector<5x5x128xf32>
    %36 = vector.broadcast %34 : f32 to vector<5x5x128xf32>
    %37 = arith.mulf %35, %36 : vector<5x5x128xf32>
    %38 = arith.addf %33, %37 : vector<5x5x128xf32>
    %c1 = arith.constant 1 : index
    %39 = memref.load %arg2[%c1] : memref<72xf32, #tpu.memory_space<smem>>
    %40 = vector.extract_strided_slice %3 {offsets = [2, 1, 0], sizes = [5, 5, 128], strides = [1, 1, 1]} : vector<7x7x128xf32> to vector<5x5x128xf32>
    %41 = vector.broadcast %39 : f32 to vector<5x5x128xf32>
    %42 = arith.mulf %40, %41 : vector<5x5x128xf32>
    %43 = arith.addf %38, %42 : vector<5x5x128xf32>
    %c0_4 = arith.constant 0 : index
    %44 = memref.load %arg2[%c0_4] : memref<72xf32, #tpu.memory_space<smem>>
    %45 = vector.extract_strided_slice %3 {offsets = [2, 2, 0], sizes = [5, 5, 128], strides = [1, 1, 1]} : vector<7x7x128xf32> to vector<5x5x128xf32>
    %46 = vector.broadcast %44 : f32 to vector<5x5x128xf32>
    %47 = arith.mulf %45, %46 : vector<5x5x128xf32>
    %48 = arith.addf %43, %47 : vector<5x5x128xf32>
    %c1_5 = arith.constant 1 : index
    %c0_6 = arith.constant 0 : index
    %c0_7 = arith.constant 0 : index
    %c0_8 = arith.constant 0 : index
    %49 = vector.load %arg1[%c1_5, %c0_6, %c0_7, %c0_8] : memref<16x7x7x128xf32, #tpu.memory_space<vmem>>, vector<1x7x7x128xf32>
    %50 = vector.shape_cast %49 : vector<1x7x7x128xf32> to vector<7x7x128xf32>
    %c17 = arith.constant 17 : index
    %51 = memref.load %arg2[%c17] : memref<72xf32, #tpu.memory_space<smem>>
    %52 = vector.extract_strided_slice %50 {offsets = [0, 0, 0], sizes = [5, 5, 128], strides = [1, 1, 1]} : vector<7x7x128xf32> to vector<5x5x128xf32>
    %53 = vector.broadcast %51 : f32 to vector<5x5x128xf32>
    %54 = arith.mulf %52, %53 : vector<5x5x128xf32>
    %55 = arith.addf %48, %54 : vector<5x5x128xf32>
    %c16 = arith.constant 16 : index
    %56 = memref.load %arg2[%c16] : memref<72xf32, #tpu.memory_space<smem>>
    %57 = vector.extract_strided_slice %50 {offsets = [0, 1, 0], sizes = [5, 5, 128], strides = [1, 1, 1]} : vector<7x7x128xf32> to vector<5x5x128xf32>
    %58 = vector.broadcast %56 : f32 to vector<5x5x128xf32>
    %59 = arith.mulf %57, %58 : vector<5x5x128xf32>
    %60 = arith.addf %55, %59 : vector<5x5x128xf32>
    %c15 = arith.constant 15 : index
    %61 = memref.load %arg2[%c15] : memref<72xf32, #tpu.memory_space<smem>>
    %62 = vector.extract_strided_slice %50 {offsets = [0, 2, 0], sizes = [5, 5, 128], strides = [1, 1, 1]} : vector<7x7x128xf32> to vector<5x5x128xf32>
    %63 = vector.broadcast %61 : f32 to vector<5x5x128xf32>
    %64 = arith.mulf %62, %63 : vector<5x5x128xf32>
    %65 = arith.addf %60, %64 : vector<5x5x128xf32>
    %c14 = arith.constant 14 : index
    %66 = memref.load %arg2[%c14] : memref<72xf32, #tpu.memory_space<smem>>
    %67 = vector.extract_strided_slice %50 {offsets = [1, 0, 0], sizes = [5, 5, 128], strides = [1, 1, 1]} : vector<7x7x128xf32> to vector<5x5x128xf32>
    %68 = vector.broadcast %66 : f32 to vector<5x5x128xf32>
    %69 = arith.mulf %67, %68 : vector<5x5x128xf32>
    %70 = arith.addf %65, %69 : vector<5x5x128xf32>
    %c13 = arith.constant 13 : index
    %71 = memref.load %arg2[%c13] : memref<72xf32, #tpu.memory_space<smem>>
    %72 = vector.extract_strided_slice %50 {offsets = [1, 1, 0], sizes = [5, 5, 128], strides = [1, 1, 1]} : vector<7x7x128xf32> to vector<5x5x128xf32>
    %73 = vector.broadcast %71 : f32 to vector<5x5x128xf32>
    %74 = arith.mulf %72, %73 : vector<5x5x128xf32>
    %75 = arith.addf %70, %74 : vector<5x5x128xf32>
    %c12 = arith.constant 12 : index
    %76 = memref.load %arg2[%c12] : memref<72xf32, #tpu.memory_space<smem>>
    %77 = vector.extract_strided_slice %50 {offsets = [1, 2, 0], sizes = [5, 5, 128], strides = [1, 1, 1]} : vector<7x7x128xf32> to vector<5x5x128xf32>
    %78 = vector.broadcast %76 : f32 to vector<5x5x128xf32>
    %79 = arith.mulf %77, %78 : vector<5x5x128xf32>
    %80 = arith.addf %75, %79 : vector<5x5x128xf32>
    %c11 = arith.constant 11 : index
    %81 = memref.load %arg2[%c11] : memref<72xf32, #tpu.memory_space<smem>>
    %82 = vector.extract_strided_slice %50 {offsets = [2, 0, 0], sizes = [5, 5, 128], strides = [1, 1, 1]} : vector<7x7x128xf32> to vector<5x5x128xf32>
    %83 = vector.broadcast %81 : f32 to vector<5x5x128xf32>
    %84 = arith.mulf %82, %83 : vector<5x5x128xf32>
    %85 = arith.addf %80, %84 : vector<5x5x128xf32>
    %c10 = arith.constant 10 : index
    %86 = memref.load %arg2[%c10] : memref<72xf32, #tpu.memory_space<smem>>
    %87 = vector.extract_strided_slice %50 {offsets = [2, 1, 0], sizes = [5, 5, 128], strides = [1, 1, 1]} : vector<7x7x128xf32> to vector<5x5x128xf32>
    %88 = vector.broadcast %86 : f32 to vector<5x5x128xf32>
    %89 = arith.mulf %87, %88 : vector<5x5x128xf32>
    %90 = arith.addf %85, %89 : vector<5x5x128xf32>
    %c9 = arith.constant 9 : index
    %91 = memref.load %arg2[%c9] : memref<72xf32, #tpu.memory_space<smem>>
    %92 = vector.extract_strided_slice %50 {offsets = [2, 2, 0], sizes = [5, 5, 128], strides = [1, 1, 1]} : vector<7x7x128xf32> to vector<5x5x128xf32>
    %93 = vector.broadcast %91 : f32 to vector<5x5x128xf32>
    %94 = arith.mulf %92, %93 : vector<5x5x128xf32>
    %95 = arith.addf %90, %94 : vector<5x5x128xf32>
    %c2_9 = arith.constant 2 : index
    %c0_10 = arith.constant 0 : index
    %c0_11 = arith.constant 0 : index
    %c0_12 = arith.constant 0 : index
    %96 = vector.load %arg1[%c2_9, %c0_10, %c0_11, %c0_12] : memref<16x7x7x128xf32, #tpu.memory_space<vmem>>, vector<1x7x7x128xf32>
    %97 = vector.shape_cast %96 : vector<1x7x7x128xf32> to vector<7x7x128xf32>
    %c26 = arith.constant 26 : index
    %98 = memref.load %arg2[%c26] : memref<72xf32, #tpu.memory_space<smem>>
    %99 = vector.extract_strided_slice %97 {offsets = [0, 0, 0], sizes = [5, 5, 128], strides = [1, 1, 1]} : vector<7x7x128xf32> to vector<5x5x128xf32>
    %100 = vector.broadcast %98 : f32 to vector<5x5x128xf32>
    %101 = arith.mulf %99, %100 : vector<5x5x128xf32>
    %102 = arith.addf %95, %101 : vector<5x5x128xf32>
    %c25 = arith.constant 25 : index
    %103 = memref.load %arg2[%c25] : memref<72xf32, #tpu.memory_space<smem>>
    %104 = vector.extract_strided_slice %97 {offsets = [0, 1, 0], sizes = [5, 5, 128], strides = [1, 1, 1]} : vector<7x7x128xf32> to vector<5x5x128xf32>
    %105 = vector.broadcast %103 : f32 to vector<5x5x128xf32>
    %106 = arith.mulf %104, %105 : vector<5x5x128xf32>
    %107 = arith.addf %102, %106 : vector<5x5x128xf32>
    %c24 = arith.constant 24 : index
    %108 = memref.load %arg2[%c24] : memref<72xf32, #tpu.memory_space<smem>>
    %109 = vector.extract_strided_slice %97 {offsets = [0, 2, 0], sizes = [5, 5, 128], strides = [1, 1, 1]} : vector<7x7x128xf32> to vector<5x5x128xf32>
    %110 = vector.broadcast %108 : f32 to vector<5x5x128xf32>
    %111 = arith.mulf %109, %110 : vector<5x5x128xf32>
    %112 = arith.addf %107, %111 : vector<5x5x128xf32>
    %c23 = arith.constant 23 : index
    %113 = memref.load %arg2[%c23] : memref<72xf32, #tpu.memory_space<smem>>
    %114 = vector.extract_strided_slice %97 {offsets = [1, 0, 0], sizes = [5, 5, 128], strides = [1, 1, 1]} : vector<7x7x128xf32> to vector<5x5x128xf32>
    %115 = vector.broadcast %113 : f32 to vector<5x5x128xf32>
    %116 = arith.mulf %114, %115 : vector<5x5x128xf32>
    %117 = arith.addf %112, %116 : vector<5x5x128xf32>
    %c22 = arith.constant 22 : index
    %118 = memref.load %arg2[%c22] : memref<72xf32, #tpu.memory_space<smem>>
    %119 = vector.extract_strided_slice %97 {offsets = [1, 1, 0], sizes = [5, 5, 128], strides = [1, 1, 1]} : vector<7x7x128xf32> to vector<5x5x128xf32>
    %120 = vector.broadcast %118 : f32 to vector<5x5x128xf32>
    %121 = arith.mulf %119, %120 : vector<5x5x128xf32>
    %122 = arith.addf %117, %121 : vector<5x5x128xf32>
    %c21 = arith.constant 21 : index
    %123 = memref.load %arg2[%c21] : memref<72xf32, #tpu.memory_space<smem>>
    %124 = vector.extract_strided_slice %97 {offsets = [1, 2, 0], sizes = [5, 5, 128], strides = [1, 1, 1]} : vector<7x7x128xf32> to vector<5x5x128xf32>
    %125 = vector.broadcast %123 : f32 to vector<5x5x128xf32>
    %126 = arith.mulf %124, %125 : vector<5x5x128xf32>
    %127 = arith.addf %122, %126 : vector<5x5x128xf32>
    %c20 = arith.constant 20 : index
    %128 = memref.load %arg2[%c20] : memref<72xf32, #tpu.memory_space<smem>>
    %129 = vector.extract_strided_slice %97 {offsets = [2, 0, 0], sizes = [5, 5, 128], strides = [1, 1, 1]} : vector<7x7x128xf32> to vector<5x5x128xf32>
    %130 = vector.broadcast %128 : f32 to vector<5x5x128xf32>
    %131 = arith.mulf %129, %130 : vector<5x5x128xf32>
    %132 = arith.addf %127, %131 : vector<5x5x128xf32>
    %c19 = arith.constant 19 : index
    %133 = memref.load %arg2[%c19] : memref<72xf32, #tpu.memory_space<smem>>
    %134 = vector.extract_strided_slice %97 {offsets = [2, 1, 0], sizes = [5, 5, 128], strides = [1, 1, 1]} : vector<7x7x128xf32> to vector<5x5x128xf32>
    %135 = vector.broadcast %133 : f32 to vector<5x5x128xf32>
    %136 = arith.mulf %134, %135 : vector<5x5x128xf32>
    %137 = arith.addf %132, %136 : vector<5x5x128xf32>
    %c18 = arith.constant 18 : index
    %138 = memref.load %arg2[%c18] : memref<72xf32, #tpu.memory_space<smem>>
    %139 = vector.extract_strided_slice %97 {offsets = [2, 2, 0], sizes = [5, 5, 128], strides = [1, 1, 1]} : vector<7x7x128xf32> to vector<5x5x128xf32>
    %140 = vector.broadcast %138 : f32 to vector<5x5x128xf32>
    %141 = arith.mulf %139, %140 : vector<5x5x128xf32>
    %142 = arith.addf %137, %141 : vector<5x5x128xf32>
    %c3_13 = arith.constant 3 : index
    %c0_14 = arith.constant 0 : index
    %c0_15 = arith.constant 0 : index
    %c0_16 = arith.constant 0 : index
    %143 = vector.load %arg1[%c3_13, %c0_14, %c0_15, %c0_16] : memref<16x7x7x128xf32, #tpu.memory_space<vmem>>, vector<1x7x7x128xf32>
    %144 = vector.shape_cast %143 : vector<1x7x7x128xf32> to vector<7x7x128xf32>
    %c35 = arith.constant 35 : index
    %145 = memref.load %arg2[%c35] : memref<72xf32, #tpu.memory_space<smem>>
    %146 = vector.extract_strided_slice %144 {offsets = [0, 0, 0], sizes = [5, 5, 128], strides = [1, 1, 1]} : vector<7x7x128xf32> to vector<5x5x128xf32>
    %147 = vector.broadcast %145 : f32 to vector<5x5x128xf32>
    %148 = arith.mulf %146, %147 : vector<5x5x128xf32>
    %149 = arith.addf %142, %148 : vector<5x5x128xf32>
    %c34 = arith.constant 34 : index
    %150 = memref.load %arg2[%c34] : memref<72xf32, #tpu.memory_space<smem>>
    %151 = vector.extract_strided_slice %144 {offsets = [0, 1, 0], sizes = [5, 5, 128], strides = [1, 1, 1]} : vector<7x7x128xf32> to vector<5x5x128xf32>
    %152 = vector.broadcast %150 : f32 to vector<5x5x128xf32>
    %153 = arith.mulf %151, %152 : vector<5x5x128xf32>
    %154 = arith.addf %149, %153 : vector<5x5x128xf32>
    %c33 = arith.constant 33 : index
    %155 = memref.load %arg2[%c33] : memref<72xf32, #tpu.memory_space<smem>>
    %156 = vector.extract_strided_slice %144 {offsets = [0, 2, 0], sizes = [5, 5, 128], strides = [1, 1, 1]} : vector<7x7x128xf32> to vector<5x5x128xf32>
    %157 = vector.broadcast %155 : f32 to vector<5x5x128xf32>
    %158 = arith.mulf %156, %157 : vector<5x5x128xf32>
    %159 = arith.addf %154, %158 : vector<5x5x128xf32>
    %c32 = arith.constant 32 : index
    %160 = memref.load %arg2[%c32] : memref<72xf32, #tpu.memory_space<smem>>
    %161 = vector.extract_strided_slice %144 {offsets = [1, 0, 0], sizes = [5, 5, 128], strides = [1, 1, 1]} : vector<7x7x128xf32> to vector<5x5x128xf32>
    %162 = vector.broadcast %160 : f32 to vector<5x5x128xf32>
    %163 = arith.mulf %161, %162 : vector<5x5x128xf32>
    %164 = arith.addf %159, %163 : vector<5x5x128xf32>
    %c31 = arith.constant 31 : index
    %165 = memref.load %arg2[%c31] : memref<72xf32, #tpu.memory_space<smem>>
    %166 = vector.extract_strided_slice %144 {offsets = [1, 1, 0], sizes = [5, 5, 128], strides = [1, 1, 1]} : vector<7x7x128xf32> to vector<5x5x128xf32>
    %167 = vector.broadcast %165 : f32 to vector<5x5x128xf32>
    %168 = arith.mulf %166, %167 : vector<5x5x128xf32>
    %169 = arith.addf %164, %168 : vector<5x5x128xf32>
    %c30 = arith.constant 30 : index
    %170 = memref.load %arg2[%c30] : memref<72xf32, #tpu.memory_space<smem>>
    %171 = vector.extract_strided_slice %144 {offsets = [1, 2, 0], sizes = [5, 5, 128], strides = [1, 1, 1]} : vector<7x7x128xf32> to vector<5x5x128xf32>
    %172 = vector.broadcast %170 : f32 to vector<5x5x128xf32>
    %173 = arith.mulf %171, %172 : vector<5x5x128xf32>
    %174 = arith.addf %169, %173 : vector<5x5x128xf32>
    %c29 = arith.constant 29 : index
    %175 = memref.load %arg2[%c29] : memref<72xf32, #tpu.memory_space<smem>>
    %176 = vector.extract_strided_slice %144 {offsets = [2, 0, 0], sizes = [5, 5, 128], strides = [1, 1, 1]} : vector<7x7x128xf32> to vector<5x5x128xf32>
    %177 = vector.broadcast %175 : f32 to vector<5x5x128xf32>
    %178 = arith.mulf %176, %177 : vector<5x5x128xf32>
    %179 = arith.addf %174, %178 : vector<5x5x128xf32>
    %c28 = arith.constant 28 : index
    %180 = memref.load %arg2[%c28] : memref<72xf32, #tpu.memory_space<smem>>
    %181 = vector.extract_strided_slice %144 {offsets = [2, 1, 0], sizes = [5, 5, 128], strides = [1, 1, 1]} : vector<7x7x128xf32> to vector<5x5x128xf32>
    %182 = vector.broadcast %180 : f32 to vector<5x5x128xf32>
    %183 = arith.mulf %181, %182 : vector<5x5x128xf32>
    %184 = arith.addf %179, %183 : vector<5x5x128xf32>
    %c27 = arith.constant 27 : index
    %185 = memref.load %arg2[%c27] : memref<72xf32, #tpu.memory_space<smem>>
    %186 = vector.extract_strided_slice %144 {offsets = [2, 2, 0], sizes = [5, 5, 128], strides = [1, 1, 1]} : vector<7x7x128xf32> to vector<5x5x128xf32>
    %187 = vector.broadcast %185 : f32 to vector<5x5x128xf32>
    %188 = arith.mulf %186, %187 : vector<5x5x128xf32>
    %189 = arith.addf %184, %188 : vector<5x5x128xf32>
    %c4_17 = arith.constant 4 : index
    %c0_18 = arith.constant 0 : index
    %c0_19 = arith.constant 0 : index
    %c0_20 = arith.constant 0 : index
    %190 = vector.load %arg1[%c4_17, %c0_18, %c0_19, %c0_20] : memref<16x7x7x128xf32, #tpu.memory_space<vmem>>, vector<1x7x7x128xf32>
    %191 = vector.shape_cast %190 : vector<1x7x7x128xf32> to vector<7x7x128xf32>
    %c44 = arith.constant 44 : index
    %192 = memref.load %arg2[%c44] : memref<72xf32, #tpu.memory_space<smem>>
    %193 = vector.extract_strided_slice %191 {offsets = [0, 0, 0], sizes = [5, 5, 128], strides = [1, 1, 1]} : vector<7x7x128xf32> to vector<5x5x128xf32>
    %194 = vector.broadcast %192 : f32 to vector<5x5x128xf32>
    %195 = arith.mulf %193, %194 : vector<5x5x128xf32>
    %196 = arith.addf %189, %195 : vector<5x5x128xf32>
    %c43 = arith.constant 43 : index
    %197 = memref.load %arg2[%c43] : memref<72xf32, #tpu.memory_space<smem>>
    %198 = vector.extract_strided_slice %191 {offsets = [0, 1, 0], sizes = [5, 5, 128], strides = [1, 1, 1]} : vector<7x7x128xf32> to vector<5x5x128xf32>
    %199 = vector.broadcast %197 : f32 to vector<5x5x128xf32>
    %200 = arith.mulf %198, %199 : vector<5x5x128xf32>
    %201 = arith.addf %196, %200 : vector<5x5x128xf32>
    %c42 = arith.constant 42 : index
    %202 = memref.load %arg2[%c42] : memref<72xf32, #tpu.memory_space<smem>>
    %203 = vector.extract_strided_slice %191 {offsets = [0, 2, 0], sizes = [5, 5, 128], strides = [1, 1, 1]} : vector<7x7x128xf32> to vector<5x5x128xf32>
    %204 = vector.broadcast %202 : f32 to vector<5x5x128xf32>
    %205 = arith.mulf %203, %204 : vector<5x5x128xf32>
    %206 = arith.addf %201, %205 : vector<5x5x128xf32>
    %c41 = arith.constant 41 : index
    %207 = memref.load %arg2[%c41] : memref<72xf32, #tpu.memory_space<smem>>
    %208 = vector.extract_strided_slice %191 {offsets = [1, 0, 0], sizes = [5, 5, 128], strides = [1, 1, 1]} : vector<7x7x128xf32> to vector<5x5x128xf32>
    %209 = vector.broadcast %207 : f32 to vector<5x5x128xf32>
    %210 = arith.mulf %208, %209 : vector<5x5x128xf32>
    %211 = arith.addf %206, %210 : vector<5x5x128xf32>
    %c40 = arith.constant 40 : index
    %212 = memref.load %arg2[%c40] : memref<72xf32, #tpu.memory_space<smem>>
    %213 = vector.extract_strided_slice %191 {offsets = [1, 1, 0], sizes = [5, 5, 128], strides = [1, 1, 1]} : vector<7x7x128xf32> to vector<5x5x128xf32>
    %214 = vector.broadcast %212 : f32 to vector<5x5x128xf32>
    %215 = arith.mulf %213, %214 : vector<5x5x128xf32>
    %216 = arith.addf %211, %215 : vector<5x5x128xf32>
    %c39 = arith.constant 39 : index
    %217 = memref.load %arg2[%c39] : memref<72xf32, #tpu.memory_space<smem>>
    %218 = vector.extract_strided_slice %191 {offsets = [1, 2, 0], sizes = [5, 5, 128], strides = [1, 1, 1]} : vector<7x7x128xf32> to vector<5x5x128xf32>
    %219 = vector.broadcast %217 : f32 to vector<5x5x128xf32>
    %220 = arith.mulf %218, %219 : vector<5x5x128xf32>
    %221 = arith.addf %216, %220 : vector<5x5x128xf32>
    %c38 = arith.constant 38 : index
    %222 = memref.load %arg2[%c38] : memref<72xf32, #tpu.memory_space<smem>>
    %223 = vector.extract_strided_slice %191 {offsets = [2, 0, 0], sizes = [5, 5, 128], strides = [1, 1, 1]} : vector<7x7x128xf32> to vector<5x5x128xf32>
    %224 = vector.broadcast %222 : f32 to vector<5x5x128xf32>
    %225 = arith.mulf %223, %224 : vector<5x5x128xf32>
    %226 = arith.addf %221, %225 : vector<5x5x128xf32>
    %c37 = arith.constant 37 : index
    %227 = memref.load %arg2[%c37] : memref<72xf32, #tpu.memory_space<smem>>
    %228 = vector.extract_strided_slice %191 {offsets = [2, 1, 0], sizes = [5, 5, 128], strides = [1, 1, 1]} : vector<7x7x128xf32> to vector<5x5x128xf32>
    %229 = vector.broadcast %227 : f32 to vector<5x5x128xf32>
    %230 = arith.mulf %228, %229 : vector<5x5x128xf32>
    %231 = arith.addf %226, %230 : vector<5x5x128xf32>
    %c36 = arith.constant 36 : index
    %232 = memref.load %arg2[%c36] : memref<72xf32, #tpu.memory_space<smem>>
    %233 = vector.extract_strided_slice %191 {offsets = [2, 2, 0], sizes = [5, 5, 128], strides = [1, 1, 1]} : vector<7x7x128xf32> to vector<5x5x128xf32>
    %234 = vector.broadcast %232 : f32 to vector<5x5x128xf32>
    %235 = arith.mulf %233, %234 : vector<5x5x128xf32>
    %236 = arith.addf %231, %235 : vector<5x5x128xf32>
    %c5_21 = arith.constant 5 : index
    %c0_22 = arith.constant 0 : index
    %c0_23 = arith.constant 0 : index
    %c0_24 = arith.constant 0 : index
    %237 = vector.load %arg1[%c5_21, %c0_22, %c0_23, %c0_24] : memref<16x7x7x128xf32, #tpu.memory_space<vmem>>, vector<1x7x7x128xf32>
    %238 = vector.shape_cast %237 : vector<1x7x7x128xf32> to vector<7x7x128xf32>
    %c53 = arith.constant 53 : index
    %239 = memref.load %arg2[%c53] : memref<72xf32, #tpu.memory_space<smem>>
    %240 = vector.extract_strided_slice %238 {offsets = [0, 0, 0], sizes = [5, 5, 128], strides = [1, 1, 1]} : vector<7x7x128xf32> to vector<5x5x128xf32>
    %241 = vector.broadcast %239 : f32 to vector<5x5x128xf32>
    %242 = arith.mulf %240, %241 : vector<5x5x128xf32>
    %243 = arith.addf %236, %242 : vector<5x5x128xf32>
    %c52 = arith.constant 52 : index
    %244 = memref.load %arg2[%c52] : memref<72xf32, #tpu.memory_space<smem>>
    %245 = vector.extract_strided_slice %238 {offsets = [0, 1, 0], sizes = [5, 5, 128], strides = [1, 1, 1]} : vector<7x7x128xf32> to vector<5x5x128xf32>
    %246 = vector.broadcast %244 : f32 to vector<5x5x128xf32>
    %247 = arith.mulf %245, %246 : vector<5x5x128xf32>
    %248 = arith.addf %243, %247 : vector<5x5x128xf32>
    %c51 = arith.constant 51 : index
    %249 = memref.load %arg2[%c51] : memref<72xf32, #tpu.memory_space<smem>>
    %250 = vector.extract_strided_slice %238 {offsets = [0, 2, 0], sizes = [5, 5, 128], strides = [1, 1, 1]} : vector<7x7x128xf32> to vector<5x5x128xf32>
    %251 = vector.broadcast %249 : f32 to vector<5x5x128xf32>
    %252 = arith.mulf %250, %251 : vector<5x5x128xf32>
    %253 = arith.addf %248, %252 : vector<5x5x128xf32>
    %c50 = arith.constant 50 : index
    %254 = memref.load %arg2[%c50] : memref<72xf32, #tpu.memory_space<smem>>
    %255 = vector.extract_strided_slice %238 {offsets = [1, 0, 0], sizes = [5, 5, 128], strides = [1, 1, 1]} : vector<7x7x128xf32> to vector<5x5x128xf32>
    %256 = vector.broadcast %254 : f32 to vector<5x5x128xf32>
    %257 = arith.mulf %255, %256 : vector<5x5x128xf32>
    %258 = arith.addf %253, %257 : vector<5x5x128xf32>
    %c49 = arith.constant 49 : index
    %259 = memref.load %arg2[%c49] : memref<72xf32, #tpu.memory_space<smem>>
    %260 = vector.extract_strided_slice %238 {offsets = [1, 1, 0], sizes = [5, 5, 128], strides = [1, 1, 1]} : vector<7x7x128xf32> to vector<5x5x128xf32>
    %261 = vector.broadcast %259 : f32 to vector<5x5x128xf32>
    %262 = arith.mulf %260, %261 : vector<5x5x128xf32>
    %263 = arith.addf %258, %262 : vector<5x5x128xf32>
    %c48 = arith.constant 48 : index
    %264 = memref.load %arg2[%c48] : memref<72xf32, #tpu.memory_space<smem>>
    %265 = vector.extract_strided_slice %238 {offsets = [1, 2, 0], sizes = [5, 5, 128], strides = [1, 1, 1]} : vector<7x7x128xf32> to vector<5x5x128xf32>
    %266 = vector.broadcast %264 : f32 to vector<5x5x128xf32>
    %267 = arith.mulf %265, %266 : vector<5x5x128xf32>
    %268 = arith.addf %263, %267 : vector<5x5x128xf32>
    %c47 = arith.constant 47 : index
    %269 = memref.load %arg2[%c47] : memref<72xf32, #tpu.memory_space<smem>>
    %270 = vector.extract_strided_slice %238 {offsets = [2, 0, 0], sizes = [5, 5, 128], strides = [1, 1, 1]} : vector<7x7x128xf32> to vector<5x5x128xf32>
    %271 = vector.broadcast %269 : f32 to vector<5x5x128xf32>
    %272 = arith.mulf %270, %271 : vector<5x5x128xf32>
    %273 = arith.addf %268, %272 : vector<5x5x128xf32>
    %c46 = arith.constant 46 : index
    %274 = memref.load %arg2[%c46] : memref<72xf32, #tpu.memory_space<smem>>
    %275 = vector.extract_strided_slice %238 {offsets = [2, 1, 0], sizes = [5, 5, 128], strides = [1, 1, 1]} : vector<7x7x128xf32> to vector<5x5x128xf32>
    %276 = vector.broadcast %274 : f32 to vector<5x5x128xf32>
    %277 = arith.mulf %275, %276 : vector<5x5x128xf32>
    %278 = arith.addf %273, %277 : vector<5x5x128xf32>
    %c45 = arith.constant 45 : index
    %279 = memref.load %arg2[%c45] : memref<72xf32, #tpu.memory_space<smem>>
    %280 = vector.extract_strided_slice %238 {offsets = [2, 2, 0], sizes = [5, 5, 128], strides = [1, 1, 1]} : vector<7x7x128xf32> to vector<5x5x128xf32>
    %281 = vector.broadcast %279 : f32 to vector<5x5x128xf32>
    %282 = arith.mulf %280, %281 : vector<5x5x128xf32>
    %283 = arith.addf %278, %282 : vector<5x5x128xf32>
    %c6_25 = arith.constant 6 : index
    %c0_26 = arith.constant 0 : index
    %c0_27 = arith.constant 0 : index
    %c0_28 = arith.constant 0 : index
    %284 = vector.load %arg1[%c6_25, %c0_26, %c0_27, %c0_28] : memref<16x7x7x128xf32, #tpu.memory_space<vmem>>, vector<1x7x7x128xf32>
    %285 = vector.shape_cast %284 : vector<1x7x7x128xf32> to vector<7x7x128xf32>
    %c62 = arith.constant 62 : index
    %286 = memref.load %arg2[%c62] : memref<72xf32, #tpu.memory_space<smem>>
    %287 = vector.extract_strided_slice %285 {offsets = [0, 0, 0], sizes = [5, 5, 128], strides = [1, 1, 1]} : vector<7x7x128xf32> to vector<5x5x128xf32>
    %288 = vector.broadcast %286 : f32 to vector<5x5x128xf32>
    %289 = arith.mulf %287, %288 : vector<5x5x128xf32>
    %290 = arith.addf %283, %289 : vector<5x5x128xf32>
    %c61 = arith.constant 61 : index
    %291 = memref.load %arg2[%c61] : memref<72xf32, #tpu.memory_space<smem>>
    %292 = vector.extract_strided_slice %285 {offsets = [0, 1, 0], sizes = [5, 5, 128], strides = [1, 1, 1]} : vector<7x7x128xf32> to vector<5x5x128xf32>
    %293 = vector.broadcast %291 : f32 to vector<5x5x128xf32>
    %294 = arith.mulf %292, %293 : vector<5x5x128xf32>
    %295 = arith.addf %290, %294 : vector<5x5x128xf32>
    %c60 = arith.constant 60 : index
    %296 = memref.load %arg2[%c60] : memref<72xf32, #tpu.memory_space<smem>>
    %297 = vector.extract_strided_slice %285 {offsets = [0, 2, 0], sizes = [5, 5, 128], strides = [1, 1, 1]} : vector<7x7x128xf32> to vector<5x5x128xf32>
    %298 = vector.broadcast %296 : f32 to vector<5x5x128xf32>
    %299 = arith.mulf %297, %298 : vector<5x5x128xf32>
    %300 = arith.addf %295, %299 : vector<5x5x128xf32>
    %c59 = arith.constant 59 : index
    %301 = memref.load %arg2[%c59] : memref<72xf32, #tpu.memory_space<smem>>
    %302 = vector.extract_strided_slice %285 {offsets = [1, 0, 0], sizes = [5, 5, 128], strides = [1, 1, 1]} : vector<7x7x128xf32> to vector<5x5x128xf32>
    %303 = vector.broadcast %301 : f32 to vector<5x5x128xf32>
    %304 = arith.mulf %302, %303 : vector<5x5x128xf32>
    %305 = arith.addf %300, %304 : vector<5x5x128xf32>
    %c58 = arith.constant 58 : index
    %306 = memref.load %arg2[%c58] : memref<72xf32, #tpu.memory_space<smem>>
    %307 = vector.extract_strided_slice %285 {offsets = [1, 1, 0], sizes = [5, 5, 128], strides = [1, 1, 1]} : vector<7x7x128xf32> to vector<5x5x128xf32>
    %308 = vector.broadcast %306 : f32 to vector<5x5x128xf32>
    %309 = arith.mulf %307, %308 : vector<5x5x128xf32>
    %310 = arith.addf %305, %309 : vector<5x5x128xf32>
    %c57 = arith.constant 57 : index
    %311 = memref.load %arg2[%c57] : memref<72xf32, #tpu.memory_space<smem>>
    %312 = vector.extract_strided_slice %285 {offsets = [1, 2, 0], sizes = [5, 5, 128], strides = [1, 1, 1]} : vector<7x7x128xf32> to vector<5x5x128xf32>
    %313 = vector.broadcast %311 : f32 to vector<5x5x128xf32>
    %314 = arith.mulf %312, %313 : vector<5x5x128xf32>
    %315 = arith.addf %310, %314 : vector<5x5x128xf32>
    %c56 = arith.constant 56 : index
    %316 = memref.load %arg2[%c56] : memref<72xf32, #tpu.memory_space<smem>>
    %317 = vector.extract_strided_slice %285 {offsets = [2, 0, 0], sizes = [5, 5, 128], strides = [1, 1, 1]} : vector<7x7x128xf32> to vector<5x5x128xf32>
    %318 = vector.broadcast %316 : f32 to vector<5x5x128xf32>
    %319 = arith.mulf %317, %318 : vector<5x5x128xf32>
    %320 = arith.addf %315, %319 : vector<5x5x128xf32>
    %c55 = arith.constant 55 : index
    %321 = memref.load %arg2[%c55] : memref<72xf32, #tpu.memory_space<smem>>
    %322 = vector.extract_strided_slice %285 {offsets = [2, 1, 0], sizes = [5, 5, 128], strides = [1, 1, 1]} : vector<7x7x128xf32> to vector<5x5x128xf32>
    %323 = vector.broadcast %321 : f32 to vector<5x5x128xf32>
    %324 = arith.mulf %322, %323 : vector<5x5x128xf32>
    %325 = arith.addf %320, %324 : vector<5x5x128xf32>
    %c54 = arith.constant 54 : index
    %326 = memref.load %arg2[%c54] : memref<72xf32, #tpu.memory_space<smem>>
    %327 = vector.extract_strided_slice %285 {offsets = [2, 2, 0], sizes = [5, 5, 128], strides = [1, 1, 1]} : vector<7x7x128xf32> to vector<5x5x128xf32>
    %328 = vector.broadcast %326 : f32 to vector<5x5x128xf32>
    %329 = arith.mulf %327, %328 : vector<5x5x128xf32>
    %330 = arith.addf %325, %329 : vector<5x5x128xf32>
    %c7_29 = arith.constant 7 : index
    %c0_30 = arith.constant 0 : index
    %c0_31 = arith.constant 0 : index
    %c0_32 = arith.constant 0 : index
    %331 = vector.load %arg1[%c7_29, %c0_30, %c0_31, %c0_32] : memref<16x7x7x128xf32, #tpu.memory_space<vmem>>, vector<1x7x7x128xf32>
    %332 = vector.shape_cast %331 : vector<1x7x7x128xf32> to vector<7x7x128xf32>
    %c71 = arith.constant 71 : index
    %333 = memref.load %arg2[%c71] : memref<72xf32, #tpu.memory_space<smem>>
    %334 = vector.extract_strided_slice %332 {offsets = [0, 0, 0], sizes = [5, 5, 128], strides = [1, 1, 1]} : vector<7x7x128xf32> to vector<5x5x128xf32>
    %335 = vector.broadcast %333 : f32 to vector<5x5x128xf32>
    %336 = arith.mulf %334, %335 : vector<5x5x128xf32>
    %337 = arith.addf %330, %336 : vector<5x5x128xf32>
    %c70 = arith.constant 70 : index
    %338 = memref.load %arg2[%c70] : memref<72xf32, #tpu.memory_space<smem>>
    %339 = vector.extract_strided_slice %332 {offsets = [0, 1, 0], sizes = [5, 5, 128], strides = [1, 1, 1]} : vector<7x7x128xf32> to vector<5x5x128xf32>
    %340 = vector.broadcast %338 : f32 to vector<5x5x128xf32>
    %341 = arith.mulf %339, %340 : vector<5x5x128xf32>
    %342 = arith.addf %337, %341 : vector<5x5x128xf32>
    %c69 = arith.constant 69 : index
    %343 = memref.load %arg2[%c69] : memref<72xf32, #tpu.memory_space<smem>>
    %344 = vector.extract_strided_slice %332 {offsets = [0, 2, 0], sizes = [5, 5, 128], strides = [1, 1, 1]} : vector<7x7x128xf32> to vector<5x5x128xf32>
    %345 = vector.broadcast %343 : f32 to vector<5x5x128xf32>
    %346 = arith.mulf %344, %345 : vector<5x5x128xf32>
    %347 = arith.addf %342, %346 : vector<5x5x128xf32>
    %c68 = arith.constant 68 : index
    %348 = memref.load %arg2[%c68] : memref<72xf32, #tpu.memory_space<smem>>
    %349 = vector.extract_strided_slice %332 {offsets = [1, 0, 0], sizes = [5, 5, 128], strides = [1, 1, 1]} : vector<7x7x128xf32> to vector<5x5x128xf32>
    %350 = vector.broadcast %348 : f32 to vector<5x5x128xf32>
    %351 = arith.mulf %349, %350 : vector<5x5x128xf32>
    %352 = arith.addf %347, %351 : vector<5x5x128xf32>
    %c67 = arith.constant 67 : index
    %353 = memref.load %arg2[%c67] : memref<72xf32, #tpu.memory_space<smem>>
    %354 = vector.extract_strided_slice %332 {offsets = [1, 1, 0], sizes = [5, 5, 128], strides = [1, 1, 1]} : vector<7x7x128xf32> to vector<5x5x128xf32>
    %355 = vector.broadcast %353 : f32 to vector<5x5x128xf32>
    %356 = arith.mulf %354, %355 : vector<5x5x128xf32>
    %357 = arith.addf %352, %356 : vector<5x5x128xf32>
    %c66 = arith.constant 66 : index
    %358 = memref.load %arg2[%c66] : memref<72xf32, #tpu.memory_space<smem>>
    %359 = vector.extract_strided_slice %332 {offsets = [1, 2, 0], sizes = [5, 5, 128], strides = [1, 1, 1]} : vector<7x7x128xf32> to vector<5x5x128xf32>
    %360 = vector.broadcast %358 : f32 to vector<5x5x128xf32>
    %361 = arith.mulf %359, %360 : vector<5x5x128xf32>
    %362 = arith.addf %357, %361 : vector<5x5x128xf32>
    %c65 = arith.constant 65 : index
    %363 = memref.load %arg2[%c65] : memref<72xf32, #tpu.memory_space<smem>>
    %364 = vector.extract_strided_slice %332 {offsets = [2, 0, 0], sizes = [5, 5, 128], strides = [1, 1, 1]} : vector<7x7x128xf32> to vector<5x5x128xf32>
    %365 = vector.broadcast %363 : f32 to vector<5x5x128xf32>
    %366 = arith.mulf %364, %365 : vector<5x5x128xf32>
    %367 = arith.addf %362, %366 : vector<5x5x128xf32>
    %c64 = arith.constant 64 : index
    %368 = memref.load %arg2[%c64] : memref<72xf32, #tpu.memory_space<smem>>
    %369 = vector.extract_strided_slice %332 {offsets = [2, 1, 0], sizes = [5, 5, 128], strides = [1, 1, 1]} : vector<7x7x128xf32> to vector<5x5x128xf32>
    %370 = vector.broadcast %368 : f32 to vector<5x5x128xf32>
    %371 = arith.mulf %369, %370 : vector<5x5x128xf32>
    %372 = arith.addf %367, %371 : vector<5x5x128xf32>
    %c63 = arith.constant 63 : index
    %373 = memref.load %arg2[%c63] : memref<72xf32, #tpu.memory_space<smem>>
    %374 = vector.extract_strided_slice %332 {offsets = [2, 2, 0], sizes = [5, 5, 128], strides = [1, 1, 1]} : vector<7x7x128xf32> to vector<5x5x128xf32>
    %375 = vector.broadcast %373 : f32 to vector<5x5x128xf32>
    %376 = arith.mulf %374, %375 : vector<5x5x128xf32>
    %377 = arith.addf %372, %376 : vector<5x5x128xf32>
    %378 = math.tanh %377 : vector<5x5x128xf32>
    %379 = vector.broadcast %0 : f32 to vector<5x5x128xf32>
    %c8_33 = arith.constant 8 : index
    %c0_34 = arith.constant 0 : index
    %c0_35 = arith.constant 0 : index
    %c0_36 = arith.constant 0 : index
    %380 = vector.load %arg1[%c8_33, %c0_34, %c0_35, %c0_36] : memref<16x7x7x128xf32, #tpu.memory_space<vmem>>, vector<1x7x7x128xf32>
    %381 = vector.shape_cast %380 : vector<1x7x7x128xf32> to vector<7x7x128xf32>
    %c8_37 = arith.constant 8 : index
    %382 = memref.load %arg2[%c8_37] : memref<72xf32, #tpu.memory_space<smem>>
    %383 = vector.extract_strided_slice %381 {offsets = [0, 0, 0], sizes = [5, 5, 128], strides = [1, 1, 1]} : vector<7x7x128xf32> to vector<5x5x128xf32>
    %384 = vector.broadcast %382 : f32 to vector<5x5x128xf32>
    %385 = arith.mulf %383, %384 : vector<5x5x128xf32>
    %386 = arith.addf %379, %385 : vector<5x5x128xf32>
    %c7_38 = arith.constant 7 : index
    %387 = memref.load %arg2[%c7_38] : memref<72xf32, #tpu.memory_space<smem>>
    %388 = vector.extract_strided_slice %381 {offsets = [0, 1, 0], sizes = [5, 5, 128], strides = [1, 1, 1]} : vector<7x7x128xf32> to vector<5x5x128xf32>
    %389 = vector.broadcast %387 : f32 to vector<5x5x128xf32>
    %390 = arith.mulf %388, %389 : vector<5x5x128xf32>
    %391 = arith.addf %386, %390 : vector<5x5x128xf32>
    %c6_39 = arith.constant 6 : index
    %392 = memref.load %arg2[%c6_39] : memref<72xf32, #tpu.memory_space<smem>>
    %393 = vector.extract_strided_slice %381 {offsets = [0, 2, 0], sizes = [5, 5, 128], strides = [1, 1, 1]} : vector<7x7x128xf32> to vector<5x5x128xf32>
    %394 = vector.broadcast %392 : f32 to vector<5x5x128xf32>
    %395 = arith.mulf %393, %394 : vector<5x5x128xf32>
    %396 = arith.addf %391, %395 : vector<5x5x128xf32>
    %c5_40 = arith.constant 5 : index
    %397 = memref.load %arg2[%c5_40] : memref<72xf32, #tpu.memory_space<smem>>
    %398 = vector.extract_strided_slice %381 {offsets = [1, 0, 0], sizes = [5, 5, 128], strides = [1, 1, 1]} : vector<7x7x128xf32> to vector<5x5x128xf32>
    %399 = vector.broadcast %397 : f32 to vector<5x5x128xf32>
    %400 = arith.mulf %398, %399 : vector<5x5x128xf32>
    %401 = arith.addf %396, %400 : vector<5x5x128xf32>
    %c4_41 = arith.constant 4 : index
    %402 = memref.load %arg2[%c4_41] : memref<72xf32, #tpu.memory_space<smem>>
    %403 = vector.extract_strided_slice %381 {offsets = [1, 1, 0], sizes = [5, 5, 128], strides = [1, 1, 1]} : vector<7x7x128xf32> to vector<5x5x128xf32>
    %404 = vector.broadcast %402 : f32 to vector<5x5x128xf32>
    %405 = arith.mulf %403, %404 : vector<5x5x128xf32>
    %406 = arith.addf %401, %405 : vector<5x5x128xf32>
    %c3_42 = arith.constant 3 : index
    %407 = memref.load %arg2[%c3_42] : memref<72xf32, #tpu.memory_space<smem>>
    %408 = vector.extract_strided_slice %381 {offsets = [1, 2, 0], sizes = [5, 5, 128], strides = [1, 1, 1]} : vector<7x7x128xf32> to vector<5x5x128xf32>
    %409 = vector.broadcast %407 : f32 to vector<5x5x128xf32>
    %410 = arith.mulf %408, %409 : vector<5x5x128xf32>
    %411 = arith.addf %406, %410 : vector<5x5x128xf32>
    %c2_43 = arith.constant 2 : index
    %412 = memref.load %arg2[%c2_43] : memref<72xf32, #tpu.memory_space<smem>>
    %413 = vector.extract_strided_slice %381 {offsets = [2, 0, 0], sizes = [5, 5, 128], strides = [1, 1, 1]} : vector<7x7x128xf32> to vector<5x5x128xf32>
    %414 = vector.broadcast %412 : f32 to vector<5x5x128xf32>
    %415 = arith.mulf %413, %414 : vector<5x5x128xf32>
    %416 = arith.addf %411, %415 : vector<5x5x128xf32>
    %c1_44 = arith.constant 1 : index
    %417 = memref.load %arg2[%c1_44] : memref<72xf32, #tpu.memory_space<smem>>
    %418 = vector.extract_strided_slice %381 {offsets = [2, 1, 0], sizes = [5, 5, 128], strides = [1, 1, 1]} : vector<7x7x128xf32> to vector<5x5x128xf32>
    %419 = vector.broadcast %417 : f32 to vector<5x5x128xf32>
    %420 = arith.mulf %418, %419 : vector<5x5x128xf32>
    %421 = arith.addf %416, %420 : vector<5x5x128xf32>
    %c0_45 = arith.constant 0 : index
    %422 = memref.load %arg2[%c0_45] : memref<72xf32, #tpu.memory_space<smem>>
    %423 = vector.extract_strided_slice %381 {offsets = [2, 2, 0], sizes = [5, 5, 128], strides = [1, 1, 1]} : vector<7x7x128xf32> to vector<5x5x128xf32>
    %424 = vector.broadcast %422 : f32 to vector<5x5x128xf32>
    %425 = arith.mulf %423, %424 : vector<5x5x128xf32>
    %426 = arith.addf %421, %425 : vector<5x5x128xf32>
    %c9_46 = arith.constant 9 : index
    %c0_47 = arith.constant 0 : index
    %c0_48 = arith.constant 0 : index
    %c0_49 = arith.constant 0 : index
    %427 = vector.load %arg1[%c9_46, %c0_47, %c0_48, %c0_49] : memref<16x7x7x128xf32, #tpu.memory_space<vmem>>, vector<1x7x7x128xf32>
    %428 = vector.shape_cast %427 : vector<1x7x7x128xf32> to vector<7x7x128xf32>
    %c17_50 = arith.constant 17 : index
    %429 = memref.load %arg2[%c17_50] : memref<72xf32, #tpu.memory_space<smem>>
    %430 = vector.extract_strided_slice %428 {offsets = [0, 0, 0], sizes = [5, 5, 128], strides = [1, 1, 1]} : vector<7x7x128xf32> to vector<5x5x128xf32>
    %431 = vector.broadcast %429 : f32 to vector<5x5x128xf32>
    %432 = arith.mulf %430, %431 : vector<5x5x128xf32>
    %433 = arith.addf %426, %432 : vector<5x5x128xf32>
    %c16_51 = arith.constant 16 : index
    %434 = memref.load %arg2[%c16_51] : memref<72xf32, #tpu.memory_space<smem>>
    %435 = vector.extract_strided_slice %428 {offsets = [0, 1, 0], sizes = [5, 5, 128], strides = [1, 1, 1]} : vector<7x7x128xf32> to vector<5x5x128xf32>
    %436 = vector.broadcast %434 : f32 to vector<5x5x128xf32>
    %437 = arith.mulf %435, %436 : vector<5x5x128xf32>
    %438 = arith.addf %433, %437 : vector<5x5x128xf32>
    %c15_52 = arith.constant 15 : index
    %439 = memref.load %arg2[%c15_52] : memref<72xf32, #tpu.memory_space<smem>>
    %440 = vector.extract_strided_slice %428 {offsets = [0, 2, 0], sizes = [5, 5, 128], strides = [1, 1, 1]} : vector<7x7x128xf32> to vector<5x5x128xf32>
    %441 = vector.broadcast %439 : f32 to vector<5x5x128xf32>
    %442 = arith.mulf %440, %441 : vector<5x5x128xf32>
    %443 = arith.addf %438, %442 : vector<5x5x128xf32>
    %c14_53 = arith.constant 14 : index
    %444 = memref.load %arg2[%c14_53] : memref<72xf32, #tpu.memory_space<smem>>
    %445 = vector.extract_strided_slice %428 {offsets = [1, 0, 0], sizes = [5, 5, 128], strides = [1, 1, 1]} : vector<7x7x128xf32> to vector<5x5x128xf32>
    %446 = vector.broadcast %444 : f32 to vector<5x5x128xf32>
    %447 = arith.mulf %445, %446 : vector<5x5x128xf32>
    %448 = arith.addf %443, %447 : vector<5x5x128xf32>
    %c13_54 = arith.constant 13 : index
    %449 = memref.load %arg2[%c13_54] : memref<72xf32, #tpu.memory_space<smem>>
    %450 = vector.extract_strided_slice %428 {offsets = [1, 1, 0], sizes = [5, 5, 128], strides = [1, 1, 1]} : vector<7x7x128xf32> to vector<5x5x128xf32>
    %451 = vector.broadcast %449 : f32 to vector<5x5x128xf32>
    %452 = arith.mulf %450, %451 : vector<5x5x128xf32>
    %453 = arith.addf %448, %452 : vector<5x5x128xf32>
    %c12_55 = arith.constant 12 : index
    %454 = memref.load %arg2[%c12_55] : memref<72xf32, #tpu.memory_space<smem>>
    %455 = vector.extract_strided_slice %428 {offsets = [1, 2, 0], sizes = [5, 5, 128], strides = [1, 1, 1]} : vector<7x7x128xf32> to vector<5x5x128xf32>
    %456 = vector.broadcast %454 : f32 to vector<5x5x128xf32>
    %457 = arith.mulf %455, %456 : vector<5x5x128xf32>
    %458 = arith.addf %453, %457 : vector<5x5x128xf32>
    %c11_56 = arith.constant 11 : index
    %459 = memref.load %arg2[%c11_56] : memref<72xf32, #tpu.memory_space<smem>>
    %460 = vector.extract_strided_slice %428 {offsets = [2, 0, 0], sizes = [5, 5, 128], strides = [1, 1, 1]} : vector<7x7x128xf32> to vector<5x5x128xf32>
    %461 = vector.broadcast %459 : f32 to vector<5x5x128xf32>
    %462 = arith.mulf %460, %461 : vector<5x5x128xf32>
    %463 = arith.addf %458, %462 : vector<5x5x128xf32>
    %c10_57 = arith.constant 10 : index
    %464 = memref.load %arg2[%c10_57] : memref<72xf32, #tpu.memory_space<smem>>
    %465 = vector.extract_strided_slice %428 {offsets = [2, 1, 0], sizes = [5, 5, 128], strides = [1, 1, 1]} : vector<7x7x128xf32> to vector<5x5x128xf32>
    %466 = vector.broadcast %464 : f32 to vector<5x5x128xf32>
    %467 = arith.mulf %465, %466 : vector<5x5x128xf32>
    %468 = arith.addf %463, %467 : vector<5x5x128xf32>
    %c9_58 = arith.constant 9 : index
    %469 = memref.load %arg2[%c9_58] : memref<72xf32, #tpu.memory_space<smem>>
    %470 = vector.extract_strided_slice %428 {offsets = [2, 2, 0], sizes = [5, 5, 128], strides = [1, 1, 1]} : vector<7x7x128xf32> to vector<5x5x128xf32>
    %471 = vector.broadcast %469 : f32 to vector<5x5x128xf32>
    %472 = arith.mulf %470, %471 : vector<5x5x128xf32>
    %473 = arith.addf %468, %472 : vector<5x5x128xf32>
    %c10_59 = arith.constant 10 : index
    %c0_60 = arith.constant 0 : index
    %c0_61 = arith.constant 0 : index
    %c0_62 = arith.constant 0 : index
    %474 = vector.load %arg1[%c10_59, %c0_60, %c0_61, %c0_62] : memref<16x7x7x128xf32, #tpu.memory_space<vmem>>, vector<1x7x7x128xf32>
    %475 = vector.shape_cast %474 : vector<1x7x7x128xf32> to vector<7x7x128xf32>
    %c26_63 = arith.constant 26 : index
    %476 = memref.load %arg2[%c26_63] : memref<72xf32, #tpu.memory_space<smem>>
    %477 = vector.extract_strided_slice %475 {offsets = [0, 0, 0], sizes = [5, 5, 128], strides = [1, 1, 1]} : vector<7x7x128xf32> to vector<5x5x128xf32>
    %478 = vector.broadcast %476 : f32 to vector<5x5x128xf32>
    %479 = arith.mulf %477, %478 : vector<5x5x128xf32>
    %480 = arith.addf %473, %479 : vector<5x5x128xf32>
    %c25_64 = arith.constant 25 : index
    %481 = memref.load %arg2[%c25_64] : memref<72xf32, #tpu.memory_space<smem>>
    %482 = vector.extract_strided_slice %475 {offsets = [0, 1, 0], sizes = [5, 5, 128], strides = [1, 1, 1]} : vector<7x7x128xf32> to vector<5x5x128xf32>
    %483 = vector.broadcast %481 : f32 to vector<5x5x128xf32>
    %484 = arith.mulf %482, %483 : vector<5x5x128xf32>
    %485 = arith.addf %480, %484 : vector<5x5x128xf32>
    %c24_65 = arith.constant 24 : index
    %486 = memref.load %arg2[%c24_65] : memref<72xf32, #tpu.memory_space<smem>>
    %487 = vector.extract_strided_slice %475 {offsets = [0, 2, 0], sizes = [5, 5, 128], strides = [1, 1, 1]} : vector<7x7x128xf32> to vector<5x5x128xf32>
    %488 = vector.broadcast %486 : f32 to vector<5x5x128xf32>
    %489 = arith.mulf %487, %488 : vector<5x5x128xf32>
    %490 = arith.addf %485, %489 : vector<5x5x128xf32>
    %c23_66 = arith.constant 23 : index
    %491 = memref.load %arg2[%c23_66] : memref<72xf32, #tpu.memory_space<smem>>
    %492 = vector.extract_strided_slice %475 {offsets = [1, 0, 0], sizes = [5, 5, 128], strides = [1, 1, 1]} : vector<7x7x128xf32> to vector<5x5x128xf32>
    %493 = vector.broadcast %491 : f32 to vector<5x5x128xf32>
    %494 = arith.mulf %492, %493 : vector<5x5x128xf32>
    %495 = arith.addf %490, %494 : vector<5x5x128xf32>
    %c22_67 = arith.constant 22 : index
    %496 = memref.load %arg2[%c22_67] : memref<72xf32, #tpu.memory_space<smem>>
    %497 = vector.extract_strided_slice %475 {offsets = [1, 1, 0], sizes = [5, 5, 128], strides = [1, 1, 1]} : vector<7x7x128xf32> to vector<5x5x128xf32>
    %498 = vector.broadcast %496 : f32 to vector<5x5x128xf32>
    %499 = arith.mulf %497, %498 : vector<5x5x128xf32>
    %500 = arith.addf %495, %499 : vector<5x5x128xf32>
    %c21_68 = arith.constant 21 : index
    %501 = memref.load %arg2[%c21_68] : memref<72xf32, #tpu.memory_space<smem>>
    %502 = vector.extract_strided_slice %475 {offsets = [1, 2, 0], sizes = [5, 5, 128], strides = [1, 1, 1]} : vector<7x7x128xf32> to vector<5x5x128xf32>
    %503 = vector.broadcast %501 : f32 to vector<5x5x128xf32>
    %504 = arith.mulf %502, %503 : vector<5x5x128xf32>
    %505 = arith.addf %500, %504 : vector<5x5x128xf32>
    %c20_69 = arith.constant 20 : index
    %506 = memref.load %arg2[%c20_69] : memref<72xf32, #tpu.memory_space<smem>>
    %507 = vector.extract_strided_slice %475 {offsets = [2, 0, 0], sizes = [5, 5, 128], strides = [1, 1, 1]} : vector<7x7x128xf32> to vector<5x5x128xf32>
    %508 = vector.broadcast %506 : f32 to vector<5x5x128xf32>
    %509 = arith.mulf %507, %508 : vector<5x5x128xf32>
    %510 = arith.addf %505, %509 : vector<5x5x128xf32>
    %c19_70 = arith.constant 19 : index
    %511 = memref.load %arg2[%c19_70] : memref<72xf32, #tpu.memory_space<smem>>
    %512 = vector.extract_strided_slice %475 {offsets = [2, 1, 0], sizes = [5, 5, 128], strides = [1, 1, 1]} : vector<7x7x128xf32> to vector<5x5x128xf32>
    %513 = vector.broadcast %511 : f32 to vector<5x5x128xf32>
    %514 = arith.mulf %512, %513 : vector<5x5x128xf32>
    %515 = arith.addf %510, %514 : vector<5x5x128xf32>
    %c18_71 = arith.constant 18 : index
    %516 = memref.load %arg2[%c18_71] : memref<72xf32, #tpu.memory_space<smem>>
    %517 = vector.extract_strided_slice %475 {offsets = [2, 2, 0], sizes = [5, 5, 128], strides = [1, 1, 1]} : vector<7x7x128xf32> to vector<5x5x128xf32>
    %518 = vector.broadcast %516 : f32 to vector<5x5x128xf32>
    %519 = arith.mulf %517, %518 : vector<5x5x128xf32>
    %520 = arith.addf %515, %519 : vector<5x5x128xf32>
    %c11_72 = arith.constant 11 : index
    %c0_73 = arith.constant 0 : index
    %c0_74 = arith.constant 0 : index
    %c0_75 = arith.constant 0 : index
    %521 = vector.load %arg1[%c11_72, %c0_73, %c0_74, %c0_75] : memref<16x7x7x128xf32, #tpu.memory_space<vmem>>, vector<1x7x7x128xf32>
    %522 = vector.shape_cast %521 : vector<1x7x7x128xf32> to vector<7x7x128xf32>
    %c35_76 = arith.constant 35 : index
    %523 = memref.load %arg2[%c35_76] : memref<72xf32, #tpu.memory_space<smem>>
    %524 = vector.extract_strided_slice %522 {offsets = [0, 0, 0], sizes = [5, 5, 128], strides = [1, 1, 1]} : vector<7x7x128xf32> to vector<5x5x128xf32>
    %525 = vector.broadcast %523 : f32 to vector<5x5x128xf32>
    %526 = arith.mulf %524, %525 : vector<5x5x128xf32>
    %527 = arith.addf %520, %526 : vector<5x5x128xf32>
    %c34_77 = arith.constant 34 : index
    %528 = memref.load %arg2[%c34_77] : memref<72xf32, #tpu.memory_space<smem>>
    %529 = vector.extract_strided_slice %522 {offsets = [0, 1, 0], sizes = [5, 5, 128], strides = [1, 1, 1]} : vector<7x7x128xf32> to vector<5x5x128xf32>
    %530 = vector.broadcast %528 : f32 to vector<5x5x128xf32>
    %531 = arith.mulf %529, %530 : vector<5x5x128xf32>
    %532 = arith.addf %527, %531 : vector<5x5x128xf32>
    %c33_78 = arith.constant 33 : index
    %533 = memref.load %arg2[%c33_78] : memref<72xf32, #tpu.memory_space<smem>>
    %534 = vector.extract_strided_slice %522 {offsets = [0, 2, 0], sizes = [5, 5, 128], strides = [1, 1, 1]} : vector<7x7x128xf32> to vector<5x5x128xf32>
    %535 = vector.broadcast %533 : f32 to vector<5x5x128xf32>
    %536 = arith.mulf %534, %535 : vector<5x5x128xf32>
    %537 = arith.addf %532, %536 : vector<5x5x128xf32>
    %c32_79 = arith.constant 32 : index
    %538 = memref.load %arg2[%c32_79] : memref<72xf32, #tpu.memory_space<smem>>
    %539 = vector.extract_strided_slice %522 {offsets = [1, 0, 0], sizes = [5, 5, 128], strides = [1, 1, 1]} : vector<7x7x128xf32> to vector<5x5x128xf32>
    %540 = vector.broadcast %538 : f32 to vector<5x5x128xf32>
    %541 = arith.mulf %539, %540 : vector<5x5x128xf32>
    %542 = arith.addf %537, %541 : vector<5x5x128xf32>
    %c31_80 = arith.constant 31 : index
    %543 = memref.load %arg2[%c31_80] : memref<72xf32, #tpu.memory_space<smem>>
    %544 = vector.extract_strided_slice %522 {offsets = [1, 1, 0], sizes = [5, 5, 128], strides = [1, 1, 1]} : vector<7x7x128xf32> to vector<5x5x128xf32>
    %545 = vector.broadcast %543 : f32 to vector<5x5x128xf32>
    %546 = arith.mulf %544, %545 : vector<5x5x128xf32>
    %547 = arith.addf %542, %546 : vector<5x5x128xf32>
    %c30_81 = arith.constant 30 : index
    %548 = memref.load %arg2[%c30_81] : memref<72xf32, #tpu.memory_space<smem>>
    %549 = vector.extract_strided_slice %522 {offsets = [1, 2, 0], sizes = [5, 5, 128], strides = [1, 1, 1]} : vector<7x7x128xf32> to vector<5x5x128xf32>
    %550 = vector.broadcast %548 : f32 to vector<5x5x128xf32>
    %551 = arith.mulf %549, %550 : vector<5x5x128xf32>
    %552 = arith.addf %547, %551 : vector<5x5x128xf32>
    %c29_82 = arith.constant 29 : index
    %553 = memref.load %arg2[%c29_82] : memref<72xf32, #tpu.memory_space<smem>>
    %554 = vector.extract_strided_slice %522 {offsets = [2, 0, 0], sizes = [5, 5, 128], strides = [1, 1, 1]} : vector<7x7x128xf32> to vector<5x5x128xf32>
    %555 = vector.broadcast %553 : f32 to vector<5x5x128xf32>
    %556 = arith.mulf %554, %555 : vector<5x5x128xf32>
    %557 = arith.addf %552, %556 : vector<5x5x128xf32>
    %c28_83 = arith.constant 28 : index
    %558 = memref.load %arg2[%c28_83] : memref<72xf32, #tpu.memory_space<smem>>
    %559 = vector.extract_strided_slice %522 {offsets = [2, 1, 0], sizes = [5, 5, 128], strides = [1, 1, 1]} : vector<7x7x128xf32> to vector<5x5x128xf32>
    %560 = vector.broadcast %558 : f32 to vector<5x5x128xf32>
    %561 = arith.mulf %559, %560 : vector<5x5x128xf32>
    %562 = arith.addf %557, %561 : vector<5x5x128xf32>
    %c27_84 = arith.constant 27 : index
    %563 = memref.load %arg2[%c27_84] : memref<72xf32, #tpu.memory_space<smem>>
    %564 = vector.extract_strided_slice %522 {offsets = [2, 2, 0], sizes = [5, 5, 128], strides = [1, 1, 1]} : vector<7x7x128xf32> to vector<5x5x128xf32>
    %565 = vector.broadcast %563 : f32 to vector<5x5x128xf32>
    %566 = arith.mulf %564, %565 : vector<5x5x128xf32>
    %567 = arith.addf %562, %566 : vector<5x5x128xf32>
    %c12_85 = arith.constant 12 : index
    %c0_86 = arith.constant 0 : index
    %c0_87 = arith.constant 0 : index
    %c0_88 = arith.constant 0 : index
    %568 = vector.load %arg1[%c12_85, %c0_86, %c0_87, %c0_88] : memref<16x7x7x128xf32, #tpu.memory_space<vmem>>, vector<1x7x7x128xf32>
    %569 = vector.shape_cast %568 : vector<1x7x7x128xf32> to vector<7x7x128xf32>
    %c44_89 = arith.constant 44 : index
    %570 = memref.load %arg2[%c44_89] : memref<72xf32, #tpu.memory_space<smem>>
    %571 = vector.extract_strided_slice %569 {offsets = [0, 0, 0], sizes = [5, 5, 128], strides = [1, 1, 1]} : vector<7x7x128xf32> to vector<5x5x128xf32>
    %572 = vector.broadcast %570 : f32 to vector<5x5x128xf32>
    %573 = arith.mulf %571, %572 : vector<5x5x128xf32>
    %574 = arith.addf %567, %573 : vector<5x5x128xf32>
    %c43_90 = arith.constant 43 : index
    %575 = memref.load %arg2[%c43_90] : memref<72xf32, #tpu.memory_space<smem>>
    %576 = vector.extract_strided_slice %569 {offsets = [0, 1, 0], sizes = [5, 5, 128], strides = [1, 1, 1]} : vector<7x7x128xf32> to vector<5x5x128xf32>
    %577 = vector.broadcast %575 : f32 to vector<5x5x128xf32>
    %578 = arith.mulf %576, %577 : vector<5x5x128xf32>
    %579 = arith.addf %574, %578 : vector<5x5x128xf32>
    %c42_91 = arith.constant 42 : index
    %580 = memref.load %arg2[%c42_91] : memref<72xf32, #tpu.memory_space<smem>>
    %581 = vector.extract_strided_slice %569 {offsets = [0, 2, 0], sizes = [5, 5, 128], strides = [1, 1, 1]} : vector<7x7x128xf32> to vector<5x5x128xf32>
    %582 = vector.broadcast %580 : f32 to vector<5x5x128xf32>
    %583 = arith.mulf %581, %582 : vector<5x5x128xf32>
    %584 = arith.addf %579, %583 : vector<5x5x128xf32>
    %c41_92 = arith.constant 41 : index
    %585 = memref.load %arg2[%c41_92] : memref<72xf32, #tpu.memory_space<smem>>
    %586 = vector.extract_strided_slice %569 {offsets = [1, 0, 0], sizes = [5, 5, 128], strides = [1, 1, 1]} : vector<7x7x128xf32> to vector<5x5x128xf32>
    %587 = vector.broadcast %585 : f32 to vector<5x5x128xf32>
    %588 = arith.mulf %586, %587 : vector<5x5x128xf32>
    %589 = arith.addf %584, %588 : vector<5x5x128xf32>
    %c40_93 = arith.constant 40 : index
    %590 = memref.load %arg2[%c40_93] : memref<72xf32, #tpu.memory_space<smem>>
    %591 = vector.extract_strided_slice %569 {offsets = [1, 1, 0], sizes = [5, 5, 128], strides = [1, 1, 1]} : vector<7x7x128xf32> to vector<5x5x128xf32>
    %592 = vector.broadcast %590 : f32 to vector<5x5x128xf32>
    %593 = arith.mulf %591, %592 : vector<5x5x128xf32>
    %594 = arith.addf %589, %593 : vector<5x5x128xf32>
    %c39_94 = arith.constant 39 : index
    %595 = memref.load %arg2[%c39_94] : memref<72xf32, #tpu.memory_space<smem>>
    %596 = vector.extract_strided_slice %569 {offsets = [1, 2, 0], sizes = [5, 5, 128], strides = [1, 1, 1]} : vector<7x7x128xf32> to vector<5x5x128xf32>
    %597 = vector.broadcast %595 : f32 to vector<5x5x128xf32>
    %598 = arith.mulf %596, %597 : vector<5x5x128xf32>
    %599 = arith.addf %594, %598 : vector<5x5x128xf32>
    %c38_95 = arith.constant 38 : index
    %600 = memref.load %arg2[%c38_95] : memref<72xf32, #tpu.memory_space<smem>>
    %601 = vector.extract_strided_slice %569 {offsets = [2, 0, 0], sizes = [5, 5, 128], strides = [1, 1, 1]} : vector<7x7x128xf32> to vector<5x5x128xf32>
    %602 = vector.broadcast %600 : f32 to vector<5x5x128xf32>
    %603 = arith.mulf %601, %602 : vector<5x5x128xf32>
    %604 = arith.addf %599, %603 : vector<5x5x128xf32>
    %c37_96 = arith.constant 37 : index
    %605 = memref.load %arg2[%c37_96] : memref<72xf32, #tpu.memory_space<smem>>
    %606 = vector.extract_strided_slice %569 {offsets = [2, 1, 0], sizes = [5, 5, 128], strides = [1, 1, 1]} : vector<7x7x128xf32> to vector<5x5x128xf32>
    %607 = vector.broadcast %605 : f32 to vector<5x5x128xf32>
    %608 = arith.mulf %606, %607 : vector<5x5x128xf32>
    %609 = arith.addf %604, %608 : vector<5x5x128xf32>
    %c36_97 = arith.constant 36 : index
    %610 = memref.load %arg2[%c36_97] : memref<72xf32, #tpu.memory_space<smem>>
    %611 = vector.extract_strided_slice %569 {offsets = [2, 2, 0], sizes = [5, 5, 128], strides = [1, 1, 1]} : vector<7x7x128xf32> to vector<5x5x128xf32>
    %612 = vector.broadcast %610 : f32 to vector<5x5x128xf32>
    %613 = arith.mulf %611, %612 : vector<5x5x128xf32>
    %614 = arith.addf %609, %613 : vector<5x5x128xf32>
    %c13_98 = arith.constant 13 : index
    %c0_99 = arith.constant 0 : index
    %c0_100 = arith.constant 0 : index
    %c0_101 = arith.constant 0 : index
    %615 = vector.load %arg1[%c13_98, %c0_99, %c0_100, %c0_101] : memref<16x7x7x128xf32, #tpu.memory_space<vmem>>, vector<1x7x7x128xf32>
    %616 = vector.shape_cast %615 : vector<1x7x7x128xf32> to vector<7x7x128xf32>
    %c53_102 = arith.constant 53 : index
    %617 = memref.load %arg2[%c53_102] : memref<72xf32, #tpu.memory_space<smem>>
    %618 = vector.extract_strided_slice %616 {offsets = [0, 0, 0], sizes = [5, 5, 128], strides = [1, 1, 1]} : vector<7x7x128xf32> to vector<5x5x128xf32>
    %619 = vector.broadcast %617 : f32 to vector<5x5x128xf32>
    %620 = arith.mulf %618, %619 : vector<5x5x128xf32>
    %621 = arith.addf %614, %620 : vector<5x5x128xf32>
    %c52_103 = arith.constant 52 : index
    %622 = memref.load %arg2[%c52_103] : memref<72xf32, #tpu.memory_space<smem>>
    %623 = vector.extract_strided_slice %616 {offsets = [0, 1, 0], sizes = [5, 5, 128], strides = [1, 1, 1]} : vector<7x7x128xf32> to vector<5x5x128xf32>
    %624 = vector.broadcast %622 : f32 to vector<5x5x128xf32>
    %625 = arith.mulf %623, %624 : vector<5x5x128xf32>
    %626 = arith.addf %621, %625 : vector<5x5x128xf32>
    %c51_104 = arith.constant 51 : index
    %627 = memref.load %arg2[%c51_104] : memref<72xf32, #tpu.memory_space<smem>>
    %628 = vector.extract_strided_slice %616 {offsets = [0, 2, 0], sizes = [5, 5, 128], strides = [1, 1, 1]} : vector<7x7x128xf32> to vector<5x5x128xf32>
    %629 = vector.broadcast %627 : f32 to vector<5x5x128xf32>
    %630 = arith.mulf %628, %629 : vector<5x5x128xf32>
    %631 = arith.addf %626, %630 : vector<5x5x128xf32>
    %c50_105 = arith.constant 50 : index
    %632 = memref.load %arg2[%c50_105] : memref<72xf32, #tpu.memory_space<smem>>
    %633 = vector.extract_strided_slice %616 {offsets = [1, 0, 0], sizes = [5, 5, 128], strides = [1, 1, 1]} : vector<7x7x128xf32> to vector<5x5x128xf32>
    %634 = vector.broadcast %632 : f32 to vector<5x5x128xf32>
    %635 = arith.mulf %633, %634 : vector<5x5x128xf32>
    %636 = arith.addf %631, %635 : vector<5x5x128xf32>
    %c49_106 = arith.constant 49 : index
    %637 = memref.load %arg2[%c49_106] : memref<72xf32, #tpu.memory_space<smem>>
    %638 = vector.extract_strided_slice %616 {offsets = [1, 1, 0], sizes = [5, 5, 128], strides = [1, 1, 1]} : vector<7x7x128xf32> to vector<5x5x128xf32>
    %639 = vector.broadcast %637 : f32 to vector<5x5x128xf32>
    %640 = arith.mulf %638, %639 : vector<5x5x128xf32>
    %641 = arith.addf %636, %640 : vector<5x5x128xf32>
    %c48_107 = arith.constant 48 : index
    %642 = memref.load %arg2[%c48_107] : memref<72xf32, #tpu.memory_space<smem>>
    %643 = vector.extract_strided_slice %616 {offsets = [1, 2, 0], sizes = [5, 5, 128], strides = [1, 1, 1]} : vector<7x7x128xf32> to vector<5x5x128xf32>
    %644 = vector.broadcast %642 : f32 to vector<5x5x128xf32>
    %645 = arith.mulf %643, %644 : vector<5x5x128xf32>
    %646 = arith.addf %641, %645 : vector<5x5x128xf32>
    %c47_108 = arith.constant 47 : index
    %647 = memref.load %arg2[%c47_108] : memref<72xf32, #tpu.memory_space<smem>>
    %648 = vector.extract_strided_slice %616 {offsets = [2, 0, 0], sizes = [5, 5, 128], strides = [1, 1, 1]} : vector<7x7x128xf32> to vector<5x5x128xf32>
    %649 = vector.broadcast %647 : f32 to vector<5x5x128xf32>
    %650 = arith.mulf %648, %649 : vector<5x5x128xf32>
    %651 = arith.addf %646, %650 : vector<5x5x128xf32>
    %c46_109 = arith.constant 46 : index
    %652 = memref.load %arg2[%c46_109] : memref<72xf32, #tpu.memory_space<smem>>
    %653 = vector.extract_strided_slice %616 {offsets = [2, 1, 0], sizes = [5, 5, 128], strides = [1, 1, 1]} : vector<7x7x128xf32> to vector<5x5x128xf32>
    %654 = vector.broadcast %652 : f32 to vector<5x5x128xf32>
    %655 = arith.mulf %653, %654 : vector<5x5x128xf32>
    %656 = arith.addf %651, %655 : vector<5x5x128xf32>
    %c45_110 = arith.constant 45 : index
    %657 = memref.load %arg2[%c45_110] : memref<72xf32, #tpu.memory_space<smem>>
    %658 = vector.extract_strided_slice %616 {offsets = [2, 2, 0], sizes = [5, 5, 128], strides = [1, 1, 1]} : vector<7x7x128xf32> to vector<5x5x128xf32>
    %659 = vector.broadcast %657 : f32 to vector<5x5x128xf32>
    %660 = arith.mulf %658, %659 : vector<5x5x128xf32>
    %661 = arith.addf %656, %660 : vector<5x5x128xf32>
    %c14_111 = arith.constant 14 : index
    %c0_112 = arith.constant 0 : index
    %c0_113 = arith.constant 0 : index
    %c0_114 = arith.constant 0 : index
    %662 = vector.load %arg1[%c14_111, %c0_112, %c0_113, %c0_114] : memref<16x7x7x128xf32, #tpu.memory_space<vmem>>, vector<1x7x7x128xf32>
    %663 = vector.shape_cast %662 : vector<1x7x7x128xf32> to vector<7x7x128xf32>
    %c62_115 = arith.constant 62 : index
    %664 = memref.load %arg2[%c62_115] : memref<72xf32, #tpu.memory_space<smem>>
    %665 = vector.extract_strided_slice %663 {offsets = [0, 0, 0], sizes = [5, 5, 128], strides = [1, 1, 1]} : vector<7x7x128xf32> to vector<5x5x128xf32>
    %666 = vector.broadcast %664 : f32 to vector<5x5x128xf32>
    %667 = arith.mulf %665, %666 : vector<5x5x128xf32>
    %668 = arith.addf %661, %667 : vector<5x5x128xf32>
    %c61_116 = arith.constant 61 : index
    %669 = memref.load %arg2[%c61_116] : memref<72xf32, #tpu.memory_space<smem>>
    %670 = vector.extract_strided_slice %663 {offsets = [0, 1, 0], sizes = [5, 5, 128], strides = [1, 1, 1]} : vector<7x7x128xf32> to vector<5x5x128xf32>
    %671 = vector.broadcast %669 : f32 to vector<5x5x128xf32>
    %672 = arith.mulf %670, %671 : vector<5x5x128xf32>
    %673 = arith.addf %668, %672 : vector<5x5x128xf32>
    %c60_117 = arith.constant 60 : index
    %674 = memref.load %arg2[%c60_117] : memref<72xf32, #tpu.memory_space<smem>>
    %675 = vector.extract_strided_slice %663 {offsets = [0, 2, 0], sizes = [5, 5, 128], strides = [1, 1, 1]} : vector<7x7x128xf32> to vector<5x5x128xf32>
    %676 = vector.broadcast %674 : f32 to vector<5x5x128xf32>
    %677 = arith.mulf %675, %676 : vector<5x5x128xf32>
    %678 = arith.addf %673, %677 : vector<5x5x128xf32>
    %c59_118 = arith.constant 59 : index
    %679 = memref.load %arg2[%c59_118] : memref<72xf32, #tpu.memory_space<smem>>
    %680 = vector.extract_strided_slice %663 {offsets = [1, 0, 0], sizes = [5, 5, 128], strides = [1, 1, 1]} : vector<7x7x128xf32> to vector<5x5x128xf32>
    %681 = vector.broadcast %679 : f32 to vector<5x5x128xf32>
    %682 = arith.mulf %680, %681 : vector<5x5x128xf32>
    %683 = arith.addf %678, %682 : vector<5x5x128xf32>
    %c58_119 = arith.constant 58 : index
    %684 = memref.load %arg2[%c58_119] : memref<72xf32, #tpu.memory_space<smem>>
    %685 = vector.extract_strided_slice %663 {offsets = [1, 1, 0], sizes = [5, 5, 128], strides = [1, 1, 1]} : vector<7x7x128xf32> to vector<5x5x128xf32>
    %686 = vector.broadcast %684 : f32 to vector<5x5x128xf32>
    %687 = arith.mulf %685, %686 : vector<5x5x128xf32>
    %688 = arith.addf %683, %687 : vector<5x5x128xf32>
    %c57_120 = arith.constant 57 : index
    %689 = memref.load %arg2[%c57_120] : memref<72xf32, #tpu.memory_space<smem>>
    %690 = vector.extract_strided_slice %663 {offsets = [1, 2, 0], sizes = [5, 5, 128], strides = [1, 1, 1]} : vector<7x7x128xf32> to vector<5x5x128xf32>
    %691 = vector.broadcast %689 : f32 to vector<5x5x128xf32>
    %692 = arith.mulf %690, %691 : vector<5x5x128xf32>
    %693 = arith.addf %688, %692 : vector<5x5x128xf32>
    %c56_121 = arith.constant 56 : index
    %694 = memref.load %arg2[%c56_121] : memref<72xf32, #tpu.memory_space<smem>>
    %695 = vector.extract_strided_slice %663 {offsets = [2, 0, 0], sizes = [5, 5, 128], strides = [1, 1, 1]} : vector<7x7x128xf32> to vector<5x5x128xf32>
    %696 = vector.broadcast %694 : f32 to vector<5x5x128xf32>
    %697 = arith.mulf %695, %696 : vector<5x5x128xf32>
    %698 = arith.addf %693, %697 : vector<5x5x128xf32>
    %c55_122 = arith.constant 55 : index
    %699 = memref.load %arg2[%c55_122] : memref<72xf32, #tpu.memory_space<smem>>
    %700 = vector.extract_strided_slice %663 {offsets = [2, 1, 0], sizes = [5, 5, 128], strides = [1, 1, 1]} : vector<7x7x128xf32> to vector<5x5x128xf32>
    %701 = vector.broadcast %699 : f32 to vector<5x5x128xf32>
    %702 = arith.mulf %700, %701 : vector<5x5x128xf32>
    %703 = arith.addf %698, %702 : vector<5x5x128xf32>
    %c54_123 = arith.constant 54 : index
    %704 = memref.load %arg2[%c54_123] : memref<72xf32, #tpu.memory_space<smem>>
    %705 = vector.extract_strided_slice %663 {offsets = [2, 2, 0], sizes = [5, 5, 128], strides = [1, 1, 1]} : vector<7x7x128xf32> to vector<5x5x128xf32>
    %706 = vector.broadcast %704 : f32 to vector<5x5x128xf32>
    %707 = arith.mulf %705, %706 : vector<5x5x128xf32>
    %708 = arith.addf %703, %707 : vector<5x5x128xf32>
    %c15_124 = arith.constant 15 : index
    %c0_125 = arith.constant 0 : index
    %c0_126 = arith.constant 0 : index
    %c0_127 = arith.constant 0 : index
    %709 = vector.load %arg1[%c15_124, %c0_125, %c0_126, %c0_127] : memref<16x7x7x128xf32, #tpu.memory_space<vmem>>, vector<1x7x7x128xf32>
    %710 = vector.shape_cast %709 : vector<1x7x7x128xf32> to vector<7x7x128xf32>
    %c71_128 = arith.constant 71 : index
    %711 = memref.load %arg2[%c71_128] : memref<72xf32, #tpu.memory_space<smem>>
    %712 = vector.extract_strided_slice %710 {offsets = [0, 0, 0], sizes = [5, 5, 128], strides = [1, 1, 1]} : vector<7x7x128xf32> to vector<5x5x128xf32>
    %713 = vector.broadcast %711 : f32 to vector<5x5x128xf32>
    %714 = arith.mulf %712, %713 : vector<5x5x128xf32>
    %715 = arith.addf %708, %714 : vector<5x5x128xf32>
    %c70_129 = arith.constant 70 : index
    %716 = memref.load %arg2[%c70_129] : memref<72xf32, #tpu.memory_space<smem>>
    %717 = vector.extract_strided_slice %710 {offsets = [0, 1, 0], sizes = [5, 5, 128], strides = [1, 1, 1]} : vector<7x7x128xf32> to vector<5x5x128xf32>
    %718 = vector.broadcast %716 : f32 to vector<5x5x128xf32>
    %719 = arith.mulf %717, %718 : vector<5x5x128xf32>
    %720 = arith.addf %715, %719 : vector<5x5x128xf32>
    %c69_130 = arith.constant 69 : index
    %721 = memref.load %arg2[%c69_130] : memref<72xf32, #tpu.memory_space<smem>>
    %722 = vector.extract_strided_slice %710 {offsets = [0, 2, 0], sizes = [5, 5, 128], strides = [1, 1, 1]} : vector<7x7x128xf32> to vector<5x5x128xf32>
    %723 = vector.broadcast %721 : f32 to vector<5x5x128xf32>
    %724 = arith.mulf %722, %723 : vector<5x5x128xf32>
    %725 = arith.addf %720, %724 : vector<5x5x128xf32>
    %c68_131 = arith.constant 68 : index
    %726 = memref.load %arg2[%c68_131] : memref<72xf32, #tpu.memory_space<smem>>
    %727 = vector.extract_strided_slice %710 {offsets = [1, 0, 0], sizes = [5, 5, 128], strides = [1, 1, 1]} : vector<7x7x128xf32> to vector<5x5x128xf32>
    %728 = vector.broadcast %726 : f32 to vector<5x5x128xf32>
    %729 = arith.mulf %727, %728 : vector<5x5x128xf32>
    %730 = arith.addf %725, %729 : vector<5x5x128xf32>
    %c67_132 = arith.constant 67 : index
    %731 = memref.load %arg2[%c67_132] : memref<72xf32, #tpu.memory_space<smem>>
    %732 = vector.extract_strided_slice %710 {offsets = [1, 1, 0], sizes = [5, 5, 128], strides = [1, 1, 1]} : vector<7x7x128xf32> to vector<5x5x128xf32>
    %733 = vector.broadcast %731 : f32 to vector<5x5x128xf32>
    %734 = arith.mulf %732, %733 : vector<5x5x128xf32>
    %735 = arith.addf %730, %734 : vector<5x5x128xf32>
    %c66_133 = arith.constant 66 : index
    %736 = memref.load %arg2[%c66_133] : memref<72xf32, #tpu.memory_space<smem>>
    %737 = vector.extract_strided_slice %710 {offsets = [1, 2, 0], sizes = [5, 5, 128], strides = [1, 1, 1]} : vector<7x7x128xf32> to vector<5x5x128xf32>
    %738 = vector.broadcast %736 : f32 to vector<5x5x128xf32>
    %739 = arith.mulf %737, %738 : vector<5x5x128xf32>
    %740 = arith.addf %735, %739 : vector<5x5x128xf32>
    %c65_134 = arith.constant 65 : index
    %741 = memref.load %arg2[%c65_134] : memref<72xf32, #tpu.memory_space<smem>>
    %742 = vector.extract_strided_slice %710 {offsets = [2, 0, 0], sizes = [5, 5, 128], strides = [1, 1, 1]} : vector<7x7x128xf32> to vector<5x5x128xf32>
    %743 = vector.broadcast %741 : f32 to vector<5x5x128xf32>
    %744 = arith.mulf %742, %743 : vector<5x5x128xf32>
    %745 = arith.addf %740, %744 : vector<5x5x128xf32>
    %c64_135 = arith.constant 64 : index
    %746 = memref.load %arg2[%c64_135] : memref<72xf32, #tpu.memory_space<smem>>
    %747 = vector.extract_strided_slice %710 {offsets = [2, 1, 0], sizes = [5, 5, 128], strides = [1, 1, 1]} : vector<7x7x128xf32> to vector<5x5x128xf32>
    %748 = vector.broadcast %746 : f32 to vector<5x5x128xf32>
    %749 = arith.mulf %747, %748 : vector<5x5x128xf32>
    %750 = arith.addf %745, %749 : vector<5x5x128xf32>
    %c63_136 = arith.constant 63 : index
    %751 = memref.load %arg2[%c63_136] : memref<72xf32, #tpu.memory_space<smem>>
    %752 = vector.extract_strided_slice %710 {offsets = [2, 2, 0], sizes = [5, 5, 128], strides = [1, 1, 1]} : vector<7x7x128xf32> to vector<5x5x128xf32>
    %753 = vector.broadcast %751 : f32 to vector<5x5x128xf32>
    %754 = arith.mulf %752, %753 : vector<5x5x128xf32>
    %755 = arith.addf %750, %754 : vector<5x5x128xf32>
    %756 = math.tanh %755 : vector<5x5x128xf32>
    %757 = arith.maximumf %378, %756 : vector<5x5x128xf32>
    %758 = arith.subf %378, %757 : vector<5x5x128xf32>
    %759 = math.exp %758 : vector<5x5x128xf32>
    %760 = arith.subf %756, %757 : vector<5x5x128xf32>
    %761 = math.exp %760 : vector<5x5x128xf32>
    %762 = arith.addf %759, %761 : vector<5x5x128xf32>
    %cst = arith.constant 1.000000e+00 : f32
    %763 = vector.broadcast %cst : f32 to vector<5x5x128xf32>
    %764 = arith.divf %763, %762 : vector<5x5x128xf32>
    %765 = arith.mulf %759, %764 : vector<5x5x128xf32>
    %c0_137 = arith.constant 0 : index
    %c0_138 = arith.constant 0 : index
    %c0_139 = arith.constant 0 : index
    %c0_140 = arith.constant 0 : index
    %766 = vector.load %arg4[%c0_137, %c0_138, %c0_139, %c0_140] : memref<2x5x5x128xf32, #tpu.memory_space<vmem>>, vector<1x5x5x128xf32>
    %767 = vector.shape_cast %766 : vector<1x5x5x128xf32> to vector<5x5x128xf32>
    %768 = vector.shape_cast %765 : vector<5x5x128xf32> to vector<1x5x5x128xf32>
    tpu.vector_store %arg4[%c0_137, %c0_138, %c0_139, %c0_140], %768 {strides = array<i32>} : memref<2x5x5x128xf32, #tpu.memory_space<vmem>>, vector<1x5x5x128xf32>,
    %769 = arith.mulf %761, %764 : vector<5x5x128xf32>
    %c1_141 = arith.constant 1 : index
    %c0_142 = arith.constant 0 : index
    %c0_143 = arith.constant 0 : index
    %c0_144 = arith.constant 0 : index
    %770 = vector.load %arg4[%c1_141, %c0_142, %c0_143, %c0_144] : memref<2x5x5x128xf32, #tpu.memory_space<vmem>>, vector<1x5x5x128xf32>
    %771 = vector.shape_cast %770 : vector<1x5x5x128xf32> to vector<5x5x128xf32>
    %772 = vector.shape_cast %769 : vector<5x5x128xf32> to vector<1x5x5x128xf32>
    tpu.vector_store %arg4[%c1_141, %c0_142, %c0_143, %c0_144], %772 {strides = array<i32>} : memref<2x5x5x128xf32, #tpu.memory_space<vmem>>, vector<1x5x5x128xf32>,
    return
  }
  func.func @transform_0(%arg0: i32) -> (i32, i32, i32, i32) {
    %c0_i32 = arith.constant 0 : i32
    %c0_i32_0 = arith.constant 0 : i32
    %c0_i32_1 = arith.constant 0 : i32
    %c0_i32_2 = arith.constant 0 : i32
    return %c0_i32, %c0_i32_0, %c0_i32_1, %arg0 : i32, i32, i32, i32
  }
  func.func @transform_1(%arg0: i32) -> i32 {
    %c0_i32 = arith.constant 0 : i32
    %c0_i32_0 = arith.constant 0 : i32
    return %c0_i32 : i32
  }
  func.func @transform_2(%arg0: i32) -> i32 {
    %c0_i32 = arith.constant 0 : i32
    %c0_i32_0 = arith.constant 0 : i32
    return %c0_i32 : i32
  }
  func.func @transform_3(%arg0: i32) -> (i32, i32, i32, i32) {
    %c0_i32 = arith.constant 0 : i32
    %c0_i32_0 = arith.constant 0 : i32
    %c0_i32_1 = arith.constant 0 : i32
    %c0_i32_2 = arith.constant 0 : i32
    return %c0_i32, %c0_i32_0, %c0_i32_1, %arg0 : i32, i32, i32, i32
  }
}

</mosaic_0001>

<llo_original>
// kernel: tpu_custom_call.1
$region0: #{tpu_custom_call.1}
  #allocation0 [shape = 'u32[]', space=smem, size = 0x4, offset = 0x4, fixed_abs, tag = 'smem constant byte address 0x4 - core index']
  #allocation1 [shape = 'u32[144,128]{1,0:T(1,128)}', space=vmem, size = 0x12000, scoped, tag = 'internal scratch']
  #allocation2 [shape = 'f32[1]{0:T(128)S(6)}', space=smem, size = 0x200, scoped, tag = 'scoped memory for tpu_custom_call.1']
  %s0 = inlined_call_operand.vmem [shape: f32[16,7,7,256], index: 0, kind: input, shape index: {}]
  %s1 = inlined_call_operand.vmem [shape: f32[72], index: 1, kind: input, shape index: {}]
  %s2 = inlined_call_operand.<no memory space> [shape: f32[1], index: 2, kind: input, shape index: {}]
  %s3 = inlined_call_operand.vmem [shape: f32[2,5,5,256], index: 3, kind: output, shape index: {}]
  %s4 = sld [smem:[#allocation0]]
  $region121: #{tpu_custom_call.1} parent=0
    _
  %s6 = ssub.s32 1, %s4
  %s7 = scalar_select 0, %s6, %s4
  %8 = sst [smem:[#allocation2]] %s2
  $region1: #{tpu_custom_call.1} parent=0
    #allocation3 [shape = 'u8[917504]{0}', space=vmem, size = 0xe0000, scoped, tag = 'input window, operand 0']
    #allocation4 [shape = 'u8[512]{0}', space=smem, size = 0x200, scoped, tag = 'input window, operand 1, single buffered']
    #allocation5 [shape = 's32[2]{0}', space=sflag, size = 0x8, scoped, tag = 'scoped memory for tpu_custom_call.1']
    #allocation6 [shape = 'u8[81920]{0}', space=vmem, size = 0x14000, scoped, tag = 'output window, operand 0']
    %9 = vsyncpa [#allocation5], 0
    loop: start=0, step=1, limit=4
    $region2: #{tpu_custom_call.1} parent=1 // loop_pre_header
      _
    $region3: #{tpu_custom_call.1} parent=1 // loop_header
      %s11 = sphi 0, %s15
      %p12 = scmp.ge.s32.totalorder %s11, 4
      %s21 = sphi 0, %s23
      %s24 = sphi 0, %s21
      %s25 = sphi 0, %s24
      %s41 = sphi 0, %s25
      %s45 = sphi 0, %s45
      %s47 = sphi 0, %s45
      %s48 = sphi 0, %s47
      %s62 = sphi 0, %s48
      %s66 = sphi 0, %s66
      %s68 = sphi 0, %s66
      %s69 = sphi 0, %s68
      %s83 = sphi 0, %s69
      %s89 = sphi 0, %s91
      %s92 = sphi 0, %s89
      %s93 = sphi 0, %s92
      %s109 = sphi 0, %s93
    $region4: #{tpu_custom_call.1} parent=1 // loop_header_branch
      %14 = sbr.rel (%p12) target = $region8
    $region5: #{tpu_custom_call.1} parent=1 // loop_body
      %s16 = ssub.s32 %s11, 1
      %s17 = ssub.s32 %s11, 2
      %s18 = sadd.s32 %s11, 1
      %s19 = ssub.s32 %s11, %s18
      %p20 = scmp.eq.s32.totalorder %s19, 0
      %s22 = sadd.s32 %s21, 1
      %s23 = scalar_select %p20, %s21, %s22
      %p26 = pneg %p20
      %p27 = scmp.eq.s32.totalorder %s11, 1
      %p28 = por %p26, %p27
      %p29 = scmp.ne.s32.totalorder %s21, %s24
      %p30 = scmp.eq.s32.totalorder %s11, 0
      %p31 = por %p29, %p30
      %p32 = scmp.ne.s32.totalorder %s21, %s24
      %p33 = scmp.eq.s32.totalorder %s16, 1
      %p34 = por %p32, %p33
      %p35 = scmp.ne.s32.totalorder %s24, %s25
      %p36 = scmp.eq.s32.totalorder %s16, 0
      %p37 = por %p35, %p36
      %p38 = scmp.ne.s32.totalorder %s24, %s25
      %p39 = scmp.eq.s32.totalorder %s17, 1
      %p40 = por %p38, %p39
      %p42 = scmp.ne.s32.totalorder %s25, %s41
      %p43 = scmp.eq.s32.totalorder %s17, 0
      %p44 = por %p42, %p43
      %s46 = sadd.s32 %s45, 1
      %p49 = scmp.eq.s32.totalorder %s11, 1
      %p50 = scmp.ne.s32.totalorder %s45, %s47
      %p51 = scmp.eq.s32.totalorder %s11, 0
      %p52 = por %p50, %p51
      %p53 = scmp.ne.s32.totalorder %s45, %s47
      %p54 = scmp.eq.s32.totalorder %s16, 1
      %p55 = por %p53, %p54
      %p56 = scmp.ne.s32.totalorder %s47, %s48
      %p57 = scmp.eq.s32.totalorder %s16, 0
      %p58 = por %p56, %p57
      %p59 = scmp.ne.s32.totalorder %s47, %s48
      %p60 = scmp.eq.s32.totalorder %s17, 1
      %p61 = por %p59, %p60
      %p63 = scmp.ne.s32.totalorder %s48, %s62
      %p64 = scmp.eq.s32.totalorder %s17, 0
      %p65 = por %p63, %p64
      %s67 = sadd.s32 %s66, 1
      %p70 = scmp.eq.s32.totalorder %s11, 1
      %p71 = scmp.ne.s32.totalorder %s66, %s68
      %p72 = scmp.eq.s32.totalorder %s11, 0
      %p73 = por %p71, %p72
      %p74 = scmp.ne.s32.totalorder %s66, %s68
      %p75 = scmp.eq.s32.totalorder %s16, 1
      %p76 = por %p74, %p75
      %p77 = scmp.ne.s32.totalorder %s68, %s69
      %p78 = scmp.eq.s32.totalorder %s16, 0
      %p79 = por %p77, %p78
      %p80 = scmp.ne.s32.totalorder %s68, %s69
      %p81 = scmp.eq.s32.totalorder %s17, 1
      %p82 = por %p80, %p81
      %p84 = scmp.ne.s32.totalorder %s69, %s83
      %p85 = scmp.eq.s32.totalorder %s17, 0
      %p86 = por %p84, %p85
      %s87 = ssub.s32 %s11, %s18
      %p88 = scmp.eq.s32.totalorder %s87, 0
      %s90 = sadd.s32 %s89, 1
      %s91 = scalar_select %p88, %s89, %s90
      %p94 = pneg %p88
      %p95 = scmp.eq.s32.totalorder %s11, 1
      %p96 = por %p94, %p95
      %p97 = scmp.ne.s32.totalorder %s89, %s92
      %p98 = scmp.eq.s32.totalorder %s11, 0
      %p99 = por %p97, %p98
      %p100 = scmp.ne.s32.totalorder %s89, %s92
      %p101 = scmp.eq.s32.totalorder %s16, 1
      %p102 = por %p100, %p101
      %p103 = scmp.ne.s32.totalorder %s92, %s93
      %p104 = scmp.eq.s32.totalorder %s16, 0
      %p105 = por %p103, %p104
      %p106 = scmp.ne.s32.totalorder %s92, %s93
      %p107 = scmp.eq.s32.totalorder %s17, 1
      %p108 = por %p106, %p107
      %p110 = scmp.ne.s32.totalorder %s93, %s109
      %p111 = scmp.eq.s32.totalorder %s17, 0
      %p112 = por %p110, %p111
      %p113 = scmp.le.s32.totalorder 1, %s11
      %p114 = scmp.lt.s32.totalorder %s11, 3
      %p115 = pnand %p113, %p114
      %p116 = pneg %p115
      // Predicated region
      $region9: #{tpu_custom_call.1} parent=5 // pred_check
        _
      $region10: #{tpu_custom_call.1} parent=5 // pred_check_branch
        %118 = sbr.rel (%p115) target = $region12
      $region11: #{tpu_custom_call.1} parent=5 // pred_region
        %s119 = ssub.s32 %s11, 1
        // Predicated region
        $region13: #{tpu_custom_call.1} parent=11 // pred_check
          %p120 = pneg %p58
        $region14: #{tpu_custom_call.1} parent=11 // pred_check_branch
          %122 = sbr.rel (%p120) target = $region16
        $region15: #{tpu_custom_call.1} parent=11 // pred_region
          %s124 = ssub.s32 16, 16
          %125 = vsyncadd [#allocation5], %s124
          %s127 = sshll.u32 %s1, 4
          %s128 = int_to_ptr.vmem [resolvable:$true] %s127
          %130 = dma.vmem_to_smem %s128, 16, [#allocation4], [#allocation5]
        $region16: #{tpu_custom_call.1} parent=11 // pred_fallthru
          _
        // Predicated region
        $region17: #{tpu_custom_call.1} parent=11 // pred_check
          %p131 = pneg %p79
        $region18: #{tpu_custom_call.1} parent=11 // pred_check_branch
          %133 = sbr.rel (%p131) target = $region20
        $region19: #{tpu_custom_call.1} parent=11 // pred_region
          _
        $region20: #{tpu_custom_call.1} parent=11 // pred_fallthru
          _
      $region12: #{tpu_custom_call.1} parent=5 // pred_fallthru
        _
      %p134 = scmp.lt.s32.totalorder %s11, 2
      // Predicated region
      $region21: #{tpu_custom_call.1} parent=5 // pred_check
        %p135 = pneg %p134
      $region22: #{tpu_custom_call.1} parent=5 // pred_check_branch
        %137 = sbr.rel (%p135) target = $region24
      $region23: #{tpu_custom_call.1} parent=5 // pred_region
        // Predicated region
        $region25: #{tpu_custom_call.1} parent=23 // pred_check
          %p138 = pneg %p31
        $region26: #{tpu_custom_call.1} parent=23 // pred_check_branch
          %140 = sbr.rel (%p138) target = $region28
        $region27: #{tpu_custom_call.1} parent=23 // pred_region
          %s141 = sand.u32 %s21, 1
          %s142 = sand.u32 %s21, 1
          %s143 = smul.addr %s142, 896
          %s144 = scalar_lea.vmem [#allocation3], %s143
          %s145 = smul.addr %s11, 8
          %s146 = scalar_lea.vmem %s0, %s145
          // Predicated region
          $region29: #{tpu_custom_call.1} parent=27 // pred_check
            _
          $region30: #{tpu_custom_call.1} parent=27 // pred_check_branch
            %148 = sbr.rel (0) target = $region32
          $region31: #{tpu_custom_call.1} parent=27 // pred_region
            // Predicated region
            $region33: #{tpu_custom_call.1} parent=31 // pred_check
              _
            $region34: #{tpu_custom_call.1} parent=31 // pred_check_branch
              %150 = sbr.rel (0) target = $region36
            $region35: #{tpu_custom_call.1} parent=31 // pred_region
              // Predicated region
              $region48: #{tpu_custom_call.1} parent=35 // pred_check
                _
              $region49: #{tpu_custom_call.1} parent=35 // pred_check_branch
                %388 = sbr.rel (0) target = $region51
              $region50: #{tpu_custom_call.1} parent=35 // pred_region
                loop: start=0, step=1, limit=1
                $region52: #{tpu_custom_call.1} parent=50 // loop_pre_header
                  _
                $region53: #{tpu_custom_call.1} parent=50 // loop_header
                  %s390 = sphi 0, %s394
                  %p391 = scmp.ge.s32.totalorder %s390, 1
                  %s395 = sphi %s146, %s146
                  %s396 = sphi %s144, %s144
                $region54: #{tpu_custom_call.1} parent=50 // loop_header_branch
                  %393 = sbr.rel (%p391) target = $region58
                $region55: #{tpu_custom_call.1} parent=50 // loop_body
                  %v397 = vld [vmem:[%s395] sm:$0xff]
                  %398 = vst [vmem:[%s396] sm:$0xff] %v397
                  %v399 = vld [vmem:[%s395 + $0x10] sm:$0xff]
                  %400 = vst [vmem:[%s396 + $0x8] sm:$0xff] %v399
                  %v401 = vld [vmem:[%s395 + $0x20] sm:$0xff]
                  %402 = vst [vmem:[%s396 + $0x10] sm:$0xff] %v401
                  %v403 = vld [vmem:[%s395 + $0x30] sm:$0xff]
                  %404 = vst [vmem:[%s396 + $0x18] sm:$0xff] %v403
                  %v405 = vld [vmem:[%s395 + $0x40] sm:$0xff]
                  %406 = vst [vmem:[%s396 + $0x20] sm:$0xff] %v405
                  %v407 = vld [vmem:[%s395 + $0x50] sm:$0xff]
                  %408 = vst [vmem:[%s396 + $0x28] sm:$0xff] %v407
                  %v409 = vld [vmem:[%s395 + $0x60] sm:$0xff]
                  %410 = vst [vmem:[%s396 + $0x30] sm:$0xff] %v409
                  %v411 = vld [vmem:[%s395 + $0x70] sm:$0xff]
                  %412 = vst [vmem:[%s396 + $0x38] sm:$0xff] %v411
                  %v413 = vld [vmem:[%s395 + $0x80] sm:$0xff]
                  %414 = vst [vmem:[%s396 + $0x40] sm:$0xff] %v413
                  %v415 = vld [vmem:[%s395 + $0x90] sm:$0xff]
                  %416 = vst [vmem:[%s396 + $0x48] sm:$0xff] %v415
                  %v417 = vld [vmem:[%s395 + $0xa0] sm:$0xff]
                  %418 = vst [vmem:[%s396 + $0x50] sm:$0xff] %v417
                  %v419 = vld [vmem:[%s395 + $0xb0] sm:$0xff]
                  %420 = vst [vmem:[%s396 + $0x58] sm:$0xff] %v419
                  %v421 = vld [vmem:[%s395 + $0xc0] sm:$0xff]
                  %422 = vst [vmem:[%s396 + $0x60] sm:$0xff] %v421
                  %v423 = vld [vmem:[%s395 + $0xd0] sm:$0xff]
                  %424 = vst [vmem:[%s396 + $0x68] sm:$0xff] %v423
                  %v425 = vld [vmem:[%s395 + $0xe0] sm:$0xff]
                  %426 = vst [vmem:[%s396 + $0x70] sm:$0xff] %v425
                  %v427 = vld [vmem:[%s395 + $0xf0] sm:$0xff]
                  %428 = vst [vmem:[%s396 + $0x78] sm:$0xff] %v427
                  %v429 = vld [vmem:[%s395 + $0x100] sm:$0xff]
                  %430 = vst [vmem:[%s396 + $0x80] sm:$0xff] %v429
                  %v431 = vld [vmem:[%s395 + $0x110] sm:$0xff]
                  %432 = vst [vmem:[%s396 + $0x88] sm:$0xff] %v431
                  %v433 = vld [vmem:[%s395 + $0x120] sm:$0xff]
                  %434 = vst [vmem:[%s396 + $0x90] sm:$0xff] %v433
                  %v435 = vld [vmem:[%s395 + $0x130] sm:$0xff]
                  %436 = vst [vmem:[%s396 + $0x98] sm:$0xff] %v435
                  %v437 = vld [vmem:[%s395 + $0x140] sm:$0xff]
                  %438 = vst [vmem:[%s396 + $0xa0] sm:$0xff] %v437
                  %v439 = vld [vmem:[%s395 + $0x150] sm:$0xff]
                  %440 = vst [vmem:[%s396 + $0xa8] sm:$0xff] %v439
                  %v441 = vld [vmem:[%s395 + $0x160] sm:$0xff]
                  %442 = vst [vmem:[%s396 + $0xb0] sm:$0xff] %v441
                  %v443 = vld [vmem:[%s395 + $0x170] sm:$0xff]
                  %444 = vst [vmem:[%s396 + $0xb8] sm:$0xff] %v443
                  %v445 = vld [vmem:[%s395 + $0x180] sm:$0xff]
                  %446 = vst [vmem:[%s396 + $0xc0] sm:$0xff] %v445
                  %v447 = vld [vmem:[%s395 + $0x190] sm:$0xff]
                  %448 = vst [vmem:[%s396 + $0xc8] sm:$0xff] %v447
                  %v449 = vld [vmem:[%s395 + $0x1a0] sm:$0xff]
                  %450 = vst [vmem:[%s396 + $0xd0] sm:$0xff] %v449
                  %v451 = vld [vmem:[%s395 + $0x1b0] sm:$0xff]
                  %452 = vst [vmem:[%s396 + $0xd8] sm:$0xff] %v451
                  %v453 = vld [vmem:[%s395 + $0x1c0] sm:$0xff]
                  %454 = vst [vmem:[%s396 + $0xe0] sm:$0xff] %v453
                  %v455 = vld [vmem:[%s395 + $0x1d0] sm:$0xff]
                  %456 = vst [vmem:[%s396 + $0xe8] sm:$0xff] %v455
                  %v457 = vld [vmem:[%s395 + $0x1e0] sm:$0xff]
                  %458 = vst [vmem:[%s396 + $0xf0] sm:$0xff] %v457
                  %v459 = vld [vmem:[%s395 + $0x1f0] sm:$0xff]
                  %460 = vst [vmem:[%s396 + $0xf8] sm:$0xff] %v459
                  %v461 = vld [vmem:[%s395 + $0x200] sm:$0xff]
                  %462 = vst [vmem:[%s396 + $0x100] sm:$0xff] %v461
                  %v463 = vld [vmem:[%s395 + $0x210] sm:$0xff]
                  %464 = vst [vmem:[%s396 + $0x108] sm:$0xff] %v463
                  %v465 = vld [vmem:[%s395 + $0x220] sm:$0xff]
                  %466 = vst [vmem:[%s396 + $0x110] sm:$0xff] %v465
                  %v467 = vld [vmem:[%s395 + $0x230] sm:$0xff]
                  %468 = vst [vmem:[%s396 + $0x118] sm:$0xff] %v467
                  %v469 = vld [vmem:[%s395 + $0x240] sm:$0xff]
                  %470 = vst [vmem:[%s396 + $0x120] sm:$0xff] %v469
                  %v471 = vld [vmem:[%s395 + $0x250] sm:$0xff]
                  %472 = vst [vmem:[%s396 + $0x128] sm:$0xff] %v471
                  %v473 = vld [vmem:[%s395 + $0x260] sm:$0xff]
                  %474 = vst [vmem:[%s396 + $0x130] sm:$0xff] %v473
                  %v475 = vld [vmem:[%s395 + $0x270] sm:$0xff]
                  %476 = vst [vmem:[%s396 + $0x138] sm:$0xff] %v475
                  %v477 = vld [vmem:[%s395 + $0x280] sm:$0xff]
                  %478 = vst [vmem:[%s396 + $0x140] sm:$0xff] %v477
                  %v479 = vld [vmem:[%s395 + $0x290] sm:$0xff]
                  %480 = vst [vmem:[%s396 + $0x148] sm:$0xff] %v479
                  %v481 = vld [vmem:[%s395 + $0x2a0] sm:$0xff]
                  %482 = vst [vmem:[%s396 + $0x150] sm:$0xff] %v481
                  %v483 = vld [vmem:[%s395 + $0x2b0] sm:$0xff]
                  %484 = vst [vmem:[%s396 + $0x158] sm:$0xff] %v483
                  %v485 = vld [vmem:[%s395 + $0x2c0] sm:$0xff]
                  %486 = vst [vmem:[%s396 + $0x160] sm:$0xff] %v485
                  %v487 = vld [vmem:[%s395 + $0x2d0] sm:$0xff]
                  %488 = vst [vmem:[%s396 + $0x168] sm:$0xff] %v487
                  %v489 = vld [vmem:[%s395 + $0x2e0] sm:$0xff]
                  %490 = vst [vmem:[%s396 + $0x170] sm:$0xff] %v489
                  %v491 = vld [vmem:[%s395 + $0x2f0] sm:$0xff]
                  %492 = vst [vmem:[%s396 + $0x178] sm:$0xff] %v491
                  %v493 = vld [vmem:[%s395 + $0x300] sm:$0xff]
                  %494 = vst [vmem:[%s396 + $0x180] sm:$0xff] %v493
                  %v495 = vld [vmem:[%s395 + $0x310] sm:$0xff]
                  %496 = vst [vmem:[%s396 + $0x188] sm:$0xff] %v495
                  %v497 = vld [vmem:[%s395 + $0x320] sm:$0xff]
                  %498 = vst [vmem:[%s396 + $0x190] sm:$0xff] %v497
                  %v499 = vld [vmem:[%s395 + $0x330] sm:$0xff]
                  %500 = vst [vmem:[%s396 + $0x198] sm:$0xff] %v499
                  %v501 = vld [vmem:[%s395 + $0x340] sm:$0xff]
                  %502 = vst [vmem:[%s396 + $0x1a0] sm:$0xff] %v501
                  %v503 = vld [vmem:[%s395 + $0x350] sm:$0xff]
                  %504 = vst [vmem:[%s396 + $0x1a8] sm:$0xff] %v503
                  %v505 = vld [vmem:[%s395 + $0x360] sm:$0xff]
                  %506 = vst [vmem:[%s396 + $0x1b0] sm:$0xff] %v505
                  %v507 = vld [vmem:[%s395 + $0x370] sm:$0xff]
                  %508 = vst [vmem:[%s396 + $0x1b8] sm:$0xff] %v507
                  %v509 = vld [vmem:[%s395 + $0x380] sm:$0xff]
                  %510 = vst [vmem:[%s396 + $0x1c0] sm:$0xff] %v509
                  %v511 = vld [vmem:[%s395 + $0x390] sm:$0xff]
                  %512 = vst [vmem:[%s396 + $0x1c8] sm:$0xff] %v511
                  %v513 = vld [vmem:[%s395 + $0x3a0] sm:$0xff]
                  %514 = vst [vmem:[%s396 + $0x1d0] sm:$0xff] %v513
                  %v515 = vld [vmem:[%s395 + $0x3b0] sm:$0xff]
                  %516 = vst [vmem:[%s396 + $0x1d8] sm:$0xff] %v515
                  %v517 = vld [vmem:[%s395 + $0x3c0] sm:$0xff]
                  %518 = vst [vmem:[%s396 + $0x1e0] sm:$0xff] %v517
                  %v519 = vld [vmem:[%s395 + $0x3d0] sm:$0xff]
                  %520 = vst [vmem:[%s396 + $0x1e8] sm:$0xff] %v519
                  %v521 = vld [vmem:[%s395 + $0x3e0] sm:$0xff]
                  %522 = vst [vmem:[%s396 + $0x1f0] sm:$0xff] %v521
                  %v523 = vld [vmem:[%s395 + $0x3f0] sm:$0xff]
                  %524 = vst [vmem:[%s396 + $0x1f8] sm:$0xff] %v523
                  %v525 = vld [vmem:[%s395 + $0x400] sm:$0xff]
                  %526 = vst [vmem:[%s396 + $0x200] sm:$0xff] %v525
                  %v527 = vld [vmem:[%s395 + $0x410] sm:$0xff]
                  %528 = vst [vmem:[%s396 + $0x208] sm:$0xff] %v527
                  %v529 = vld [vmem:[%s395 + $0x420] sm:$0xff]
                  %530 = vst [vmem:[%s396 + $0x210] sm:$0xff] %v529
                  %v531 = vld [vmem:[%s395 + $0x430] sm:$0xff]
                  %532 = vst [vmem:[%s396 + $0x218] sm:$0xff] %v531
                  %v533 = vld [vmem:[%s395 + $0x440] sm:$0xff]
                  %534 = vst [vmem:[%s396 + $0x220] sm:$0xff] %v533
                  %v535 = vld [vmem:[%s395 + $0x450] sm:$0xff]
                  %536 = vst [vmem:[%s396 + $0x228] sm:$0xff] %v535
                  %v537 = vld [vmem:[%s395 + $0x460] sm:$0xff]
                  %538 = vst [vmem:[%s396 + $0x230] sm:$0xff] %v537
                  %v539 = vld [vmem:[%s395 + $0x470] sm:$0xff]
                  %540 = vst [vmem:[%s396 + $0x238] sm:$0xff] %v539
                  %v541 = vld [vmem:[%s395 + $0x480] sm:$0xff]
                  %542 = vst [vmem:[%s396 + $0x240] sm:$0xff] %v541
                  %v543 = vld [vmem:[%s395 + $0x490] sm:$0xff]
                  %544 = vst [vmem:[%s396 + $0x248] sm:$0xff] %v543
                  %v545 = vld [vmem:[%s395 + $0x4a0] sm:$0xff]
                  %546 = vst [vmem:[%s396 + $0x250] sm:$0xff] %v545
                  %v547 = vld [vmem:[%s395 + $0x4b0] sm:$0xff]
                  %548 = vst [vmem:[%s396 + $0x258] sm:$0xff] %v547
                  %v549 = vld [vmem:[%s395 + $0x4c0] sm:$0xff]
                  %550 = vst [vmem:[%s396 + $0x260] sm:$0xff] %v549
                  %v551 = vld [vmem:[%s395 + $0x4d0] sm:$0xff]
                  %552 = vst [vmem:[%s396 + $0x268] sm:$0xff] %v551
                  %v553 = vld [vmem:[%s395 + $0x4e0] sm:$0xff]
                  %554 = vst [vmem:[%s396 + $0x270] sm:$0xff] %v553
                  %v555 = vld [vmem:[%s395 + $0x4f0] sm:$0xff]
                  %556 = vst [vmem:[%s396 + $0x278] sm:$0xff] %v555
                  %v557 = vld [vmem:[%s395 + $0x500] sm:$0xff]
                  %558 = vst [vmem:[%s396 + $0x280] sm:$0xff] %v557
                  %v559 = vld [vmem:[%s395 + $0x510] sm:$0xff]
                  %560 = vst [vmem:[%s396 + $0x288] sm:$0xff] %v559
                  %v561 = vld [vmem:[%s395 + $0x520] sm:$0xff]
                  %562 = vst [vmem:[%s396 + $0x290] sm:$0xff] %v561
                  %v563 = vld [vmem:[%s395 + $0x530] sm:$0xff]
                  %564 = vst [vmem:[%s396 + $0x298] sm:$0xff] %v563
                  %v565 = vld [vmem:[%s395 + $0x540] sm:$0xff]
                  %566 = vst [vmem:[%s396 + $0x2a0] sm:$0xff] %v565
                  %v567 = vld [vmem:[%s395 + $0x550] sm:$0xff]
                  %568 = vst [vmem:[%s396 + $0x2a8] sm:$0xff] %v567
                  %v569 = vld [vmem:[%s395 + $0x560] sm:$0xff]
                  %570 = vst [vmem:[%s396 + $0x2b0] sm:$0xff] %v569
                  %v571 = vld [vmem:[%s395 + $0x570] sm:$0xff]
                  %572 = vst [vmem:[%s396 + $0x2b8] sm:$0xff] %v571
                  %v573 = vld [vmem:[%s395 + $0x580] sm:$0xff]
                  %574 = vst [vmem:[%s396 + $0x2c0] sm:$0xff] %v573
                  %v575 = vld [vmem:[%s395 + $0x590] sm:$0xff]
                  %576 = vst [vmem:[%s396 + $0x2c8] sm:$0xff] %v575
                  %v577 = vld [vmem:[%s395 + $0x5a0] sm:$0xff]
                  %578 = vst [vmem:[%s396 + $0x2d0] sm:$0xff] %v577
                  %v579 = vld [vmem:[%s395 + $0x5b0] sm:$0xff]
                  %580 = vst [vmem:[%s396 + $0x2d8] sm:$0xff] %v579
                  %v581 = vld [vmem:[%s395 + $0x5c0] sm:$0xff]
                  %582 = vst [vmem:[%s396 + $0x2e0] sm:$0xff] %v581
                  %v583 = vld [vmem:[%s395 + $0x5d0] sm:$0xff]
                  %584 = vst [vmem:[%s396 + $0x2e8] sm:$0xff] %v583
                  %v585 = vld [vmem:[%s395 + $0x5e0] sm:$0xff]
                  %586 = vst [vmem:[%s396 + $0x2f0] sm:$0xff] %v585
                  %v587 = vld [vmem:[%s395 + $0x5f0] sm:$0xff]
                  %588 = vst [vmem:[%s396 + $0x2f8] sm:$0xff] %v587
                  %v589 = vld [vmem:[%s395 + $0x600] sm:$0xff]
                  %590 = vst [vmem:[%s396 + $0x300] sm:$0xff] %v589
                  %v591 = vld [vmem:[%s395 + $0x610] sm:$0xff]
                  %592 = vst [vmem:[%s396 + $0x308] sm:$0xff] %v591
                  %v593 = vld [vmem:[%s395 + $0x620] sm:$0xff]
                  %594 = vst [vmem:[%s396 + $0x310] sm:$0xff] %v593
                  %v595 = vld [vmem:[%s395 + $0x630] sm:$0xff]
                  %596 = vst [vmem:[%s396 + $0x318] sm:$0xff] %v595
                  %v597 = vld [vmem:[%s395 + $0x640] sm:$0xff]
                  %598 = vst [vmem:[%s396 + $0x320] sm:$0xff] %v597
                  %v599 = vld [vmem:[%s395 + $0x650] sm:$0xff]
                  %600 = vst [vmem:[%s396 + $0x328] sm:$0xff] %v599
                  %v601 = vld [vmem:[%s395 + $0x660] sm:$0xff]
                  %602 = vst [vmem:[%s396 + $0x330] sm:$0xff] %v601
                  %v603 = vld [vmem:[%s395 + $0x670] sm:$0xff]
                  %604 = vst [vmem:[%s396 + $0x338] sm:$0xff] %v603
                  %v605 = vld [vmem:[%s395 + $0x680] sm:$0xff]
                  %606 = vst [vmem:[%s396 + $0x340] sm:$0xff] %v605
                  %v607 = vld [vmem:[%s395 + $0x690] sm:$0xff]
                  %608 = vst [vmem:[%s396 + $0x348] sm:$0xff] %v607
                  %v609 = vld [vmem:[%s395 + $0x6a0] sm:$0xff]
                  %610 = vst [vmem:[%s396 + $0x350] sm:$0xff] %v609
                  %v611 = vld [vmem:[%s395 + $0x6b0] sm:$0xff]
                  %612 = vst [vmem:[%s396 + $0x358] sm:$0xff] %v611
                  %v613 = vld [vmem:[%s395 + $0x6c0] sm:$0xff]
                  %614 = vst [vmem:[%s396 + $0x360] sm:$0xff] %v613
                  %v615 = vld [vmem:[%s395 + $0x6d0] sm:$0xff]
                  %616 = vst [vmem:[%s396 + $0x368] sm:$0xff] %v615
                  %v617 = vld [vmem:[%s395 + $0x6e0] sm:$0xff]
                  %618 = vst [vmem:[%s396 + $0x370] sm:$0xff] %v617
                  %v619 = vld [vmem:[%s395 + $0x6f0] sm:$0xff]
                  %620 = vst [vmem:[%s396 + $0x378] sm:$0xff] %v619
                $region56: #{tpu_custom_call.1} parent=50 // loop_footer
                  %s394 = sadd.s32 1, %s390
                $region57: #{tpu_custom_call.1} parent=50 // loop_footer_branch
                  %389 = sbr.rel target = $region53
                $region58: #{tpu_custom_call.1} parent=50 // loop_exit
                  _
              $region51: #{tpu_custom_call.1} parent=35 // pred_fallthru
                _
              // Predicated region
              $region59: #{tpu_custom_call.1} parent=35 // pred_check
                _
              $region60: #{tpu_custom_call.1} parent=35 // pred_check_branch
                %622 = sbr.rel target = $region62
              $region61: #{tpu_custom_call.1} parent=35 // pred_region
                _
              $region62: #{tpu_custom_call.1} parent=35 // pred_fallthru
                _
            $region36: #{tpu_custom_call.1} parent=31 // pred_fallthru
              _
            // Predicated region
            $region37: #{tpu_custom_call.1} parent=31 // pred_check
              _
            $region38: #{tpu_custom_call.1} parent=31 // pred_check_branch
              %152 = sbr.rel target = $region40
            $region39: #{tpu_custom_call.1} parent=31 // pred_region
              %s154 = ssub.s32 256, 1
              loop: start=0, step=1, limit=1
              $region41: #{tpu_custom_call.1} parent=39 // loop_pre_header
                _
              $region42: #{tpu_custom_call.1} parent=39 // loop_header
                %s156 = sphi 0, %s160
                %p157 = scmp.ge.s32.totalorder %s156, 1
                %s161 = sphi %s146, %s146
                %s162 = sphi %s144, %s144
              $region43: #{tpu_custom_call.1} parent=39 // loop_header_branch
                %159 = sbr.rel (%p157) target = $region47
              $region44: #{tpu_custom_call.1} parent=39 // loop_body
                %v163 = vld [vmem:[%s161] sm:%s154]
                %164 = vst [vmem:[%s162] sm:%s154] %v163
                %v165 = vld [vmem:[%s161 + $0x10] sm:%s154]
                %166 = vst [vmem:[%s162 + $0x8] sm:%s154] %v165
                %v167 = vld [vmem:[%s161 + $0x20] sm:%s154]
                %168 = vst [vmem:[%s162 + $0x10] sm:%s154] %v167
                %v169 = vld [vmem:[%s161 + $0x30] sm:%s154]
                %170 = vst [vmem:[%s162 + $0x18] sm:%s154] %v169
                %v171 = vld [vmem:[%s161 + $0x40] sm:%s154]
                %172 = vst [vmem:[%s162 + $0x20] sm:%s154] %v171
                %v173 = vld [vmem:[%s161 + $0x50] sm:%s154]
                %174 = vst [vmem:[%s162 + $0x28] sm:%s154] %v173
                %v175 = vld [vmem:[%s161 + $0x60] sm:%s154]
                %176 = vst [vmem:[%s162 + $0x30] sm:%s154] %v175
                %v177 = vld [vmem:[%s161 + $0x70] sm:%s154]
                %178 = vst [vmem:[%s162 + $0x38] sm:%s154] %v177
                %v179 = vld [vmem:[%s161 + $0x80] sm:%s154]
                %180 = vst [vmem:[%s162 + $0x40] sm:%s154] %v179
                %v181 = vld [vmem:[%s161 + $0x90] sm:%s154]
                %182 = vst [vmem:[%s162 + $0x48] sm:%s154] %v181
                %v183 = vld [vmem:[%s161 + $0xa0] sm:%s154]
                %184 = vst [vmem:[%s162 + $0x50] sm:%s154] %v183
                %v185 = vld [vmem:[%s161 + $0xb0] sm:%s154]
                %186 = vst [vmem:[%s162 + $0x58] sm:%s154] %v185
                %v187 = vld [vmem:[%s161 + $0xc0] sm:%s154]
                %188 = vst [vmem:[%s162 + $0x60] sm:%s154] %v187
                %v189 = vld [vmem:[%s161 + $0xd0] sm:%s154]
                %190 = vst [vmem:[%s162 + $0x68] sm:%s154] %v189
                %v191 = vld [vmem:[%s161 + $0xe0] sm:%s154]
                %192 = vst [vmem:[%s162 + $0x70] sm:%s154] %v191
                %v193 = vld [vmem:[%s161 + $0xf0] sm:%s154]
                %194 = vst [vmem:[%s162 + $0x78] sm:%s154] %v193
                %v195 = vld [vmem:[%s161 + $0x100] sm:%s154]
                %196 = vst [vmem:[%s162 + $0x80] sm:%s154] %v195
                %v197 = vld [vmem:[%s161 + $0x110] sm:%s154]
                %198 = vst [vmem:[%s162 + $0x88] sm:%s154] %v197
                %v199 = vld [vmem:[%s161 + $0x120] sm:%s154]
                %200 = vst [vmem:[%s162 + $0x90] sm:%s154] %v199
                %v201 = vld [vmem:[%s161 + $0x130] sm:%s154]
                %202 = vst [vmem:[%s162 + $0x98] sm:%s154] %v201
                %v203 = vld [vmem:[%s161 + $0x140] sm:%s154]
                %204 = vst [vmem:[%s162 + $0xa0] sm:%s154] %v203
                %v205 = vld [vmem:[%s161 + $0x150] sm:%s154]
                %206 = vst [vmem:[%s162 + $0xa8] sm:%s154] %v205
                %v207 = vld [vmem:[%s161 + $0x160] sm:%s154]
                %208 = vst [vmem:[%s162 + $0xb0] sm:%s154] %v207
                %v209 = vld [vmem:[%s161 + $0x170] sm:%s154]
                %210 = vst [vmem:[%s162 + $0xb8] sm:%s154] %v209
                %v211 = vld [vmem:[%s161 + $0x180] sm:%s154]
                %212 = vst [vmem:[%s162 + $0xc0] sm:%s154] %v211
                %v213 = vld [vmem:[%s161 + $0x190] sm:%s154]
                %214 = vst [vmem:[%s162 + $0xc8] sm:%s154] %v213
                %v215 = vld [vmem:[%s161 + $0x1a0] sm:%s154]
                %216 = vst [vmem:[%s162 + $0xd0] sm:%s154] %v215
                %v217 = vld [vmem:[%s161 + $0x1b0] sm:%s154]
                %218 = vst [vmem:[%s162 + $0xd8] sm:%s154] %v217
                %v219 = vld [vmem:[%s161 + $0x1c0] sm:%s154]
                %220 = vst [vmem:[%s162 + $0xe0] sm:%s154] %v219
                %v221 = vld [vmem:[%s161 + $0x1d0] sm:%s154]
                %222 = vst [vmem:[%s162 + $0xe8] sm:%s154] %v221
                %v223 = vld [vmem:[%s161 + $0x1e0] sm:%s154]
                %224 = vst [vmem:[%s162 + $0xf0] sm:%s154] %v223
                %v225 = vld [vmem:[%s161 + $0x1f0] sm:%s154]
                %226 = vst [vmem:[%s162 + $0xf8] sm:%s154] %v225
                %v227 = vld [vmem:[%s161 + $0x200] sm:%s154]
                %228 = vst [vmem:[%s162 + $0x100] sm:%s154] %v227
                %v229 = vld [vmem:[%s161 + $0x210] sm:%s154]
                %230 = vst [vmem:[%s162 + $0x108] sm:%s154] %v229
                %v231 = vld [vmem:[%s161 + $0x220] sm:%s154]
                %232 = vst [vmem:[%s162 + $0x110] sm:%s154] %v231
                %v233 = vld [vmem:[%s161 + $0x230] sm:%s154]
                %234 = vst [vmem:[%s162 + $0x118] sm:%s154] %v233
                %v235 = vld [vmem:[%s161 + $0x240] sm:%s154]
                %236 = vst [vmem:[%s162 + $0x120] sm:%s154] %v235
                %v237 = vld [vmem:[%s161 + $0x250] sm:%s154]
                %238 = vst [vmem:[%s162 + $0x128] sm:%s154] %v237
                %v239 = vld [vmem:[%s161 + $0x260] sm:%s154]
                %240 = vst [vmem:[%s162 + $0x130] sm:%s154] %v239
                %v241 = vld [vmem:[%s161 + $0x270] sm:%s154]
                %242 = vst [vmem:[%s162 + $0x138] sm:%s154] %v241
                %v243 = vld [vmem:[%s161 + $0x280] sm:%s154]
                %244 = vst [vmem:[%s162 + $0x140] sm:%s154] %v243
                %v245 = vld [vmem:[%s161 + $0x290] sm:%s154]
                %246 = vst [vmem:[%s162 + $0x148] sm:%s154] %v245
                %v247 = vld [vmem:[%s161 + $0x2a0] sm:%s154]
                %248 = vst [vmem:[%s162 + $0x150] sm:%s154] %v247
                %v249 = vld [vmem:[%s161 + $0x2b0] sm:%s154]
                %250 = vst [vmem:[%s162 + $0x158] sm:%s154] %v249
                %v251 = vld [vmem:[%s161 + $0x2c0] sm:%s154]
                %252 = vst [vmem:[%s162 + $0x160] sm:%s154] %v251
                %v253 = vld [vmem:[%s161 + $0x2d0] sm:%s154]
                %254 = vst [vmem:[%s162 + $0x168] sm:%s154] %v253
                %v255 = vld [vmem:[%s161 + $0x2e0] sm:%s154]
                %256 = vst [vmem:[%s162 + $0x170] sm:%s154] %v255
                %v257 = vld [vmem:[%s161 + $0x2f0] sm:%s154]
                %258 = vst [vmem:[%s162 + $0x178] sm:%s154] %v257
                %v259 = vld [vmem:[%s161 + $0x300] sm:%s154]
                %260 = vst [vmem:[%s162 + $0x180] sm:%s154] %v259
                %v261 = vld [vmem:[%s161 + $0x310] sm:%s154]
                %262 = vst [vmem:[%s162 + $0x188] sm:%s154] %v261
                %v263 = vld [vmem:[%s161 + $0x320] sm:%s154]
                %264 = vst [vmem:[%s162 + $0x190] sm:%s154] %v263
                %v265 = vld [vmem:[%s161 + $0x330] sm:%s154]
                %266 = vst [vmem:[%s162 + $0x198] sm:%s154] %v265
                %v267 = vld [vmem:[%s161 + $0x340] sm:%s154]
                %268 = vst [vmem:[%s162 + $0x1a0] sm:%s154] %v267
                %v269 = vld [vmem:[%s161 + $0x350] sm:%s154]
                %270 = vst [vmem:[%s162 + $0x1a8] sm:%s154] %v269
                %v271 = vld [vmem:[%s161 + $0x360] sm:%s154]
                %272 = vst [vmem:[%s162 + $0x1b0] sm:%s154] %v271
                %v273 = vld [vmem:[%s161 + $0x370] sm:%s154]
                %274 = vst [vmem:[%s162 + $0x1b8] sm:%s154] %v273
                %v275 = vld [vmem:[%s161 + $0x380] sm:%s154]
                %276 = vst [vmem:[%s162 + $0x1c0] sm:%s154] %v275
                %v277 = vld [vmem:[%s161 + $0x390] sm:%s154]
                %278 = vst [vmem:[%s162 + $0x1c8] sm:%s154] %v277
                %v279 = vld [vmem:[%s161 + $0x3a0] sm:%s154]
                %280 = vst [vmem:[%s162 + $0x1d0] sm:%s154] %v279
                %v281 = vld [vmem:[%s161 + $0x3b0] sm:%s154]
                %282 = vst [vmem:[%s162 + $0x1d8] sm:%s154] %v281
                %v283 = vld [vmem:[%s161 + $0x3c0] sm:%s154]
                %284 = vst [vmem:[%s162 + $0x1e0] sm:%s154] %v283
                %v285 = vld [vmem:[%s161 + $0x3d0] sm:%s154]
                %286 = vst [vmem:[%s162 + $0x1e8] sm:%s154] %v285
                %v287 = vld [vmem:[%s161 + $0x3e0] sm:%s154]
                %288 = vst [vmem:[%s162 + $0x1f0] sm:%s154] %v287
                %v289 = vld [vmem:[%s161 + $0x3f0] sm:%s154]
                %290 = vst [vmem:[%s162 + $0x1f8] sm:%s154] %v289
                %v291 = vld [vmem:[%s161 + $0x400] sm:%s154]
                %292 = vst [vmem:[%s162 + $0x200] sm:%s154] %v291
                %v293 = vld [vmem:[%s161 + $0x410] sm:%s154]
                %294 = vst [vmem:[%s162 + $0x208] sm:%s154] %v293
                %v295 = vld [vmem:[%s161 + $0x420] sm:%s154]
                %296 = vst [vmem:[%s162 + $0x210] sm:%s154] %v295
                %v297 = vld [vmem:[%s161 + $0x430] sm:%s154]
                %298 = vst [vmem:[%s162 + $0x218] sm:%s154] %v297
                %v299 = vld [vmem:[%s161 + $0x440] sm:%s154]
                %300 = vst [vmem:[%s162 + $0x220] sm:%s154] %v299
                %v301 = vld [vmem:[%s161 + $0x450] sm:%s154]
                %302 = vst [vmem:[%s162 + $0x228] sm:%s154] %v301
                %v303 = vld [vmem:[%s161 + $0x460] sm:%s154]
                %304 = vst [vmem:[%s162 + $0x230] sm:%s154] %v303
                %v305 = vld [vmem:[%s161 + $0x470] sm:%s154]
                %306 = vst [vmem:[%s162 + $0x238] sm:%s154] %v305
                %v307 = vld [vmem:[%s161 + $0x480] sm:%s154]
                %308 = vst [vmem:[%s162 + $0x240] sm:%s154] %v307
                %v309 = vld [vmem:[%s161 + $0x490] sm:%s154]
                %310 = vst [vmem:[%s162 + $0x248] sm:%s154] %v309
                %v311 = vld [vmem:[%s161 + $0x4a0] sm:%s154]
                %312 = vst [vmem:[%s162 + $0x250] sm:%s154] %v311
                %v313 = vld [vmem:[%s161 + $0x4b0] sm:%s154]
                %314 = vst [vmem:[%s162 + $0x258] sm:%s154] %v313
                %v315 = vld [vmem:[%s161 + $0x4c0] sm:%s154]
                %316 = vst [vmem:[%s162 + $0x260] sm:%s154] %v315
                %v317 = vld [vmem:[%s161 + $0x4d0] sm:%s154]
                %318 = vst [vmem:[%s162 + $0x268] sm:%s154] %v317
                %v319 = vld [vmem:[%s161 + $0x4e0] sm:%s154]
                %320 = vst [vmem:[%s162 + $0x270] sm:%s154] %v319
                %v321 = vld [vmem:[%s161 + $0x4f0] sm:%s154]
                %322 = vst [vmem:[%s162 + $0x278] sm:%s154] %v321
                %v323 = vld [vmem:[%s161 + $0x500] sm:%s154]
                %324 = vst [vmem:[%s162 + $0x280] sm:%s154] %v323
                %v325 = vld [vmem:[%s161 + $0x510] sm:%s154]
                %326 = vst [vmem:[%s162 + $0x288] sm:%s154] %v325
                %v327 = vld [vmem:[%s161 + $0x520] sm:%s154]
                %328 = vst [vmem:[%s162 + $0x290] sm:%s154] %v327
                %v329 = vld [vmem:[%s161 + $0x530] sm:%s154]
                %330 = vst [vmem:[%s162 + $0x298] sm:%s154] %v329
                %v331 = vld [vmem:[%s161 + $0x540] sm:%s154]
                %332 = vst [vmem:[%s162 + $0x2a0] sm:%s154] %v331
                %v333 = vld [vmem:[%s161 + $0x550] sm:%s154]
                %334 = vst [vmem:[%s162 + $0x2a8] sm:%s154] %v333
                %v335 = vld [vmem:[%s161 + $0x560] sm:%s154]
                %336 = vst [vmem:[%s162 + $0x2b0] sm:%s154] %v335
                %v337 = vld [vmem:[%s161 + $0x570] sm:%s154]
                %338 = vst [vmem:[%s162 + $0x2b8] sm:%s154] %v337
                %v339 = vld [vmem:[%s161 + $0x580] sm:%s154]
                %340 = vst [vmem:[%s162 + $0x2c0] sm:%s154] %v339
                %v341 = vld [vmem:[%s161 + $0x590] sm:%s154]
                %342 = vst [vmem:[%s162 + $0x2c8] sm:%s154] %v341
                %v343 = vld [vmem:[%s161 + $0x5a0] sm:%s154]
                %344 = vst [vmem:[%s162 + $0x2d0] sm:%s154] %v343
                %v345 = vld [vmem:[%s161 + $0x5b0] sm:%s154]
                %346 = vst [vmem:[%s162 + $0x2d8] sm:%s154] %v345
                %v347 = vld [vmem:[%s161 + $0x5c0] sm:%s154]
                %348 = vst [vmem:[%s162 + $0x2e0] sm:%s154] %v347
                %v349 = vld [vmem:[%s161 + $0x5d0] sm:%s154]
                %350 = vst [vmem:[%s162 + $0x2e8] sm:%s154] %v349
                %v351 = vld [vmem:[%s161 + $0x5e0] sm:%s154]
                %352 = vst [vmem:[%s162 + $0x2f0] sm:%s154] %v351
                %v353 = vld [vmem:[%s161 + $0x5f0] sm:%s154]
                %354 = vst [vmem:[%s162 + $0x2f8] sm:%s154] %v353
                %v355 = vld [vmem:[%s161 + $0x600] sm:%s154]
                %356 = vst [vmem:[%s162 + $0x300] sm:%s154] %v355
                %v357 = vld [vmem:[%s161 + $0x610] sm:%s154]
                %358 = vst [vmem:[%s162 + $0x308] sm:%s154] %v357
                %v359 = vld [vmem:[%s161 + $0x620] sm:%s154]
                %360 = vst [vmem:[%s162 + $0x310] sm:%s154] %v359
                %v361 = vld [vmem:[%s161 + $0x630] sm:%s154]
                %362 = vst [vmem:[%s162 + $0x318] sm:%s154] %v361
                %v363 = vld [vmem:[%s161 + $0x640] sm:%s154]
                %364 = vst [vmem:[%s162 + $0x320] sm:%s154] %v363
                %v365 = vld [vmem:[%s161 + $0x650] sm:%s154]
                %366 = vst [vmem:[%s162 + $0x328] sm:%s154] %v365
                %v367 = vld [vmem:[%s161 + $0x660] sm:%s154]
                %368 = vst [vmem:[%s162 + $0x330] sm:%s154] %v367
                %v369 = vld [vmem:[%s161 + $0x670] sm:%s154]
                %370 = vst [vmem:[%s162 + $0x338] sm:%s154] %v369
                %v371 = vld [vmem:[%s161 + $0x680] sm:%s154]
                %372 = vst [vmem:[%s162 + $0x340] sm:%s154] %v371
                %v373 = vld [vmem:[%s161 + $0x690] sm:%s154]
                %374 = vst [vmem:[%s162 + $0x348] sm:%s154] %v373
                %v375 = vld [vmem:[%s161 + $0x6a0] sm:%s154]
                %376 = vst [vmem:[%s162 + $0x350] sm:%s154] %v375
                %v377 = vld [vmem:[%s161 + $0x6b0] sm:%s154]
                %378 = vst [vmem:[%s162 + $0x358] sm:%s154] %v377
                %v379 = vld [vmem:[%s161 + $0x6c0] sm:%s154]
                %380 = vst [vmem:[%s162 + $0x360] sm:%s154] %v379
                %v381 = vld [vmem:[%s161 + $0x6d0] sm:%s154]
                %382 = vst [vmem:[%s162 + $0x368] sm:%s154] %v381
                %v383 = vld [vmem:[%s161 + $0x6e0] sm:%s154]
                %384 = vst [vmem:[%s162 + $0x370] sm:%s154] %v383
                %v385 = vld [vmem:[%s161 + $0x6f0] sm:%s154]
                %386 = vst [vmem:[%s162 + $0x378] sm:%s154] %v385
              $region45: #{tpu_custom_call.1} parent=39 // loop_footer
                %s160 = sadd.s32 1, %s156
              $region46: #{tpu_custom_call.1} parent=39 // loop_footer_branch
                %155 = sbr.rel target = $region42
              $region47: #{tpu_custom_call.1} parent=39 // loop_exit
                _
            $region40: #{tpu_custom_call.1} parent=31 // pred_fallthru
              _
          $region32: #{tpu_custom_call.1} parent=27 // pred_fallthru
            _
          %623 = vnop
        $region28: #{tpu_custom_call.1} parent=23 // pred_fallthru
          _
      $region24: #{tpu_custom_call.1} parent=5 // pred_fallthru
        _
      %p624 = scmp.le.s32.totalorder 1, %s11
      %p625 = scmp.lt.s32.totalorder %s11, 3
      %p626 = pnand %p624, %p625
      %p627 = pneg %p626
      // Predicated region
      $region63: #{tpu_custom_call.1} parent=5 // pred_check
        _
      $region64: #{tpu_custom_call.1} parent=5 // pred_check_branch
        %629 = sbr.rel (%p626) target = $region66
      $region65: #{tpu_custom_call.1} parent=5 // pred_region
        %s630 = ssub.s32 %s11, 1
        %s631 = sand.u32 %s24, 1
        %s632 = sand.u32 %s24, 1
        %s633 = smul.addr %s632, 896
        %s634 = scalar_lea.vmem [#allocation3], %s633
        // Predicated region
        $region67: #{tpu_custom_call.1} parent=65 // pred_check
          %p635 = pneg %p37
        $region68: #{tpu_custom_call.1} parent=65 // pred_check_branch
          %637 = sbr.rel (%p635) target = $region70
        $region69: #{tpu_custom_call.1} parent=65 // pred_region
          _
        $region70: #{tpu_custom_call.1} parent=65 // pred_fallthru
          _
        // Predicated region
        $region71: #{tpu_custom_call.1} parent=65 // pred_check
          %p638 = pneg %p58
        $region72: #{tpu_custom_call.1} parent=65 // pred_check_branch
          %640 = sbr.rel (%p638) target = $region74
        $region73: #{tpu_custom_call.1} parent=65 // pred_region
          %641 = dma.done [#allocation5], 16
        $region74: #{tpu_custom_call.1} parent=65 // pred_fallthru
          _
        %642 = sfence
        %s643 = sand.u32 %s24, 1
        %s644 = sand.u32 %s24, 1
        %s645 = smul.addr %s644, 896
        %s646 = scalar_lea.vmem [#allocation3], %s645
        %p647 = pneg %p37
        %p648 = pneg %p34
        %p649 = pneg %p58
        %p650 = pneg %p55
        %p651 = pneg %p79
        %p652 = pneg %p76
        %p653 = pneg %p105
        %p654 = pneg %p102
        %s655 = sand.u32 %s92, 1
        %s656 = sand.u32 %s92, 1
        %s657 = smul.addr %s656, 80
        %s658 = scalar_lea.vmem [#allocation6], %s657
        %s659 = sld [smem:[#allocation2]]
        %v660 = vstv %s659
        %v661 = vld [vmem:[%s634] sm:$0x7f]
        %v662 = vld [vmem:[%s634 + $0x8] sm:$0x7f]
        %v663 = vld [vmem:[%s634 + $0x10] sm:$0x7f]
        %v664 = vld [vmem:[%s634 + $0x18] sm:$0x7f]
        %v665 = vld [vmem:[%s634 + $0x20] sm:$0x7f]
        %v666 = vld [vmem:[%s634 + $0x28] sm:$0x7f]
        %v667 = vld [vmem:[%s634 + $0x30] sm:$0x7f]
        %s668 = sld [smem:[#allocation4 + $0x8]]
        %v669 = vstv %s668
        %v670 = vmul.f32 %v661, %v669
        %v671 = vmul.f32 %v662, %v669
        %v672 = vmul.f32 %v663, %v669
        %v673 = vmul.f32 %v664, %v669
        %v674 = vmul.f32 %v665, %v669
        %v675 = vadd.f32 %v660, %v670
        %v676 = vadd.f32 %v660, %v671
        %v677 = vadd.f32 %v660, %v672
        %v678 = vadd.f32 %v660, %v673
        %v679 = vadd.f32 %v660, %v674
        %s680 = sld [smem:[#allocation4 + $0x7]]
        %v681 = vstv %s680
        %v682 = vmul.f32 %v661, %v681
        %v683 = vmul.f32 %v662, %v681
        %v684 = vmul.f32 %v663, %v681
        %v685 = vmul.f32 %v664, %v681
        %v686 = vmul.f32 %v665, %v681
        %v692 = vrot.slane %v682, 1
        %v693 = vrot.slane %v683, 1
        %v694 = vrot.slane %v684, 1
        %v695 = vrot.slane %v685, 1
        %v696 = vrot.slane %v686, 1
        %v702 = vadd.f32 %v675, %v692
        %v703 = vadd.f32 %v676, %v693
        %v704 = vadd.f32 %v677, %v694
        %v705 = vadd.f32 %v678, %v695
        %v706 = vadd.f32 %v679, %v696
        %s707 = sld [smem:[#allocation4 + $0x6]]
        %v708 = vstv %s707
        %v709 = vmul.f32 %v661, %v708
        %v710 = vmul.f32 %v662, %v708
        %v711 = vmul.f32 %v663, %v708
        %v712 = vmul.f32 %v664, %v708
        %v713 = vmul.f32 %v665, %v708
        %v719 = vrot.slane %v709, 2
        %v720 = vrot.slane %v710, 2
        %v721 = vrot.slane %v711, 2
        %v722 = vrot.slane %v712, 2
        %v723 = vrot.slane %v713, 2
        %v729 = vadd.f32 %v702, %v719
        %v730 = vadd.f32 %v703, %v720
        %v731 = vadd.f32 %v704, %v721
        %v732 = vadd.f32 %v705, %v722
        %v733 = vadd.f32 %v706, %v723
        %s734 = sld [smem:[#allocation4 + $0x5]]
        %v735 = vstv %s734
        %v736 = vmul.f32 %v662, %v735
        %v737 = vmul.f32 %v663, %v735
        %v738 = vmul.f32 %v664, %v735
        %v739 = vmul.f32 %v665, %v735
        %v740 = vmul.f32 %v666, %v735
        %v741 = vadd.f32 %v729, %v736
        %v742 = vadd.f32 %v730, %v737
        %v743 = vadd.f32 %v731, %v738
        %v744 = vadd.f32 %v732, %v739
        %v745 = vadd.f32 %v733, %v740
        %s746 = sld [smem:[#allocation4 + $0x4]]
        %v747 = vstv %s746
        %v748 = vmul.f32 %v662, %v747
        %v749 = vmul.f32 %v663, %v747
        %v750 = vmul.f32 %v664, %v747
        %v751 = vmul.f32 %v665, %v747
        %v752 = vmul.f32 %v666, %v747
        %v758 = vrot.slane %v748, 1
        %v759 = vrot.slane %v749, 1
        %v760 = vrot.slane %v750, 1
        %v761 = vrot.slane %v751, 1
        %v762 = vrot.slane %v752, 1
        %v768 = vadd.f32 %v741, %v758
        %v769 = vadd.f32 %v742, %v759
        %v770 = vadd.f32 %v743, %v760
        %v771 = vadd.f32 %v744, %v761
        %v772 = vadd.f32 %v745, %v762
        %s773 = sld [smem:[#allocation4 + $0x3]]
        %v774 = vstv %s773
        %v775 = vmul.f32 %v662, %v774
        %v776 = vmul.f32 %v663, %v774
        %v777 = vmul.f32 %v664, %v774
        %v778 = vmul.f32 %v665, %v774
        %v779 = vmul.f32 %v666, %v774
        %v785 = vrot.slane %v775, 2
        %v786 = vrot.slane %v776, 2
        %v787 = vrot.slane %v777, 2
        %v788 = vrot.slane %v778, 2
        %v789 = vrot.slane %v779, 2
        %v795 = vadd.f32 %v768, %v785
        %v796 = vadd.f32 %v769, %v786
        %v797 = vadd.f32 %v770, %v787
        %v798 = vadd.f32 %v771, %v788
        %v799 = vadd.f32 %v772, %v789
        %s800 = sld [smem:[#allocation4 + $0x2]]
        %v801 = vstv %s800
        %v802 = vmul.f32 %v663, %v801
        %v803 = vmul.f32 %v664, %v801
        %v804 = vmul.f32 %v665, %v801
        %v805 = vmul.f32 %v666, %v801
        %v806 = vmul.f32 %v667, %v801
        %v807 = vadd.f32 %v795, %v802
        %v808 = vadd.f32 %v796, %v803
        %v809 = vadd.f32 %v797, %v804
        %v810 = vadd.f32 %v798, %v805
        %v811 = vadd.f32 %v799, %v806
        %s812 = sld [smem:[#allocation4 + $0x1]]
        %v813 = vstv %s812
        %v814 = vmul.f32 %v663, %v813
        %v815 = vmul.f32 %v664, %v813
        %v816 = vmul.f32 %v665, %v813
        %v817 = vmul.f32 %v666, %v813
        %v818 = vmul.f32 %v667, %v813
        %v824 = vrot.slane %v814, 1
        %v825 = vrot.slane %v815, 1
        %v826 = vrot.slane %v816, 1
        %v827 = vrot.slane %v817, 1
        %v828 = vrot.slane %v818, 1
        %v834 = vadd.f32 %v807, %v824
        %v835 = vadd.f32 %v808, %v825
        %v836 = vadd.f32 %v809, %v826
        %v837 = vadd.f32 %v810, %v827
        %v838 = vadd.f32 %v811, %v828
        %s839 = sld [smem:[#allocation4]]
        %v840 = vstv %s839
        %v841 = vmul.f32 %v663, %v840
        %v842 = vmul.f32 %v664, %v840
        %v843 = vmul.f32 %v665, %v840
        %v844 = vmul.f32 %v666, %v840
        %v845 = vmul.f32 %v667, %v840
        %v851 = vrot.slane %v841, 2
        %v852 = vrot.slane %v842, 2
        %v853 = vrot.slane %v843, 2
        %v854 = vrot.slane %v844, 2
        %v855 = vrot.slane %v845, 2
        %v861 = vadd.f32 %v834, %v851
        %v862 = vadd.f32 %v835, %v852
        %v863 = vadd.f32 %v836, %v853
        %v864 = vadd.f32 %v837, %v854
        %v865 = vadd.f32 %v838, %v855
        %s866 = scalar_lea.vmem %s634, 56 [#allocation3]
        %v867 = vld [vmem:[%s866] sm:$0x7f]
        %v868 = vld [vmem:[%s866 + $0x8] sm:$0x7f]
        %v869 = vld [vmem:[%s866 + $0x10] sm:$0x7f]
        %v870 = vld [vmem:[%s866 + $0x18] sm:$0x7f]
        %v871 = vld [vmem:[%s866 + $0x20] sm:$0x7f]
        %v872 = vld [vmem:[%s866 + $0x28] sm:$0x7f]
        %v873 = vld [vmem:[%s866 + $0x30] sm:$0x7f]
        %s874 = sld [smem:[#allocation4 + $0x11]]
        %v875 = vstv %s874
        %v876 = vmul.f32 %v867, %v875
        %v877 = vmul.f32 %v868, %v875
        %v878 = vmul.f32 %v869, %v875
        %v879 = vmul.f32 %v870, %v875
        %v880 = vmul.f32 %v871, %v875
        %v881 = vadd.f32 %v861, %v876
        %v882 = vadd.f32 %v862, %v877
        %v883 = vadd.f32 %v863, %v878
        %v884 = vadd.f32 %v864, %v879
        %v885 = vadd.f32 %v865, %v880
        %s886 = sld [smem:[#allocation4 + $0x10]]
        %v887 = vstv %s886
        %v888 = vmul.f32 %v867, %v887
        %v889 = vmul.f32 %v868, %v887
        %v890 = vmul.f32 %v869, %v887
        %v891 = vmul.f32 %v870, %v887
        %v892 = vmul.f32 %v871, %v887
        %v898 = vrot.slane %v888, 1
        %v899 = vrot.slane %v889, 1
        %v900 = vrot.slane %v890, 1
        %v901 = vrot.slane %v891, 1
        %v902 = vrot.slane %v892, 1
        %v908 = vadd.f32 %v881, %v898
        %v909 = vadd.f32 %v882, %v899
        %v910 = vadd.f32 %v883, %v900
        %v911 = vadd.f32 %v884, %v901
        %v912 = vadd.f32 %v885, %v902
        %s913 = sld [smem:[#allocation4 + $0xf]]
        %v914 = vstv %s913
        %v915 = vmul.f32 %v867, %v914
        %v916 = vmul.f32 %v868, %v914
        %v917 = vmul.f32 %v869, %v914
        %v918 = vmul.f32 %v870, %v914
        %v919 = vmul.f32 %v871, %v914
        %v925 = vrot.slane %v915, 2
        %v926 = vrot.slane %v916, 2
        %v927 = vrot.slane %v917, 2
        %v928 = vrot.slane %v918, 2
        %v929 = vrot.slane %v919, 2
        %v935 = vadd.f32 %v908, %v925
        %v936 = vadd.f32 %v909, %v926
        %v937 = vadd.f32 %v910, %v927
        %v938 = vadd.f32 %v911, %v928
        %v939 = vadd.f32 %v912, %v929
        %s940 = sld [smem:[#allocation4 + $0xe]]
        %v941 = vstv %s940
        %v942 = vmul.f32 %v868, %v941
        %v943 = vmul.f32 %v869, %v941
        %v944 = vmul.f32 %v870, %v941
        %v945 = vmul.f32 %v871, %v941
        %v946 = vmul.f32 %v872, %v941
        %v947 = vadd.f32 %v935, %v942
        %v948 = vadd.f32 %v936, %v943
        %v949 = vadd.f32 %v937, %v944
        %v950 = vadd.f32 %v938, %v945
        %v951 = vadd.f32 %v939, %v946
        %s952 = sld [smem:[#allocation4 + $0xd]]
        %v953 = vstv %s952
        %v954 = vmul.f32 %v868, %v953
        %v955 = vmul.f32 %v869, %v953
        %v956 = vmul.f32 %v870, %v953
        %v957 = vmul.f32 %v871, %v953
        %v958 = vmul.f32 %v872, %v953
        %v964 = vrot.slane %v954, 1
        %v965 = vrot.slane %v955, 1
        %v966 = vrot.slane %v956, 1
        %v967 = vrot.slane %v957, 1
        %v968 = vrot.slane %v958, 1
        %v974 = vadd.f32 %v947, %v964
        %v975 = vadd.f32 %v948, %v965
        %v976 = vadd.f32 %v949, %v966
        %v977 = vadd.f32 %v950, %v967
        %v978 = vadd.f32 %v951, %v968
        %s979 = sld [smem:[#allocation4 + $0xc]]
        %v980 = vstv %s979
        %v981 = vmul.f32 %v868, %v980
        %v982 = vmul.f32 %v869, %v980
        %v983 = vmul.f32 %v870, %v980
        %v984 = vmul.f32 %v871, %v980
        %v985 = vmul.f32 %v872, %v980
        %v991 = vrot.slane %v981, 2
        %v992 = vrot.slane %v982, 2
        %v993 = vrot.slane %v983, 2
        %v994 = vrot.slane %v984, 2
        %v995 = vrot.slane %v985, 2
        %v1001 = vadd.f32 %v974, %v991
        %v1002 = vadd.f32 %v975, %v992
        %v1003 = vadd.f32 %v976, %v993
        %v1004 = vadd.f32 %v977, %v994
        %v1005 = vadd.f32 %v978, %v995
        %s1006 = sld [smem:[#allocation4 + $0xb]]
        %v1007 = vstv %s1006
        %v1008 = vmul.f32 %v869, %v1007
        %v1009 = vmul.f32 %v870, %v1007
        %v1010 = vmul.f32 %v871, %v1007
        %v1011 = vmul.f32 %v872, %v1007
        %v1012 = vmul.f32 %v873, %v1007
        %v1013 = vadd.f32 %v1001, %v1008
        %v1014 = vadd.f32 %v1002, %v1009
        %v1015 = vadd.f32 %v1003, %v1010
        %v1016 = vadd.f32 %v1004, %v1011
        %v1017 = vadd.f32 %v1005, %v1012
        %s1018 = sld [smem:[#allocation4 + $0xa]]
        %v1019 = vstv %s1018
        %v1020 = vmul.f32 %v869, %v1019
        %v1021 = vmul.f32 %v870, %v1019
        %v1022 = vmul.f32 %v871, %v1019
        %v1023 = vmul.f32 %v872, %v1019
        %v1024 = vmul.f32 %v873, %v1019
        %v1030 = vrot.slane %v1020, 1
        %v1031 = vrot.slane %v1021, 1
        %v1032 = vrot.slane %v1022, 1
        %v1033 = vrot.slane %v1023, 1
        %v1034 = vrot.slane %v1024, 1
        %v1040 = vadd.f32 %v1013, %v1030
        %v1041 = vadd.f32 %v1014, %v1031
        %v1042 = vadd.f32 %v1015, %v1032
        %v1043 = vadd.f32 %v1016, %v1033
        %v1044 = vadd.f32 %v1017, %v1034
        %s1045 = sld [smem:[#allocation4 + $0x9]]
        %v1046 = vstv %s1045
        %v1047 = vmul.f32 %v869, %v1046
        %v1048 = vmul.f32 %v870, %v1046
        %v1049 = vmul.f32 %v871, %v1046
        %v1050 = vmul.f32 %v872, %v1046
        %v1051 = vmul.f32 %v873, %v1046
        %v1057 = vrot.slane %v1047, 2
        %v1058 = vrot.slane %v1048, 2
        %v1059 = vrot.slane %v1049, 2
        %v1060 = vrot.slane %v1050, 2
        %v1061 = vrot.slane %v1051, 2
        %v1067 = vadd.f32 %v1040, %v1057
        %v1068 = vadd.f32 %v1041, %v1058
        %v1069 = vadd.f32 %v1042, %v1059
        %v1070 = vadd.f32 %v1043, %v1060
        %v1071 = vadd.f32 %v1044, %v1061
        %s1072 = scalar_lea.vmem %s634, 112 [#allocation3]
        %v1073 = vld [vmem:[%s1072] sm:$0x7f]
        %v1074 = vld [vmem:[%s1072 + $0x8] sm:$0x7f]
        %v1075 = vld [vmem:[%s1072 + $0x10] sm:$0x7f]
        %v1076 = vld [vmem:[%s1072 + $0x18] sm:$0x7f]
        %v1077 = vld [vmem:[%s1072 + $0x20] sm:$0x7f]
        %v1078 = vld [vmem:[%s1072 + $0x28] sm:$0x7f]
        %v1079 = vld [vmem:[%s1072 + $0x30] sm:$0x7f]
        %s1080 = sld [smem:[#allocation4 + $0x1a]]
        %v1081 = vstv %s1080
        %v1082 = vmul.f32 %v1073, %v1081
        %v1083 = vmul.f32 %v1074, %v1081
        %v1084 = vmul.f32 %v1075, %v1081
        %v1085 = vmul.f32 %v1076, %v1081
        %v1086 = vmul.f32 %v1077, %v1081
        %v1087 = vadd.f32 %v1067, %v1082
        %v1088 = vadd.f32 %v1068, %v1083
        %v1089 = vadd.f32 %v1069, %v1084
        %v1090 = vadd.f32 %v1070, %v1085
        %v1091 = vadd.f32 %v1071, %v1086
        %s1092 = sld [smem:[#allocation4 + $0x19]]
        %v1093 = vstv %s1092
        %v1094 = vmul.f32 %v1073, %v1093
        %v1095 = vmul.f32 %v1074, %v1093
        %v1096 = vmul.f32 %v1075, %v1093
        %v1097 = vmul.f32 %v1076, %v1093
        %v1098 = vmul.f32 %v1077, %v1093
        %v1104 = vrot.slane %v1094, 1
        %v1105 = vrot.slane %v1095, 1
        %v1106 = vrot.slane %v1096, 1
        %v1107 = vrot.slane %v1097, 1
        %v1108 = vrot.slane %v1098, 1
        %v1114 = vadd.f32 %v1087, %v1104
        %v1115 = vadd.f32 %v1088, %v1105
        %v1116 = vadd.f32 %v1089, %v1106
        %v1117 = vadd.f32 %v1090, %v1107
        %v1118 = vadd.f32 %v1091, %v1108
        %s1119 = sld [smem:[#allocation4 + $0x18]]
        %v1120 = vstv %s1119
        %v1121 = vmul.f32 %v1073, %v1120
        %v1122 = vmul.f32 %v1074, %v1120
        %v1123 = vmul.f32 %v1075, %v1120
        %v1124 = vmul.f32 %v1076, %v1120
        %v1125 = vmul.f32 %v1077, %v1120
        %v1131 = vrot.slane %v1121, 2
        %v1132 = vrot.slane %v1122, 2
        %v1133 = vrot.slane %v1123, 2
        %v1134 = vrot.slane %v1124, 2
        %v1135 = vrot.slane %v1125, 2
        %v1141 = vadd.f32 %v1114, %v1131
        %v1142 = vadd.f32 %v1115, %v1132
        %v1143 = vadd.f32 %v1116, %v1133
        %v1144 = vadd.f32 %v1117, %v1134
        %v1145 = vadd.f32 %v1118, %v1135
        %s1146 = sld [smem:[#allocation4 + $0x17]]
        %v1147 = vstv %s1146
        %v1148 = vmul.f32 %v1074, %v1147
        %v1149 = vmul.f32 %v1075, %v1147
        %v1150 = vmul.f32 %v1076, %v1147
        %v1151 = vmul.f32 %v1077, %v1147
        %v1152 = vmul.f32 %v1078, %v1147
        %v1153 = vadd.f32 %v1141, %v1148
        %v1154 = vadd.f32 %v1142, %v1149
        %v1155 = vadd.f32 %v1143, %v1150
        %v1156 = vadd.f32 %v1144, %v1151
        %v1157 = vadd.f32 %v1145, %v1152
        %s1158 = sld [smem:[#allocation4 + $0x16]]
        %v1159 = vstv %s1158
        %v1160 = vmul.f32 %v1074, %v1159
        %v1161 = vmul.f32 %v1075, %v1159
        %v1162 = vmul.f32 %v1076, %v1159
        %v1163 = vmul.f32 %v1077, %v1159
        %v1164 = vmul.f32 %v1078, %v1159
        %v1170 = vrot.slane %v1160, 1
        %v1171 = vrot.slane %v1161, 1
        %v1172 = vrot.slane %v1162, 1
        %v1173 = vrot.slane %v1163, 1
        %v1174 = vrot.slane %v1164, 1
        %v1180 = vadd.f32 %v1153, %v1170
        %v1181 = vadd.f32 %v1154, %v1171
        %v1182 = vadd.f32 %v1155, %v1172
        %v1183 = vadd.f32 %v1156, %v1173
        %v1184 = vadd.f32 %v1157, %v1174
        %s1185 = sld [smem:[#allocation4 + $0x15]]
        %v1186 = vstv %s1185
        %v1187 = vmul.f32 %v1074, %v1186
        %v1188 = vmul.f32 %v1075, %v1186
        %v1189 = vmul.f32 %v1076, %v1186
        %v1190 = vmul.f32 %v1077, %v1186
        %v1191 = vmul.f32 %v1078, %v1186
        %v1197 = vrot.slane %v1187, 2
        %v1198 = vrot.slane %v1188, 2
        %v1199 = vrot.slane %v1189, 2
        %v1200 = vrot.slane %v1190, 2
        %v1201 = vrot.slane %v1191, 2
        %v1207 = vadd.f32 %v1180, %v1197
        %v1208 = vadd.f32 %v1181, %v1198
        %v1209 = vadd.f32 %v1182, %v1199
        %v1210 = vadd.f32 %v1183, %v1200
        %v1211 = vadd.f32 %v1184, %v1201
        %s1212 = sld [smem:[#allocation4 + $0x14]]
        %v1213 = vstv %s1212
        %v1214 = vmul.f32 %v1075, %v1213
        %v1215 = vmul.f32 %v1076, %v1213
        %v1216 = vmul.f32 %v1077, %v1213
        %v1217 = vmul.f32 %v1078, %v1213
        %v1218 = vmul.f32 %v1079, %v1213
        %v1219 = vadd.f32 %v1207, %v1214
        %v1220 = vadd.f32 %v1208, %v1215
        %v1221 = vadd.f32 %v1209, %v1216
        %v1222 = vadd.f32 %v1210, %v1217
        %v1223 = vadd.f32 %v1211, %v1218
        %s1224 = sld [smem:[#allocation4 + $0x13]]
        %v1225 = vstv %s1224
        %v1226 = vmul.f32 %v1075, %v1225
        %v1227 = vmul.f32 %v1076, %v1225
        %v1228 = vmul.f32 %v1077, %v1225
        %v1229 = vmul.f32 %v1078, %v1225
        %v1230 = vmul.f32 %v1079, %v1225
        %v1236 = vrot.slane %v1226, 1
        %v1237 = vrot.slane %v1227, 1
        %v1238 = vrot.slane %v1228, 1
        %v1239 = vrot.slane %v1229, 1
        %v1240 = vrot.slane %v1230, 1
        %v1246 = vadd.f32 %v1219, %v1236
        %v1247 = vadd.f32 %v1220, %v1237
        %v1248 = vadd.f32 %v1221, %v1238
        %v1249 = vadd.f32 %v1222, %v1239
        %v1250 = vadd.f32 %v1223, %v1240
        %s1251 = sld [smem:[#allocation4 + $0x12]]
        %v1252 = vstv %s1251
        %v1253 = vmul.f32 %v1075, %v1252
        %v1254 = vmul.f32 %v1076, %v1252
        %v1255 = vmul.f32 %v1077, %v1252
        %v1256 = vmul.f32 %v1078, %v1252
        %v1257 = vmul.f32 %v1079, %v1252
        %v1263 = vrot.slane %v1253, 2
        %v1264 = vrot.slane %v1254, 2
        %v1265 = vrot.slane %v1255, 2
        %v1266 = vrot.slane %v1256, 2
        %v1267 = vrot.slane %v1257, 2
        %v1273 = vadd.f32 %v1246, %v1263
        %v1274 = vadd.f32 %v1247, %v1264
        %v1275 = vadd.f32 %v1248, %v1265
        %v1276 = vadd.f32 %v1249, %v1266
        %v1277 = vadd.f32 %v1250, %v1267
        %s1278 = scalar_lea.vmem %s634, 168 [#allocation3]
        %v1279 = vld [vmem:[%s1278] sm:$0x7f]
        %v1280 = vld [vmem:[%s1278 + $0x8] sm:$0x7f]
        %v1281 = vld [vmem:[%s1278 + $0x10] sm:$0x7f]
        %v1282 = vld [vmem:[%s1278 + $0x18] sm:$0x7f]
        %v1283 = vld [vmem:[%s1278 + $0x20] sm:$0x7f]
        %v1284 = vld [vmem:[%s1278 + $0x28] sm:$0x7f]
        %v1285 = vld [vmem:[%s1278 + $0x30] sm:$0x7f]
        %s1286 = sld [smem:[#allocation4 + $0x23]]
        %v1287 = vstv %s1286
        %v1288 = vmul.f32 %v1279, %v1287
        %v1289 = vmul.f32 %v1280, %v1287
        %v1290 = vmul.f32 %v1281, %v1287
        %v1291 = vmul.f32 %v1282, %v1287
        %v1292 = vmul.f32 %v1283, %v1287
        %v1293 = vadd.f32 %v1273, %v1288
        %v1294 = vadd.f32 %v1274, %v1289
        %v1295 = vadd.f32 %v1275, %v1290
        %v1296 = vadd.f32 %v1276, %v1291
        %v1297 = vadd.f32 %v1277, %v1292
        %s1298 = sld [smem:[#allocation4 + $0x22]]
        %v1299 = vstv %s1298
        %v1300 = vmul.f32 %v1279, %v1299
        %v1301 = vmul.f32 %v1280, %v1299
        %v1302 = vmul.f32 %v1281, %v1299
        %v1303 = vmul.f32 %v1282, %v1299
        %v1304 = vmul.f32 %v1283, %v1299
        %v1310 = vrot.slane %v1300, 1
        %v1311 = vrot.slane %v1301, 1
        %v1312 = vrot.slane %v1302, 1
        %v1313 = vrot.slane %v1303, 1
        %v1314 = vrot.slane %v1304, 1
        %v1320 = vadd.f32 %v1293, %v1310
        %v1321 = vadd.f32 %v1294, %v1311
        %v1322 = vadd.f32 %v1295, %v1312
        %v1323 = vadd.f32 %v1296, %v1313
        %v1324 = vadd.f32 %v1297, %v1314
        %s1325 = sld [smem:[#allocation4 + $0x21]]
        %v1326 = vstv %s1325
        %v1327 = vmul.f32 %v1279, %v1326
        %v1328 = vmul.f32 %v1280, %v1326
        %v1329 = vmul.f32 %v1281, %v1326
        %v1330 = vmul.f32 %v1282, %v1326
        %v1331 = vmul.f32 %v1283, %v1326
        %v1337 = vrot.slane %v1327, 2
        %v1338 = vrot.slane %v1328, 2
        %v1339 = vrot.slane %v1329, 2
        %v1340 = vrot.slane %v1330, 2
        %v1341 = vrot.slane %v1331, 2
        %v1347 = vadd.f32 %v1320, %v1337
        %v1348 = vadd.f32 %v1321, %v1338
        %v1349 = vadd.f32 %v1322, %v1339
        %v1350 = vadd.f32 %v1323, %v1340
        %v1351 = vadd.f32 %v1324, %v1341
        %s1352 = sld [smem:[#allocation4 + $0x20]]
        %v1353 = vstv %s1352
        %v1354 = vmul.f32 %v1280, %v1353
        %v1355 = vmul.f32 %v1281, %v1353
        %v1356 = vmul.f32 %v1282, %v1353
        %v1357 = vmul.f32 %v1283, %v1353
        %v1358 = vmul.f32 %v1284, %v1353
        %v1359 = vadd.f32 %v1347, %v1354
        %v1360 = vadd.f32 %v1348, %v1355
        %v1361 = vadd.f32 %v1349, %v1356
        %v1362 = vadd.f32 %v1350, %v1357
        %v1363 = vadd.f32 %v1351, %v1358
        %s1364 = sld [smem:[#allocation4 + $0x1f]]
        %v1365 = vstv %s1364
        %v1366 = vmul.f32 %v1280, %v1365
        %v1367 = vmul.f32 %v1281, %v1365
        %v1368 = vmul.f32 %v1282, %v1365
        %v1369 = vmul.f32 %v1283, %v1365
        %v1370 = vmul.f32 %v1284, %v1365
        %v1376 = vrot.slane %v1366, 1
        %v1377 = vrot.slane %v1367, 1
        %v1378 = vrot.slane %v1368, 1
        %v1379 = vrot.slane %v1369, 1
        %v1380 = vrot.slane %v1370, 1
        %v1386 = vadd.f32 %v1359, %v1376
        %v1387 = vadd.f32 %v1360, %v1377
        %v1388 = vadd.f32 %v1361, %v1378
        %v1389 = vadd.f32 %v1362, %v1379
        %v1390 = vadd.f32 %v1363, %v1380
        %s1391 = sld [smem:[#allocation4 + $0x1e]]
        %v1392 = vstv %s1391
        %v1393 = vmul.f32 %v1280, %v1392
        %v1394 = vmul.f32 %v1281, %v1392
        %v1395 = vmul.f32 %v1282, %v1392
        %v1396 = vmul.f32 %v1283, %v1392
        %v1397 = vmul.f32 %v1284, %v1392
        %v1403 = vrot.slane %v1393, 2
        %v1404 = vrot.slane %v1394, 2
        %v1405 = vrot.slane %v1395, 2
        %v1406 = vrot.slane %v1396, 2
        %v1407 = vrot.slane %v1397, 2
        %v1413 = vadd.f32 %v1386, %v1403
        %v1414 = vadd.f32 %v1387, %v1404
        %v1415 = vadd.f32 %v1388, %v1405
        %v1416 = vadd.f32 %v1389, %v1406
        %v1417 = vadd.f32 %v1390, %v1407
        %s1418 = sld [smem:[#allocation4 + $0x1d]]
        %v1419 = vstv %s1418
        %v1420 = vmul.f32 %v1281, %v1419
        %v1421 = vmul.f32 %v1282, %v1419
        %v1422 = vmul.f32 %v1283, %v1419
        %v1423 = vmul.f32 %v1284, %v1419
        %v1424 = vmul.f32 %v1285, %v1419
        %v1425 = vadd.f32 %v1413, %v1420
        %v1426 = vadd.f32 %v1414, %v1421
        %v1427 = vadd.f32 %v1415, %v1422
        %v1428 = vadd.f32 %v1416, %v1423
        %v1429 = vadd.f32 %v1417, %v1424
        %s1430 = sld [smem:[#allocation4 + $0x1c]]
        %v1431 = vstv %s1430
        %v1432 = vmul.f32 %v1281, %v1431
        %v1433 = vmul.f32 %v1282, %v1431
        %v1434 = vmul.f32 %v1283, %v1431
        %v1435 = vmul.f32 %v1284, %v1431
        %v1436 = vmul.f32 %v1285, %v1431
        %v1442 = vrot.slane %v1432, 1
        %v1443 = vrot.slane %v1433, 1
        %v1444 = vrot.slane %v1434, 1
        %v1445 = vrot.slane %v1435, 1
        %v1446 = vrot.slane %v1436, 1
        %v1452 = vadd.f32 %v1425, %v1442
        %v1453 = vadd.f32 %v1426, %v1443
        %v1454 = vadd.f32 %v1427, %v1444
        %v1455 = vadd.f32 %v1428, %v1445
        %v1456 = vadd.f32 %v1429, %v1446
        %s1457 = sld [smem:[#allocation4 + $0x1b]]
        %v1458 = vstv %s1457
        %v1459 = vmul.f32 %v1281, %v1458
        %v1460 = vmul.f32 %v1282, %v1458
        %v1461 = vmul.f32 %v1283, %v1458
        %v1462 = vmul.f32 %v1284, %v1458
        %v1463 = vmul.f32 %v1285, %v1458
        %v1469 = vrot.slane %v1459, 2
        %v1470 = vrot.slane %v1460, 2
        %v1471 = vrot.slane %v1461, 2
        %v1472 = vrot.slane %v1462, 2
        %v1473 = vrot.slane %v1463, 2
        %v1479 = vadd.f32 %v1452, %v1469
        %v1480 = vadd.f32 %v1453, %v1470
        %v1481 = vadd.f32 %v1454, %v1471
        %v1482 = vadd.f32 %v1455, %v1472
        %v1483 = vadd.f32 %v1456, %v1473
        %s1484 = scalar_lea.vmem %s634, 224 [#allocation3]
        %v1485 = vld [vmem:[%s1484] sm:$0x7f]
        %v1486 = vld [vmem:[%s1484 + $0x8] sm:$0x7f]
        %v1487 = vld [vmem:[%s1484 + $0x10] sm:$0x7f]
        %v1488 = vld [vmem:[%s1484 + $0x18] sm:$0x7f]
        %v1489 = vld [vmem:[%s1484 + $0x20] sm:$0x7f]
        %v1490 = vld [vmem:[%s1484 + $0x28] sm:$0x7f]
        %v1491 = vld [vmem:[%s1484 + $0x30] sm:$0x7f]
        %s1492 = sld [smem:[#allocation4 + $0x2c]]
        %v1493 = vstv %s1492
        %v1494 = vmul.f32 %v1485, %v1493
        %v1495 = vmul.f32 %v1486, %v1493
        %v1496 = vmul.f32 %v1487, %v1493
        %v1497 = vmul.f32 %v1488, %v1493
        %v1498 = vmul.f32 %v1489, %v1493
        %v1499 = vadd.f32 %v1479, %v1494
        %v1500 = vadd.f32 %v1480, %v1495
        %v1501 = vadd.f32 %v1481, %v1496
        %v1502 = vadd.f32 %v1482, %v1497
        %v1503 = vadd.f32 %v1483, %v1498
        %s1504 = sld [smem:[#allocation4 + $0x2b]]
        %v1505 = vstv %s1504
        %v1506 = vmul.f32 %v1485, %v1505
        %v1507 = vmul.f32 %v1486, %v1505
        %v1508 = vmul.f32 %v1487, %v1505
        %v1509 = vmul.f32 %v1488, %v1505
        %v1510 = vmul.f32 %v1489, %v1505
        %v1516 = vrot.slane %v1506, 1
        %v1517 = vrot.slane %v1507, 1
        %v1518 = vrot.slane %v1508, 1
        %v1519 = vrot.slane %v1509, 1
        %v1520 = vrot.slane %v1510, 1
        %v1526 = vadd.f32 %v1499, %v1516
        %v1527 = vadd.f32 %v1500, %v1517
        %v1528 = vadd.f32 %v1501, %v1518
        %v1529 = vadd.f32 %v1502, %v1519
        %v1530 = vadd.f32 %v1503, %v1520
        %s1531 = sld [smem:[#allocation4 + $0x2a]]
        %v1532 = vstv %s1531
        %v1533 = vmul.f32 %v1485, %v1532
        %v1534 = vmul.f32 %v1486, %v1532
        %v1535 = vmul.f32 %v1487, %v1532
        %v1536 = vmul.f32 %v1488, %v1532
        %v1537 = vmul.f32 %v1489, %v1532
        %v1543 = vrot.slane %v1533, 2
        %v1544 = vrot.slane %v1534, 2
        %v1545 = vrot.slane %v1535, 2
        %v1546 = vrot.slane %v1536, 2
        %v1547 = vrot.slane %v1537, 2
        %v1553 = vadd.f32 %v1526, %v1543
        %v1554 = vadd.f32 %v1527, %v1544
        %v1555 = vadd.f32 %v1528, %v1545
        %v1556 = vadd.f32 %v1529, %v1546
        %v1557 = vadd.f32 %v1530, %v1547
        %s1558 = sld [smem:[#allocation4 + $0x29]]
        %v1559 = vstv %s1558
        %v1560 = vmul.f32 %v1486, %v1559
        %v1561 = vmul.f32 %v1487, %v1559
        %v1562 = vmul.f32 %v1488, %v1559
        %v1563 = vmul.f32 %v1489, %v1559
        %v1564 = vmul.f32 %v1490, %v1559
        %v1565 = vadd.f32 %v1553, %v1560
        %v1566 = vadd.f32 %v1554, %v1561
        %v1567 = vadd.f32 %v1555, %v1562
        %v1568 = vadd.f32 %v1556, %v1563
        %v1569 = vadd.f32 %v1557, %v1564
        %s1570 = sld [smem:[#allocation4 + $0x28]]
        %v1571 = vstv %s1570
        %v1572 = vmul.f32 %v1486, %v1571
        %v1573 = vmul.f32 %v1487, %v1571
        %v1574 = vmul.f32 %v1488, %v1571
        %v1575 = vmul.f32 %v1489, %v1571
        %v1576 = vmul.f32 %v1490, %v1571
        %v1582 = vrot.slane %v1572, 1
        %v1583 = vrot.slane %v1573, 1
        %v1584 = vrot.slane %v1574, 1
        %v1585 = vrot.slane %v1575, 1
        %v1586 = vrot.slane %v1576, 1
        %v1592 = vadd.f32 %v1565, %v1582
        %v1593 = vadd.f32 %v1566, %v1583
        %v1594 = vadd.f32 %v1567, %v1584
        %v1595 = vadd.f32 %v1568, %v1585
        %v1596 = vadd.f32 %v1569, %v1586
        %s1597 = sld [smem:[#allocation4 + $0x27]]
        %v1598 = vstv %s1597
        %v1599 = vmul.f32 %v1486, %v1598
        %v1600 = vmul.f32 %v1487, %v1598
        %v1601 = vmul.f32 %v1488, %v1598
        %v1602 = vmul.f32 %v1489, %v1598
        %v1603 = vmul.f32 %v1490, %v1598
        %v1609 = vrot.slane %v1599, 2
        %v1610 = vrot.slane %v1600, 2
        %v1611 = vrot.slane %v1601, 2
        %v1612 = vrot.slane %v1602, 2
        %v1613 = vrot.slane %v1603, 2
        %v1619 = vadd.f32 %v1592, %v1609
        %v1620 = vadd.f32 %v1593, %v1610
        %v1621 = vadd.f32 %v1594, %v1611
        %v1622 = vadd.f32 %v1595, %v1612
        %v1623 = vadd.f32 %v1596, %v1613
        %s1624 = sld [smem:[#allocation4 + $0x26]]
        %v1625 = vstv %s1624
        %v1626 = vmul.f32 %v1487, %v1625
        %v1627 = vmul.f32 %v1488, %v1625
        %v1628 = vmul.f32 %v1489, %v1625
        %v1629 = vmul.f32 %v1490, %v1625
        %v1630 = vmul.f32 %v1491, %v1625
        %v1631 = vadd.f32 %v1619, %v1626
        %v1632 = vadd.f32 %v1620, %v1627
        %v1633 = vadd.f32 %v1621, %v1628
        %v1634 = vadd.f32 %v1622, %v1629
        %v1635 = vadd.f32 %v1623, %v1630
        %s1636 = sld [smem:[#allocation4 + $0x25]]
        %v1637 = vstv %s1636
        %v1638 = vmul.f32 %v1487, %v1637
        %v1639 = vmul.f32 %v1488, %v1637
        %v1640 = vmul.f32 %v1489, %v1637
        %v1641 = vmul.f32 %v1490, %v1637
        %v1642 = vmul.f32 %v1491, %v1637
        %v1648 = vrot.slane %v1638, 1
        %v1649 = vrot.slane %v1639, 1
        %v1650 = vrot.slane %v1640, 1
        %v1651 = vrot.slane %v1641, 1
        %v1652 = vrot.slane %v1642, 1
        %v1658 = vadd.f32 %v1631, %v1648
        %v1659 = vadd.f32 %v1632, %v1649
        %v1660 = vadd.f32 %v1633, %v1650
        %v1661 = vadd.f32 %v1634, %v1651
        %v1662 = vadd.f32 %v1635, %v1652
        %s1663 = sld [smem:[#allocation4 + $0x24]]
        %v1664 = vstv %s1663
        %v1665 = vmul.f32 %v1487, %v1664
        %v1666 = vmul.f32 %v1488, %v1664
        %v1667 = vmul.f32 %v1489, %v1664
        %v1668 = vmul.f32 %v1490, %v1664
        %v1669 = vmul.f32 %v1491, %v1664
        %v1675 = vrot.slane %v1665, 2
        %v1676 = vrot.slane %v1666, 2
        %v1677 = vrot.slane %v1667, 2
        %v1678 = vrot.slane %v1668, 2
        %v1679 = vrot.slane %v1669, 2
        %v1685 = vadd.f32 %v1658, %v1675
        %v1686 = vadd.f32 %v1659, %v1676
        %v1687 = vadd.f32 %v1660, %v1677
        %v1688 = vadd.f32 %v1661, %v1678
        %v1689 = vadd.f32 %v1662, %v1679
        %s1690 = scalar_lea.vmem %s634, 280 [#allocation3]
        %v1691 = vld [vmem:[%s1690] sm:$0x7f]
        %v1692 = vld [vmem:[%s1690 + $0x8] sm:$0x7f]
        %v1693 = vld [vmem:[%s1690 + $0x10] sm:$0x7f]
        %v1694 = vld [vmem:[%s1690 + $0x18] sm:$0x7f]
        %v1695 = vld [vmem:[%s1690 + $0x20] sm:$0x7f]
        %v1696 = vld [vmem:[%s1690 + $0x28] sm:$0x7f]
        %v1697 = vld [vmem:[%s1690 + $0x30] sm:$0x7f]
        %s1698 = sld [smem:[#allocation4 + $0x35]]
        %v1699 = vstv %s1698
        %v1700 = vmul.f32 %v1691, %v1699
        %v1701 = vmul.f32 %v1692, %v1699
        %v1702 = vmul.f32 %v1693, %v1699
        %v1703 = vmul.f32 %v1694, %v1699
        %v1704 = vmul.f32 %v1695, %v1699
        %v1705 = vadd.f32 %v1685, %v1700
        %v1706 = vadd.f32 %v1686, %v1701
        %v1707 = vadd.f32 %v1687, %v1702
        %v1708 = vadd.f32 %v1688, %v1703
        %v1709 = vadd.f32 %v1689, %v1704
        %s1710 = sld [smem:[#allocation4 + $0x34]]
        %v1711 = vstv %s1710
        %v1712 = vmul.f32 %v1691, %v1711
        %v1713 = vmul.f32 %v1692, %v1711
        %v1714 = vmul.f32 %v1693, %v1711
        %v1715 = vmul.f32 %v1694, %v1711
        %v1716 = vmul.f32 %v1695, %v1711
        %v1722 = vrot.slane %v1712, 1
        %v1723 = vrot.slane %v1713, 1
        %v1724 = vrot.slane %v1714, 1
        %v1725 = vrot.slane %v1715, 1
        %v1726 = vrot.slane %v1716, 1
        %v1732 = vadd.f32 %v1705, %v1722
        %v1733 = vadd.f32 %v1706, %v1723
        %v1734 = vadd.f32 %v1707, %v1724
        %v1735 = vadd.f32 %v1708, %v1725
        %v1736 = vadd.f32 %v1709, %v1726
        %s1737 = sld [smem:[#allocation4 + $0x33]]
        %v1738 = vstv %s1737
        %v1739 = vmul.f32 %v1691, %v1738
        %v1740 = vmul.f32 %v1692, %v1738
        %v1741 = vmul.f32 %v1693, %v1738
        %v1742 = vmul.f32 %v1694, %v1738
        %v1743 = vmul.f32 %v1695, %v1738
        %v1749 = vrot.slane %v1739, 2
        %v1750 = vrot.slane %v1740, 2
        %v1751 = vrot.slane %v1741, 2
        %v1752 = vrot.slane %v1742, 2
        %v1753 = vrot.slane %v1743, 2
        %v1759 = vadd.f32 %v1732, %v1749
        %v1760 = vadd.f32 %v1733, %v1750
        %v1761 = vadd.f32 %v1734, %v1751
        %v1762 = vadd.f32 %v1735, %v1752
        %v1763 = vadd.f32 %v1736, %v1753
        %s1764 = sld [smem:[#allocation4 + $0x32]]
        %v1765 = vstv %s1764
        %v1766 = vmul.f32 %v1692, %v1765
        %v1767 = vmul.f32 %v1693, %v1765
        %v1768 = vmul.f32 %v1694, %v1765
        %v1769 = vmul.f32 %v1695, %v1765
        %v1770 = vmul.f32 %v1696, %v1765
        %v1771 = vadd.f32 %v1759, %v1766
        %v1772 = vadd.f32 %v1760, %v1767
        %v1773 = vadd.f32 %v1761, %v1768
        %v1774 = vadd.f32 %v1762, %v1769
        %v1775 = vadd.f32 %v1763, %v1770
        %s1776 = sld [smem:[#allocation4 + $0x31]]
        %v1777 = vstv %s1776
        %v1778 = vmul.f32 %v1692, %v1777
        %v1779 = vmul.f32 %v1693, %v1777
        %v1780 = vmul.f32 %v1694, %v1777
        %v1781 = vmul.f32 %v1695, %v1777
        %v1782 = vmul.f32 %v1696, %v1777
        %v1788 = vrot.slane %v1778, 1
        %v1789 = vrot.slane %v1779, 1
        %v1790 = vrot.slane %v1780, 1
        %v1791 = vrot.slane %v1781, 1
        %v1792 = vrot.slane %v1782, 1
        %v1798 = vadd.f32 %v1771, %v1788
        %v1799 = vadd.f32 %v1772, %v1789
        %v1800 = vadd.f32 %v1773, %v1790
        %v1801 = vadd.f32 %v1774, %v1791
        %v1802 = vadd.f32 %v1775, %v1792
        %s1803 = sld [smem:[#allocation4 + $0x30]]
        %v1804 = vstv %s1803
        %v1805 = vmul.f32 %v1692, %v1804
        %v1806 = vmul.f32 %v1693, %v1804
        %v1807 = vmul.f32 %v1694, %v1804
        %v1808 = vmul.f32 %v1695, %v1804
        %v1809 = vmul.f32 %v1696, %v1804
        %v1815 = vrot.slane %v1805, 2
        %v1816 = vrot.slane %v1806, 2
        %v1817 = vrot.slane %v1807, 2
        %v1818 = vrot.slane %v1808, 2
        %v1819 = vrot.slane %v1809, 2
        %v1825 = vadd.f32 %v1798, %v1815
        %v1826 = vadd.f32 %v1799, %v1816
        %v1827 = vadd.f32 %v1800, %v1817
        %v1828 = vadd.f32 %v1801, %v1818
        %v1829 = vadd.f32 %v1802, %v1819
        %s1830 = sld [smem:[#allocation4 + $0x2f]]
        %v1831 = vstv %s1830
        %v1832 = vmul.f32 %v1693, %v1831
        %v1833 = vmul.f32 %v1694, %v1831
        %v1834 = vmul.f32 %v1695, %v1831
        %v1835 = vmul.f32 %v1696, %v1831
        %v1836 = vmul.f32 %v1697, %v1831
        %v1837 = vadd.f32 %v1825, %v1832
        %v1838 = vadd.f32 %v1826, %v1833
        %v1839 = vadd.f32 %v1827, %v1834
        %v1840 = vadd.f32 %v1828, %v1835
        %v1841 = vadd.f32 %v1829, %v1836
        %s1842 = sld [smem:[#allocation4 + $0x2e]]
        %v1843 = vstv %s1842
        %v1844 = vmul.f32 %v1693, %v1843
        %v1845 = vmul.f32 %v1694, %v1843
        %v1846 = vmul.f32 %v1695, %v1843
        %v1847 = vmul.f32 %v1696, %v1843
        %v1848 = vmul.f32 %v1697, %v1843
        %v1854 = vrot.slane %v1844, 1
        %v1855 = vrot.slane %v1845, 1
        %v1856 = vrot.slane %v1846, 1
        %v1857 = vrot.slane %v1847, 1
        %v1858 = vrot.slane %v1848, 1
        %v1864 = vadd.f32 %v1837, %v1854
        %v1865 = vadd.f32 %v1838, %v1855
        %v1866 = vadd.f32 %v1839, %v1856
        %v1867 = vadd.f32 %v1840, %v1857
        %v1868 = vadd.f32 %v1841, %v1858
        %s1869 = sld [smem:[#allocation4 + $0x2d]]
        %v1870 = vstv %s1869
        %v1871 = vmul.f32 %v1693, %v1870
        %v1872 = vmul.f32 %v1694, %v1870
        %v1873 = vmul.f32 %v1695, %v1870
        %v1874 = vmul.f32 %v1696, %v1870
        %v1875 = vmul.f32 %v1697, %v1870
        %v1881 = vrot.slane %v1871, 2
        %v1882 = vrot.slane %v1872, 2
        %v1883 = vrot.slane %v1873, 2
        %v1884 = vrot.slane %v1874, 2
        %v1885 = vrot.slane %v1875, 2
        %v1891 = vadd.f32 %v1864, %v1881
        %v1892 = vadd.f32 %v1865, %v1882
        %v1893 = vadd.f32 %v1866, %v1883
        %v1894 = vadd.f32 %v1867, %v1884
        %v1895 = vadd.f32 %v1868, %v1885
        %s1896 = scalar_lea.vmem %s634, 336 [#allocation3]
        %v1897 = vld [vmem:[%s1896] sm:$0x7f]
        %v1898 = vld [vmem:[%s1896 + $0x8] sm:$0x7f]
        %v1899 = vld [vmem:[%s1896 + $0x10] sm:$0x7f]
        %v1900 = vld [vmem:[%s1896 + $0x18] sm:$0x7f]
        %v1901 = vld [vmem:[%s1896 + $0x20] sm:$0x7f]
        %v1902 = vld [vmem:[%s1896 + $0x28] sm:$0x7f]
        %v1903 = vld [vmem:[%s1896 + $0x30] sm:$0x7f]
        %s1904 = sld [smem:[#allocation4 + $0x3e]]
        %v1905 = vstv %s1904
        %v1906 = vmul.f32 %v1897, %v1905
        %v1907 = vmul.f32 %v1898, %v1905
        %v1908 = vmul.f32 %v1899, %v1905
        %v1909 = vmul.f32 %v1900, %v1905
        %v1910 = vmul.f32 %v1901, %v1905
        %v1911 = vadd.f32 %v1891, %v1906
        %v1912 = vadd.f32 %v1892, %v1907
        %v1913 = vadd.f32 %v1893, %v1908
        %v1914 = vadd.f32 %v1894, %v1909
        %v1915 = vadd.f32 %v1895, %v1910
        %s1916 = sld [smem:[#allocation4 + $0x3d]]
        %v1917 = vstv %s1916
        %v1918 = vmul.f32 %v1897, %v1917
        %v1919 = vmul.f32 %v1898, %v1917
        %v1920 = vmul.f32 %v1899, %v1917
        %v1921 = vmul.f32 %v1900, %v1917
        %v1922 = vmul.f32 %v1901, %v1917
        %v1928 = vrot.slane %v1918, 1
        %v1929 = vrot.slane %v1919, 1
        %v1930 = vrot.slane %v1920, 1
        %v1931 = vrot.slane %v1921, 1
        %v1932 = vrot.slane %v1922, 1
        %v1938 = vadd.f32 %v1911, %v1928
        %v1939 = vadd.f32 %v1912, %v1929
        %v1940 = vadd.f32 %v1913, %v1930
        %v1941 = vadd.f32 %v1914, %v1931
        %v1942 = vadd.f32 %v1915, %v1932
        %s1943 = sld [smem:[#allocation4 + $0x3c]]
        %v1944 = vstv %s1943
        %v1945 = vmul.f32 %v1897, %v1944
        %v1946 = vmul.f32 %v1898, %v1944
        %v1947 = vmul.f32 %v1899, %v1944
        %v1948 = vmul.f32 %v1900, %v1944
        %v1949 = vmul.f32 %v1901, %v1944
        %v1955 = vrot.slane %v1945, 2
        %v1956 = vrot.slane %v1946, 2
        %v1957 = vrot.slane %v1947, 2
        %v1958 = vrot.slane %v1948, 2
        %v1959 = vrot.slane %v1949, 2
        %v1965 = vadd.f32 %v1938, %v1955
        %v1966 = vadd.f32 %v1939, %v1956
        %v1967 = vadd.f32 %v1940, %v1957
        %v1968 = vadd.f32 %v1941, %v1958
        %v1969 = vadd.f32 %v1942, %v1959
        %s1970 = sld [smem:[#allocation4 + $0x3b]]
        %v1971 = vstv %s1970
        %v1972 = vmul.f32 %v1898, %v1971
        %v1973 = vmul.f32 %v1899, %v1971
        %v1974 = vmul.f32 %v1900, %v1971
        %v1975 = vmul.f32 %v1901, %v1971
        %v1976 = vmul.f32 %v1902, %v1971
        %v1977 = vadd.f32 %v1965, %v1972
        %v1978 = vadd.f32 %v1966, %v1973
        %v1979 = vadd.f32 %v1967, %v1974
        %v1980 = vadd.f32 %v1968, %v1975
        %v1981 = vadd.f32 %v1969, %v1976
        %s1982 = sld [smem:[#allocation4 + $0x3a]]
        %v1983 = vstv %s1982
        %v1984 = vmul.f32 %v1898, %v1983
        %v1985 = vmul.f32 %v1899, %v1983
        %v1986 = vmul.f32 %v1900, %v1983
        %v1987 = vmul.f32 %v1901, %v1983
        %v1988 = vmul.f32 %v1902, %v1983
        %v1994 = vrot.slane %v1984, 1
        %v1995 = vrot.slane %v1985, 1
        %v1996 = vrot.slane %v1986, 1
        %v1997 = vrot.slane %v1987, 1
        %v1998 = vrot.slane %v1988, 1
        %v2004 = vadd.f32 %v1977, %v1994
        %v2005 = vadd.f32 %v1978, %v1995
        %v2006 = vadd.f32 %v1979, %v1996
        %v2007 = vadd.f32 %v1980, %v1997
        %v2008 = vadd.f32 %v1981, %v1998
        %s2009 = sld [smem:[#allocation4 + $0x39]]
        %v2010 = vstv %s2009
        %v2011 = vmul.f32 %v1898, %v2010
        %v2012 = vmul.f32 %v1899, %v2010
        %v2013 = vmul.f32 %v1900, %v2010
        %v2014 = vmul.f32 %v1901, %v2010
        %v2015 = vmul.f32 %v1902, %v2010
        %v2021 = vrot.slane %v2011, 2
        %v2022 = vrot.slane %v2012, 2
        %v2023 = vrot.slane %v2013, 2
        %v2024 = vrot.slane %v2014, 2
        %v2025 = vrot.slane %v2015, 2
        %v2031 = vadd.f32 %v2004, %v2021
        %v2032 = vadd.f32 %v2005, %v2022
        %v2033 = vadd.f32 %v2006, %v2023
        %v2034 = vadd.f32 %v2007, %v2024
        %v2035 = vadd.f32 %v2008, %v2025
        %s2036 = sld [smem:[#allocation4 + $0x38]]
        %v2037 = vstv %s2036
        %v2038 = vmul.f32 %v1899, %v2037
        %v2039 = vmul.f32 %v1900, %v2037
        %v2040 = vmul.f32 %v1901, %v2037
        %v2041 = vmul.f32 %v1902, %v2037
        %v2042 = vmul.f32 %v1903, %v2037
        %v2043 = vadd.f32 %v2031, %v2038
        %v2044 = vadd.f32 %v2032, %v2039
        %v2045 = vadd.f32 %v2033, %v2040
        %v2046 = vadd.f32 %v2034, %v2041
        %v2047 = vadd.f32 %v2035, %v2042
        %s2048 = sld [smem:[#allocation4 + $0x37]]
        %v2049 = vstv %s2048
        %v2050 = vmul.f32 %v1899, %v2049
        %v2051 = vmul.f32 %v1900, %v2049
        %v2052 = vmul.f32 %v1901, %v2049
        %v2053 = vmul.f32 %v1902, %v2049
        %v2054 = vmul.f32 %v1903, %v2049
        %v2060 = vrot.slane %v2050, 1
        %v2061 = vrot.slane %v2051, 1
        %v2062 = vrot.slane %v2052, 1
        %v2063 = vrot.slane %v2053, 1
        %v2064 = vrot.slane %v2054, 1
        %v2070 = vadd.f32 %v2043, %v2060
        %v2071 = vadd.f32 %v2044, %v2061
        %v2072 = vadd.f32 %v2045, %v2062
        %v2073 = vadd.f32 %v2046, %v2063
        %v2074 = vadd.f32 %v2047, %v2064
        %s2075 = sld [smem:[#allocation4 + $0x36]]
        %v2076 = vstv %s2075
        %v2077 = vmul.f32 %v1899, %v2076
        %v2078 = vmul.f32 %v1900, %v2076
        %v2079 = vmul.f32 %v1901, %v2076
        %v2080 = vmul.f32 %v1902, %v2076
        %v2081 = vmul.f32 %v1903, %v2076
        %v2087 = vrot.slane %v2077, 2
        %v2088 = vrot.slane %v2078, 2
        %v2089 = vrot.slane %v2079, 2
        %v2090 = vrot.slane %v2080, 2
        %v2091 = vrot.slane %v2081, 2
        %v2097 = vadd.f32 %v2070, %v2087
        %v2098 = vadd.f32 %v2071, %v2088
        %v2099 = vadd.f32 %v2072, %v2089
        %v2100 = vadd.f32 %v2073, %v2090
        %v2101 = vadd.f32 %v2074, %v2091
        %s2102 = scalar_lea.vmem %s634, 392 [#allocation3]
        %v2103 = vld [vmem:[%s2102] sm:$0x7f]
        %v2104 = vld [vmem:[%s2102 + $0x8] sm:$0x7f]
        %v2105 = vld [vmem:[%s2102 + $0x10] sm:$0x7f]
        %v2106 = vld [vmem:[%s2102 + $0x18] sm:$0x7f]
        %v2107 = vld [vmem:[%s2102 + $0x20] sm:$0x7f]
        %v2108 = vld [vmem:[%s2102 + $0x28] sm:$0x7f]
        %v2109 = vld [vmem:[%s2102 + $0x30] sm:$0x7f]
        %s2110 = sld [smem:[#allocation4 + $0x47]]
        %v2111 = vstv %s2110
        %v2112 = vmul.f32 %v2103, %v2111
        %v2113 = vmul.f32 %v2104, %v2111
        %v2114 = vmul.f32 %v2105, %v2111
        %v2115 = vmul.f32 %v2106, %v2111
        %v2116 = vmul.f32 %v2107, %v2111
        %v2117 = vadd.f32 %v2097, %v2112
        %v2118 = vadd.f32 %v2098, %v2113
        %v2119 = vadd.f32 %v2099, %v2114
        %v2120 = vadd.f32 %v2100, %v2115
        %v2121 = vadd.f32 %v2101, %v2116
        %s2122 = sld [smem:[#allocation4 + $0x46]]
        %v2123 = vstv %s2122
        %v2124 = vmul.f32 %v2103, %v2123
        %v2125 = vmul.f32 %v2104, %v2123
        %v2126 = vmul.f32 %v2105, %v2123
        %v2127 = vmul.f32 %v2106, %v2123
        %v2128 = vmul.f32 %v2107, %v2123
        %v2134 = vrot.slane %v2124, 1
        %v2135 = vrot.slane %v2125, 1
        %v2136 = vrot.slane %v2126, 1
        %v2137 = vrot.slane %v2127, 1
        %v2138 = vrot.slane %v2128, 1
        %v2144 = vadd.f32 %v2117, %v2134
        %v2145 = vadd.f32 %v2118, %v2135
        %v2146 = vadd.f32 %v2119, %v2136
        %v2147 = vadd.f32 %v2120, %v2137
        %v2148 = vadd.f32 %v2121, %v2138
        %s2149 = sld [smem:[#allocation4 + $0x45]]
        %v2150 = vstv %s2149
        %v2151 = vmul.f32 %v2103, %v2150
        %v2152 = vmul.f32 %v2104, %v2150
        %v2153 = vmul.f32 %v2105, %v2150
        %v2154 = vmul.f32 %v2106, %v2150
        %v2155 = vmul.f32 %v2107, %v2150
        %v2161 = vrot.slane %v2151, 2
        %v2162 = vrot.slane %v2152, 2
        %v2163 = vrot.slane %v2153, 2
        %v2164 = vrot.slane %v2154, 2
        %v2165 = vrot.slane %v2155, 2
        %v2171 = vadd.f32 %v2144, %v2161
        %v2172 = vadd.f32 %v2145, %v2162
        %v2173 = vadd.f32 %v2146, %v2163
        %v2174 = vadd.f32 %v2147, %v2164
        %v2175 = vadd.f32 %v2148, %v2165
        %s2176 = sld [smem:[#allocation4 + $0x44]]
        %v2177 = vstv %s2176
        %v2178 = vmul.f32 %v2104, %v2177
        %v2179 = vmul.f32 %v2105, %v2177
        %v2180 = vmul.f32 %v2106, %v2177
        %v2181 = vmul.f32 %v2107, %v2177
        %v2182 = vmul.f32 %v2108, %v2177
        %v2183 = vadd.f32 %v2171, %v2178
        %v2184 = vadd.f32 %v2172, %v2179
        %v2185 = vadd.f32 %v2173, %v2180
        %v2186 = vadd.f32 %v2174, %v2181
        %v2187 = vadd.f32 %v2175, %v2182
        %s2188 = sld [smem:[#allocation4 + $0x43]]
        %v2189 = vstv %s2188
        %v2190 = vmul.f32 %v2104, %v2189
        %v2191 = vmul.f32 %v2105, %v2189
        %v2192 = vmul.f32 %v2106, %v2189
        %v2193 = vmul.f32 %v2107, %v2189
        %v2194 = vmul.f32 %v2108, %v2189
        %v2200 = vrot.slane %v2190, 1
        %v2201 = vrot.slane %v2191, 1
        %v2202 = vrot.slane %v2192, 1
        %v2203 = vrot.slane %v2193, 1
        %v2204 = vrot.slane %v2194, 1
        %v2210 = vadd.f32 %v2183, %v2200
        %v2211 = vadd.f32 %v2184, %v2201
        %v2212 = vadd.f32 %v2185, %v2202
        %v2213 = vadd.f32 %v2186, %v2203
        %v2214 = vadd.f32 %v2187, %v2204
        %s2215 = sld [smem:[#allocation4 + $0x42]]
        %v2216 = vstv %s2215
        %v2217 = vmul.f32 %v2104, %v2216
        %v2218 = vmul.f32 %v2105, %v2216
        %v2219 = vmul.f32 %v2106, %v2216
        %v2220 = vmul.f32 %v2107, %v2216
        %v2221 = vmul.f32 %v2108, %v2216
        %v2227 = vrot.slane %v2217, 2
        %v2228 = vrot.slane %v2218, 2
        %v2229 = vrot.slane %v2219, 2
        %v2230 = vrot.slane %v2220, 2
        %v2231 = vrot.slane %v2221, 2
        %v2237 = vadd.f32 %v2210, %v2227
        %v2238 = vadd.f32 %v2211, %v2228
        %v2239 = vadd.f32 %v2212, %v2229
        %v2240 = vadd.f32 %v2213, %v2230
        %v2241 = vadd.f32 %v2214, %v2231
        %s2242 = sld [smem:[#allocation4 + $0x41]]
        %v2243 = vstv %s2242
        %v2244 = vmul.f32 %v2105, %v2243
        %v2245 = vmul.f32 %v2106, %v2243
        %v2246 = vmul.f32 %v2107, %v2243
        %v2247 = vmul.f32 %v2108, %v2243
        %v2248 = vmul.f32 %v2109, %v2243
        %v2249 = vadd.f32 %v2237, %v2244
        %v2250 = vadd.f32 %v2238, %v2245
        %v2251 = vadd.f32 %v2239, %v2246
        %v2252 = vadd.f32 %v2240, %v2247
        %v2253 = vadd.f32 %v2241, %v2248
        %s2254 = sld [smem:[#allocation4 + $0x40]]
        %v2255 = vstv %s2254
        %v2256 = vmul.f32 %v2105, %v2255
        %v2257 = vmul.f32 %v2106, %v2255
        %v2258 = vmul.f32 %v2107, %v2255
        %v2259 = vmul.f32 %v2108, %v2255
        %v2260 = vmul.f32 %v2109, %v2255
        %v2266 = vrot.slane %v2256, 1
        %v2267 = vrot.slane %v2257, 1
        %v2268 = vrot.slane %v2258, 1
        %v2269 = vrot.slane %v2259, 1
        %v2270 = vrot.slane %v2260, 1
        %v2276 = vadd.f32 %v2249, %v2266
        %v2277 = vadd.f32 %v2250, %v2267
        %v2278 = vadd.f32 %v2251, %v2268
        %v2279 = vadd.f32 %v2252, %v2269
        %v2280 = vadd.f32 %v2253, %v2270
        %s2281 = sld [smem:[#allocation4 + $0x3f]]
        %v2282 = vstv %s2281
        %v2283 = vmul.f32 %v2105, %v2282
        %v2284 = vmul.f32 %v2106, %v2282
        %v2285 = vmul.f32 %v2107, %v2282
        %v2286 = vmul.f32 %v2108, %v2282
        %v2287 = vmul.f32 %v2109, %v2282
        %v2293 = vrot.slane %v2283, 2
        %v2294 = vrot.slane %v2284, 2
        %v2295 = vrot.slane %v2285, 2
        %v2296 = vrot.slane %v2286, 2
        %v2297 = vrot.slane %v2287, 2
        %v2303 = vadd.f32 %v2276, %v2293
        %v2304 = vadd.f32 %v2277, %v2294
        %v2305 = vadd.f32 %v2278, %v2295
        %v2306 = vadd.f32 %v2279, %v2296
        %v2307 = vadd.f32 %v2280, %v2297
        %v2308 = vtanh.pop %v2303
        %v2309 = vtanh.pop %v2304
        %v2310 = vtanh.pop %v2305
        %v2311 = vtanh.pop %v2306
        %v2312 = vtanh.pop %v2307
        %s2313 = scalar_lea.vmem %s634, 448 [#allocation3]
        %v2314 = vld [vmem:[%s2313] sm:$0x7f]
        %v2315 = vld [vmem:[%s2313 + $0x8] sm:$0x7f]
        %v2316 = vld [vmem:[%s2313 + $0x10] sm:$0x7f]
        %v2317 = vld [vmem:[%s2313 + $0x18] sm:$0x7f]
        %v2318 = vld [vmem:[%s2313 + $0x20] sm:$0x7f]
        %v2319 = vld [vmem:[%s2313 + $0x28] sm:$0x7f]
        %v2320 = vld [vmem:[%s2313 + $0x30] sm:$0x7f]
        %v2321 = vmul.f32 %v2314, %v669
        %v2322 = vmul.f32 %v2315, %v669
        %v2323 = vmul.f32 %v2316, %v669
        %v2324 = vmul.f32 %v2317, %v669
        %v2325 = vmul.f32 %v2318, %v669
        %v2326 = vadd.f32 %v660, %v2321
        %v2327 = vadd.f32 %v660, %v2322
        %v2328 = vadd.f32 %v660, %v2323
        %v2329 = vadd.f32 %v660, %v2324
        %v2330 = vadd.f32 %v660, %v2325
        %v2331 = vmul.f32 %v2314, %v681
        %v2332 = vmul.f32 %v2315, %v681
        %v2333 = vmul.f32 %v2316, %v681
        %v2334 = vmul.f32 %v2317, %v681
        %v2335 = vmul.f32 %v2318, %v681
        %v2341 = vrot.slane %v2331, 1
        %v2342 = vrot.slane %v2332, 1
        %v2343 = vrot.slane %v2333, 1
        %v2344 = vrot.slane %v2334, 1
        %v2345 = vrot.slane %v2335, 1
        %v2351 = vadd.f32 %v2326, %v2341
        %v2352 = vadd.f32 %v2327, %v2342
        %v2353 = vadd.f32 %v2328, %v2343
        %v2354 = vadd.f32 %v2329, %v2344
        %v2355 = vadd.f32 %v2330, %v2345
        %v2356 = vmul.f32 %v2314, %v708
        %v2357 = vmul.f32 %v2315, %v708
        %v2358 = vmul.f32 %v2316, %v708
        %v2359 = vmul.f32 %v2317, %v708
        %v2360 = vmul.f32 %v2318, %v708
        %v2366 = vrot.slane %v2356, 2
        %v2367 = vrot.slane %v2357, 2
        %v2368 = vrot.slane %v2358, 2
        %v2369 = vrot.slane %v2359, 2
        %v2370 = vrot.slane %v2360, 2
        %v2376 = vadd.f32 %v2351, %v2366
        %v2377 = vadd.f32 %v2352, %v2367
        %v2378 = vadd.f32 %v2353, %v2368
        %v2379 = vadd.f32 %v2354, %v2369
        %v2380 = vadd.f32 %v2355, %v2370
        %v2381 = vmul.f32 %v2315, %v735
        %v2382 = vmul.f32 %v2316, %v735
        %v2383 = vmul.f32 %v2317, %v735
        %v2384 = vmul.f32 %v2318, %v735
        %v2385 = vmul.f32 %v2319, %v735
        %v2386 = vadd.f32 %v2376, %v2381
        %v2387 = vadd.f32 %v2377, %v2382
        %v2388 = vadd.f32 %v2378, %v2383
        %v2389 = vadd.f32 %v2379, %v2384
        %v2390 = vadd.f32 %v2380, %v2385
        %v2391 = vmul.f32 %v2315, %v747
        %v2392 = vmul.f32 %v2316, %v747
        %v2393 = vmul.f32 %v2317, %v747
        %v2394 = vmul.f32 %v2318, %v747
        %v2395 = vmul.f32 %v2319, %v747
        %v2401 = vrot.slane %v2391, 1
        %v2402 = vrot.slane %v2392, 1
        %v2403 = vrot.slane %v2393, 1
        %v2404 = vrot.slane %v2394, 1
        %v2405 = vrot.slane %v2395, 1
        %v2411 = vadd.f32 %v2386, %v2401
        %v2412 = vadd.f32 %v2387, %v2402
        %v2413 = vadd.f32 %v2388, %v2403
        %v2414 = vadd.f32 %v2389, %v2404
        %v2415 = vadd.f32 %v2390, %v2405
        %v2416 = vmul.f32 %v2315, %v774
        %v2417 = vmul.f32 %v2316, %v774
        %v2418 = vmul.f32 %v2317, %v774
        %v2419 = vmul.f32 %v2318, %v774
        %v2420 = vmul.f32 %v2319, %v774
        %v2426 = vrot.slane %v2416, 2
        %v2427 = vrot.slane %v2417, 2
        %v2428 = vrot.slane %v2418, 2
        %v2429 = vrot.slane %v2419, 2
        %v2430 = vrot.slane %v2420, 2
        %v2436 = vadd.f32 %v2411, %v2426
        %v2437 = vadd.f32 %v2412, %v2427
        %v2438 = vadd.f32 %v2413, %v2428
        %v2439 = vadd.f32 %v2414, %v2429
        %v2440 = vadd.f32 %v2415, %v2430
        %v2441 = vmul.f32 %v2316, %v801
        %v2442 = vmul.f32 %v2317, %v801
        %v2443 = vmul.f32 %v2318, %v801
        %v2444 = vmul.f32 %v2319, %v801
        %v2445 = vmul.f32 %v2320, %v801
        %v2446 = vadd.f32 %v2436, %v2441
        %v2447 = vadd.f32 %v2437, %v2442
        %v2448 = vadd.f32 %v2438, %v2443
        %v2449 = vadd.f32 %v2439, %v2444
        %v2450 = vadd.f32 %v2440, %v2445
        %v2451 = vmul.f32 %v2316, %v813
        %v2452 = vmul.f32 %v2317, %v813
        %v2453 = vmul.f32 %v2318, %v813
        %v2454 = vmul.f32 %v2319, %v813
        %v2455 = vmul.f32 %v2320, %v813
        %v2461 = vrot.slane %v2451, 1
        %v2462 = vrot.slane %v2452, 1
        %v2463 = vrot.slane %v2453, 1
        %v2464 = vrot.slane %v2454, 1
        %v2465 = vrot.slane %v2455, 1
        %v2471 = vadd.f32 %v2446, %v2461
        %v2472 = vadd.f32 %v2447, %v2462
        %v2473 = vadd.f32 %v2448, %v2463
        %v2474 = vadd.f32 %v2449, %v2464
        %v2475 = vadd.f32 %v2450, %v2465
        %v2476 = vmul.f32 %v2316, %v840
        %v2477 = vmul.f32 %v2317, %v840
        %v2478 = vmul.f32 %v2318, %v840
        %v2479 = vmul.f32 %v2319, %v840
        %v2480 = vmul.f32 %v2320, %v840
        %v2486 = vrot.slane %v2476, 2
        %v2487 = vrot.slane %v2477, 2
        %v2488 = vrot.slane %v2478, 2
        %v2489 = vrot.slane %v2479, 2
        %v2490 = vrot.slane %v2480, 2
        %v2496 = vadd.f32 %v2471, %v2486
        %v2497 = vadd.f32 %v2472, %v2487
        %v2498 = vadd.f32 %v2473, %v2488
        %v2499 = vadd.f32 %v2474, %v2489
        %v2500 = vadd.f32 %v2475, %v2490
        %s2501 = scalar_lea.vmem %s634, 504 [#allocation3]
        %v2502 = vld [vmem:[%s2501] sm:$0x7f]
        %v2503 = vld [vmem:[%s2501 + $0x8] sm:$0x7f]
        %v2504 = vld [vmem:[%s2501 + $0x10] sm:$0x7f]
        %v2505 = vld [vmem:[%s2501 + $0x18] sm:$0x7f]
        %v2506 = vld [vmem:[%s2501 + $0x20] sm:$0x7f]
        %v2507 = vld [vmem:[%s2501 + $0x28] sm:$0x7f]
        %v2508 = vld [vmem:[%s2501 + $0x30] sm:$0x7f]
        %v2509 = vmul.f32 %v2502, %v875
        %v2510 = vmul.f32 %v2503, %v875
        %v2511 = vmul.f32 %v2504, %v875
        %v2512 = vmul.f32 %v2505, %v875
        %v2513 = vmul.f32 %v2506, %v875
        %v2514 = vadd.f32 %v2496, %v2509
        %v2515 = vadd.f32 %v2497, %v2510
        %v2516 = vadd.f32 %v2498, %v2511
        %v2517 = vadd.f32 %v2499, %v2512
        %v2518 = vadd.f32 %v2500, %v2513
        %v2519 = vmul.f32 %v2502, %v887
        %v2520 = vmul.f32 %v2503, %v887
        %v2521 = vmul.f32 %v2504, %v887
        %v2522 = vmul.f32 %v2505, %v887
        %v2523 = vmul.f32 %v2506, %v887
        %v2529 = vrot.slane %v2519, 1
        %v2530 = vrot.slane %v2520, 1
        %v2531 = vrot.slane %v2521, 1
        %v2532 = vrot.slane %v2522, 1
        %v2533 = vrot.slane %v2523, 1
        %v2539 = vadd.f32 %v2514, %v2529
        %v2540 = vadd.f32 %v2515, %v2530
        %v2541 = vadd.f32 %v2516, %v2531
        %v2542 = vadd.f32 %v2517, %v2532
        %v2543 = vadd.f32 %v2518, %v2533
        %v2544 = vmul.f32 %v2502, %v914
        %v2545 = vmul.f32 %v2503, %v914
        %v2546 = vmul.f32 %v2504, %v914
        %v2547 = vmul.f32 %v2505, %v914
        %v2548 = vmul.f32 %v2506, %v914
        %v2554 = vrot.slane %v2544, 2
        %v2555 = vrot.slane %v2545, 2
        %v2556 = vrot.slane %v2546, 2
        %v2557 = vrot.slane %v2547, 2
        %v2558 = vrot.slane %v2548, 2
        %v2564 = vadd.f32 %v2539, %v2554
        %v2565 = vadd.f32 %v2540, %v2555
        %v2566 = vadd.f32 %v2541, %v2556
        %v2567 = vadd.f32 %v2542, %v2557
        %v2568 = vadd.f32 %v2543, %v2558
        %v2569 = vmul.f32 %v2503, %v941
        %v2570 = vmul.f32 %v2504, %v941
        %v2571 = vmul.f32 %v2505, %v941
        %v2572 = vmul.f32 %v2506, %v941
        %v2573 = vmul.f32 %v2507, %v941
        %v2574 = vadd.f32 %v2564, %v2569
        %v2575 = vadd.f32 %v2565, %v2570
        %v2576 = vadd.f32 %v2566, %v2571
        %v2577 = vadd.f32 %v2567, %v2572
        %v2578 = vadd.f32 %v2568, %v2573
        %v2579 = vmul.f32 %v2503, %v953
        %v2580 = vmul.f32 %v2504, %v953
        %v2581 = vmul.f32 %v2505, %v953
        %v2582 = vmul.f32 %v2506, %v953
        %v2583 = vmul.f32 %v2507, %v953
        %v2589 = vrot.slane %v2579, 1
        %v2590 = vrot.slane %v2580, 1
        %v2591 = vrot.slane %v2581, 1
        %v2592 = vrot.slane %v2582, 1
        %v2593 = vrot.slane %v2583, 1
        %v2599 = vadd.f32 %v2574, %v2589
        %v2600 = vadd.f32 %v2575, %v2590
        %v2601 = vadd.f32 %v2576, %v2591
        %v2602 = vadd.f32 %v2577, %v2592
        %v2603 = vadd.f32 %v2578, %v2593
        %v2604 = vmul.f32 %v2503, %v980
        %v2605 = vmul.f32 %v2504, %v980
        %v2606 = vmul.f32 %v2505, %v980
        %v2607 = vmul.f32 %v2506, %v980
        %v2608 = vmul.f32 %v2507, %v980
        %v2614 = vrot.slane %v2604, 2
        %v2615 = vrot.slane %v2605, 2
        %v2616 = vrot.slane %v2606, 2
        %v2617 = vrot.slane %v2607, 2
        %v2618 = vrot.slane %v2608, 2
        %v2624 = vadd.f32 %v2599, %v2614
        %v2625 = vadd.f32 %v2600, %v2615
        %v2626 = vadd.f32 %v2601, %v2616
        %v2627 = vadd.f32 %v2602, %v2617
        %v2628 = vadd.f32 %v2603, %v2618
        %v2629 = vmul.f32 %v2504, %v1007
        %v2630 = vmul.f32 %v2505, %v1007
        %v2631 = vmul.f32 %v2506, %v1007
        %v2632 = vmul.f32 %v2507, %v1007
        %v2633 = vmul.f32 %v2508, %v1007
        %v2634 = vadd.f32 %v2624, %v2629
        %v2635 = vadd.f32 %v2625, %v2630
        %v2636 = vadd.f32 %v2626, %v2631
        %v2637 = vadd.f32 %v2627, %v2632
        %v2638 = vadd.f32 %v2628, %v2633
        %v2639 = vmul.f32 %v2504, %v1019
        %v2640 = vmul.f32 %v2505, %v1019
        %v2641 = vmul.f32 %v2506, %v1019
        %v2642 = vmul.f32 %v2507, %v1019
        %v2643 = vmul.f32 %v2508, %v1019
        %v2649 = vrot.slane %v2639, 1
        %v2650 = vrot.slane %v2640, 1
        %v2651 = vrot.slane %v2641, 1
        %v2652 = vrot.slane %v2642, 1
        %v2653 = vrot.slane %v2643, 1
        %v2659 = vadd.f32 %v2634, %v2649
        %v2660 = vadd.f32 %v2635, %v2650
        %v2661 = vadd.f32 %v2636, %v2651
        %v2662 = vadd.f32 %v2637, %v2652
        %v2663 = vadd.f32 %v2638, %v2653
        %v2664 = vmul.f32 %v2504, %v1046
        %v2665 = vmul.f32 %v2505, %v1046
        %v2666 = vmul.f32 %v2506, %v1046
        %v2667 = vmul.f32 %v2507, %v1046
        %v2668 = vmul.f32 %v2508, %v1046
        %v2674 = vrot.slane %v2664, 2
        %v2675 = vrot.slane %v2665, 2
        %v2676 = vrot.slane %v2666, 2
        %v2677 = vrot.slane %v2667, 2
        %v2678 = vrot.slane %v2668, 2
        %v2684 = vadd.f32 %v2659, %v2674
        %v2685 = vadd.f32 %v2660, %v2675
        %v2686 = vadd.f32 %v2661, %v2676
        %v2687 = vadd.f32 %v2662, %v2677
        %v2688 = vadd.f32 %v2663, %v2678
        %s2689 = scalar_lea.vmem %s634, 560 [#allocation3]
        %v2690 = vld [vmem:[%s2689] sm:$0x7f]
        %v2691 = vld [vmem:[%s2689 + $0x8] sm:$0x7f]
        %v2692 = vld [vmem:[%s2689 + $0x10] sm:$0x7f]
        %v2693 = vld [vmem:[%s2689 + $0x18] sm:$0x7f]
        %v2694 = vld [vmem:[%s2689 + $0x20] sm:$0x7f]
        %v2695 = vld [vmem:[%s2689 + $0x28] sm:$0x7f]
        %v2696 = vld [vmem:[%s2689 + $0x30] sm:$0x7f]
        %v2697 = vmul.f32 %v2690, %v1081
        %v2698 = vmul.f32 %v2691, %v1081
        %v2699 = vmul.f32 %v2692, %v1081
        %v2700 = vmul.f32 %v2693, %v1081
        %v2701 = vmul.f32 %v2694, %v1081
        %v2702 = vadd.f32 %v2684, %v2697
        %v2703 = vadd.f32 %v2685, %v2698
        %v2704 = vadd.f32 %v2686, %v2699
        %v2705 = vadd.f32 %v2687, %v2700
        %v2706 = vadd.f32 %v2688, %v2701
        %v2707 = vmul.f32 %v2690, %v1093
        %v2708 = vmul.f32 %v2691, %v1093
        %v2709 = vmul.f32 %v2692, %v1093
        %v2710 = vmul.f32 %v2693, %v1093
        %v2711 = vmul.f32 %v2694, %v1093
        %v2717 = vrot.slane %v2707, 1
        %v2718 = vrot.slane %v2708, 1
        %v2719 = vrot.slane %v2709, 1
        %v2720 = vrot.slane %v2710, 1
        %v2721 = vrot.slane %v2711, 1
        %v2727 = vadd.f32 %v2702, %v2717
        %v2728 = vadd.f32 %v2703, %v2718
        %v2729 = vadd.f32 %v2704, %v2719
        %v2730 = vadd.f32 %v2705, %v2720
        %v2731 = vadd.f32 %v2706, %v2721
        %v2732 = vmul.f32 %v2690, %v1120
        %v2733 = vmul.f32 %v2691, %v1120
        %v2734 = vmul.f32 %v2692, %v1120
        %v2735 = vmul.f32 %v2693, %v1120
        %v2736 = vmul.f32 %v2694, %v1120
        %v2742 = vrot.slane %v2732, 2
        %v2743 = vrot.slane %v2733, 2
        %v2744 = vrot.slane %v2734, 2
        %v2745 = vrot.slane %v2735, 2
        %v2746 = vrot.slane %v2736, 2
        %v2752 = vadd.f32 %v2727, %v2742
        %v2753 = vadd.f32 %v2728, %v2743
        %v2754 = vadd.f32 %v2729, %v2744
        %v2755 = vadd.f32 %v2730, %v2745
        %v2756 = vadd.f32 %v2731, %v2746
        %v2757 = vmul.f32 %v2691, %v1147
        %v2758 = vmul.f32 %v2692, %v1147
        %v2759 = vmul.f32 %v2693, %v1147
        %v2760 = vmul.f32 %v2694, %v1147
        %v2761 = vmul.f32 %v2695, %v1147
        %v2762 = vadd.f32 %v2752, %v2757
        %v2763 = vadd.f32 %v2753, %v2758
        %v2764 = vadd.f32 %v2754, %v2759
        %v2765 = vadd.f32 %v2755, %v2760
        %v2766 = vadd.f32 %v2756, %v2761
        %v2767 = vmul.f32 %v2691, %v1159
        %v2768 = vmul.f32 %v2692, %v1159
        %v2769 = vmul.f32 %v2693, %v1159
        %v2770 = vmul.f32 %v2694, %v1159
        %v2771 = vmul.f32 %v2695, %v1159
        %v2777 = vrot.slane %v2767, 1
        %v2778 = vrot.slane %v2768, 1
        %v2779 = vrot.slane %v2769, 1
        %v2780 = vrot.slane %v2770, 1
        %v2781 = vrot.slane %v2771, 1
        %v2787 = vadd.f32 %v2762, %v2777
        %v2788 = vadd.f32 %v2763, %v2778
        %v2789 = vadd.f32 %v2764, %v2779
        %v2790 = vadd.f32 %v2765, %v2780
        %v2791 = vadd.f32 %v2766, %v2781
        %v2792 = vmul.f32 %v2691, %v1186
        %v2793 = vmul.f32 %v2692, %v1186
        %v2794 = vmul.f32 %v2693, %v1186
        %v2795 = vmul.f32 %v2694, %v1186
        %v2796 = vmul.f32 %v2695, %v1186
        %v2802 = vrot.slane %v2792, 2
        %v2803 = vrot.slane %v2793, 2
        %v2804 = vrot.slane %v2794, 2
        %v2805 = vrot.slane %v2795, 2
        %v2806 = vrot.slane %v2796, 2
        %v2812 = vadd.f32 %v2787, %v2802
        %v2813 = vadd.f32 %v2788, %v2803
        %v2814 = vadd.f32 %v2789, %v2804
        %v2815 = vadd.f32 %v2790, %v2805
        %v2816 = vadd.f32 %v2791, %v2806
        %v2817 = vmul.f32 %v2692, %v1213
        %v2818 = vmul.f32 %v2693, %v1213
        %v2819 = vmul.f32 %v2694, %v1213
        %v2820 = vmul.f32 %v2695, %v1213
        %v2821 = vmul.f32 %v2696, %v1213
        %v2822 = vadd.f32 %v2812, %v2817
        %v2823 = vadd.f32 %v2813, %v2818
        %v2824 = vadd.f32 %v2814, %v2819
        %v2825 = vadd.f32 %v2815, %v2820
        %v2826 = vadd.f32 %v2816, %v2821
        %v2827 = vmul.f32 %v2692, %v1225
        %v2828 = vmul.f32 %v2693, %v1225
        %v2829 = vmul.f32 %v2694, %v1225
        %v2830 = vmul.f32 %v2695, %v1225
        %v2831 = vmul.f32 %v2696, %v1225
        %v2837 = vrot.slane %v2827, 1
        %v2838 = vrot.slane %v2828, 1
        %v2839 = vrot.slane %v2829, 1
        %v2840 = vrot.slane %v2830, 1
        %v2841 = vrot.slane %v2831, 1
        %v2847 = vadd.f32 %v2822, %v2837
        %v2848 = vadd.f32 %v2823, %v2838
        %v2849 = vadd.f32 %v2824, %v2839
        %v2850 = vadd.f32 %v2825, %v2840
        %v2851 = vadd.f32 %v2826, %v2841
        %v2852 = vmul.f32 %v2692, %v1252
        %v2853 = vmul.f32 %v2693, %v1252
        %v2854 = vmul.f32 %v2694, %v1252
        %v2855 = vmul.f32 %v2695, %v1252
        %v2856 = vmul.f32 %v2696, %v1252
        %v2862 = vrot.slane %v2852, 2
        %v2863 = vrot.slane %v2853, 2
        %v2864 = vrot.slane %v2854, 2
        %v2865 = vrot.slane %v2855, 2
        %v2866 = vrot.slane %v2856, 2
        %v2872 = vadd.f32 %v2847, %v2862
        %v2873 = vadd.f32 %v2848, %v2863
        %v2874 = vadd.f32 %v2849, %v2864
        %v2875 = vadd.f32 %v2850, %v2865
        %v2876 = vadd.f32 %v2851, %v2866
        %s2877 = scalar_lea.vmem %s634, 616 [#allocation3]
        %v2878 = vld [vmem:[%s2877] sm:$0x7f]
        %v2879 = vld [vmem:[%s2877 + $0x8] sm:$0x7f]
        %v2880 = vld [vmem:[%s2877 + $0x10] sm:$0x7f]
        %v2881 = vld [vmem:[%s2877 + $0x18] sm:$0x7f]
        %v2882 = vld [vmem:[%s2877 + $0x20] sm:$0x7f]
        %v2883 = vld [vmem:[%s2877 + $0x28] sm:$0x7f]
        %v2884 = vld [vmem:[%s2877 + $0x30] sm:$0x7f]
        %v2885 = vmul.f32 %v2878, %v1287
        %v2886 = vmul.f32 %v2879, %v1287
        %v2887 = vmul.f32 %v2880, %v1287
        %v2888 = vmul.f32 %v2881, %v1287
        %v2889 = vmul.f32 %v2882, %v1287
        %v2890 = vadd.f32 %v2872, %v2885
        %v2891 = vadd.f32 %v2873, %v2886
        %v2892 = vadd.f32 %v2874, %v2887
        %v2893 = vadd.f32 %v2875, %v2888
        %v2894 = vadd.f32 %v2876, %v2889
        %v2895 = vmul.f32 %v2878, %v1299
        %v2896 = vmul.f32 %v2879, %v1299
        %v2897 = vmul.f32 %v2880, %v1299
        %v2898 = vmul.f32 %v2881, %v1299
        %v2899 = vmul.f32 %v2882, %v1299
        %v2905 = vrot.slane %v2895, 1
        %v2906 = vrot.slane %v2896, 1
        %v2907 = vrot.slane %v2897, 1
        %v2908 = vrot.slane %v2898, 1
        %v2909 = vrot.slane %v2899, 1
        %v2915 = vadd.f32 %v2890, %v2905
        %v2916 = vadd.f32 %v2891, %v2906
        %v2917 = vadd.f32 %v2892, %v2907
        %v2918 = vadd.f32 %v2893, %v2908
        %v2919 = vadd.f32 %v2894, %v2909
        %v2920 = vmul.f32 %v2878, %v1326
        %v2921 = vmul.f32 %v2879, %v1326
        %v2922 = vmul.f32 %v2880, %v1326
        %v2923 = vmul.f32 %v2881, %v1326
        %v2924 = vmul.f32 %v2882, %v1326
        %v2930 = vrot.slane %v2920, 2
        %v2931 = vrot.slane %v2921, 2
        %v2932 = vrot.slane %v2922, 2
        %v2933 = vrot.slane %v2923, 2
        %v2934 = vrot.slane %v2924, 2
        %v2940 = vadd.f32 %v2915, %v2930
        %v2941 = vadd.f32 %v2916, %v2931
        %v2942 = vadd.f32 %v2917, %v2932
        %v2943 = vadd.f32 %v2918, %v2933
        %v2944 = vadd.f32 %v2919, %v2934
        %v2945 = vmul.f32 %v2879, %v1353
        %v2946 = vmul.f32 %v2880, %v1353
        %v2947 = vmul.f32 %v2881, %v1353
        %v2948 = vmul.f32 %v2882, %v1353
        %v2949 = vmul.f32 %v2883, %v1353
        %v2950 = vadd.f32 %v2940, %v2945
        %v2951 = vadd.f32 %v2941, %v2946
        %v2952 = vadd.f32 %v2942, %v2947
        %v2953 = vadd.f32 %v2943, %v2948
        %v2954 = vadd.f32 %v2944, %v2949
        %v2955 = vmul.f32 %v2879, %v1365
        %v2956 = vmul.f32 %v2880, %v1365
        %v2957 = vmul.f32 %v2881, %v1365
        %v2958 = vmul.f32 %v2882, %v1365
        %v2959 = vmul.f32 %v2883, %v1365
        %v2965 = vrot.slane %v2955, 1
        %v2966 = vrot.slane %v2956, 1
        %v2967 = vrot.slane %v2957, 1
        %v2968 = vrot.slane %v2958, 1
        %v2969 = vrot.slane %v2959, 1
        %v2975 = vadd.f32 %v2950, %v2965
        %v2976 = vadd.f32 %v2951, %v2966
        %v2977 = vadd.f32 %v2952, %v2967
        %v2978 = vadd.f32 %v2953, %v2968
        %v2979 = vadd.f32 %v2954, %v2969
        %v2980 = vmul.f32 %v2879, %v1392
        %v2981 = vmul.f32 %v2880, %v1392
        %v2982 = vmul.f32 %v2881, %v1392
        %v2983 = vmul.f32 %v2882, %v1392
        %v2984 = vmul.f32 %v2883, %v1392
        %v2990 = vrot.slane %v2980, 2
        %v2991 = vrot.slane %v2981, 2
        %v2992 = vrot.slane %v2982, 2
        %v2993 = vrot.slane %v2983, 2
        %v2994 = vrot.slane %v2984, 2
        %v3000 = vadd.f32 %v2975, %v2990
        %v3001 = vadd.f32 %v2976, %v2991
        %v3002 = vadd.f32 %v2977, %v2992
        %v3003 = vadd.f32 %v2978, %v2993
        %v3004 = vadd.f32 %v2979, %v2994
        %v3005 = vmul.f32 %v2880, %v1419
        %v3006 = vmul.f32 %v2881, %v1419
        %v3007 = vmul.f32 %v2882, %v1419
        %v3008 = vmul.f32 %v2883, %v1419
        %v3009 = vmul.f32 %v2884, %v1419
        %v3010 = vadd.f32 %v3000, %v3005
        %v3011 = vadd.f32 %v3001, %v3006
        %v3012 = vadd.f32 %v3002, %v3007
        %v3013 = vadd.f32 %v3003, %v3008
        %v3014 = vadd.f32 %v3004, %v3009
        %v3015 = vmul.f32 %v2880, %v1431
        %v3016 = vmul.f32 %v2881, %v1431
        %v3017 = vmul.f32 %v2882, %v1431
        %v3018 = vmul.f32 %v2883, %v1431
        %v3019 = vmul.f32 %v2884, %v1431
        %v3025 = vrot.slane %v3015, 1
        %v3026 = vrot.slane %v3016, 1
        %v3027 = vrot.slane %v3017, 1
        %v3028 = vrot.slane %v3018, 1
        %v3029 = vrot.slane %v3019, 1
        %v3035 = vadd.f32 %v3010, %v3025
        %v3036 = vadd.f32 %v3011, %v3026
        %v3037 = vadd.f32 %v3012, %v3027
        %v3038 = vadd.f32 %v3013, %v3028
        %v3039 = vadd.f32 %v3014, %v3029
        %v3040 = vmul.f32 %v2880, %v1458
        %v3041 = vmul.f32 %v2881, %v1458
        %v3042 = vmul.f32 %v2882, %v1458
        %v3043 = vmul.f32 %v2883, %v1458
        %v3044 = vmul.f32 %v2884, %v1458
        %v3050 = vrot.slane %v3040, 2
        %v3051 = vrot.slane %v3041, 2
        %v3052 = vrot.slane %v3042, 2
        %v3053 = vrot.slane %v3043, 2
        %v3054 = vrot.slane %v3044, 2
        %v3060 = vadd.f32 %v3035, %v3050
        %v3061 = vadd.f32 %v3036, %v3051
        %v3062 = vadd.f32 %v3037, %v3052
        %v3063 = vadd.f32 %v3038, %v3053
        %v3064 = vadd.f32 %v3039, %v3054
        %s3065 = scalar_lea.vmem %s634, 672 [#allocation3]
        %v3066 = vld [vmem:[%s3065] sm:$0x7f]
        %v3067 = vld [vmem:[%s3065 + $0x8] sm:$0x7f]
        %v3068 = vld [vmem:[%s3065 + $0x10] sm:$0x7f]
        %v3069 = vld [vmem:[%s3065 + $0x18] sm:$0x7f]
        %v3070 = vld [vmem:[%s3065 + $0x20] sm:$0x7f]
        %v3071 = vld [vmem:[%s3065 + $0x28] sm:$0x7f]
        %v3072 = vld [vmem:[%s3065 + $0x30] sm:$0x7f]
        %v3073 = vmul.f32 %v3066, %v1493
        %v3074 = vmul.f32 %v3067, %v1493
        %v3075 = vmul.f32 %v3068, %v1493
        %v3076 = vmul.f32 %v3069, %v1493
        %v3077 = vmul.f32 %v3070, %v1493
        %v3078 = vadd.f32 %v3060, %v3073
        %v3079 = vadd.f32 %v3061, %v3074
        %v3080 = vadd.f32 %v3062, %v3075
        %v3081 = vadd.f32 %v3063, %v3076
        %v3082 = vadd.f32 %v3064, %v3077
        %v3083 = vmul.f32 %v3066, %v1505
        %v3084 = vmul.f32 %v3067, %v1505
        %v3085 = vmul.f32 %v3068, %v1505
        %v3086 = vmul.f32 %v3069, %v1505
        %v3087 = vmul.f32 %v3070, %v1505
        %v3093 = vrot.slane %v3083, 1
        %v3094 = vrot.slane %v3084, 1
        %v3095 = vrot.slane %v3085, 1
        %v3096 = vrot.slane %v3086, 1
        %v3097 = vrot.slane %v3087, 1
        %v3103 = vadd.f32 %v3078, %v3093
        %v3104 = vadd.f32 %v3079, %v3094
        %v3105 = vadd.f32 %v3080, %v3095
        %v3106 = vadd.f32 %v3081, %v3096
        %v3107 = vadd.f32 %v3082, %v3097
        %v3108 = vmul.f32 %v3066, %v1532
        %v3109 = vmul.f32 %v3067, %v1532
        %v3110 = vmul.f32 %v3068, %v1532
        %v3111 = vmul.f32 %v3069, %v1532
        %v3112 = vmul.f32 %v3070, %v1532
        %v3118 = vrot.slane %v3108, 2
        %v3119 = vrot.slane %v3109, 2
        %v3120 = vrot.slane %v3110, 2
        %v3121 = vrot.slane %v3111, 2
        %v3122 = vrot.slane %v3112, 2
        %v3128 = vadd.f32 %v3103, %v3118
        %v3129 = vadd.f32 %v3104, %v3119
        %v3130 = vadd.f32 %v3105, %v3120
        %v3131 = vadd.f32 %v3106, %v3121
        %v3132 = vadd.f32 %v3107, %v3122
        %v3133 = vmul.f32 %v3067, %v1559
        %v3134 = vmul.f32 %v3068, %v1559
        %v3135 = vmul.f32 %v3069, %v1559
        %v3136 = vmul.f32 %v3070, %v1559
        %v3137 = vmul.f32 %v3071, %v1559
        %v3138 = vadd.f32 %v3128, %v3133
        %v3139 = vadd.f32 %v3129, %v3134
        %v3140 = vadd.f32 %v3130, %v3135
        %v3141 = vadd.f32 %v3131, %v3136
        %v3142 = vadd.f32 %v3132, %v3137
        %v3143 = vmul.f32 %v3067, %v1571
        %v3144 = vmul.f32 %v3068, %v1571
        %v3145 = vmul.f32 %v3069, %v1571
        %v3146 = vmul.f32 %v3070, %v1571
        %v3147 = vmul.f32 %v3071, %v1571
        %v3153 = vrot.slane %v3143, 1
        %v3154 = vrot.slane %v3144, 1
        %v3155 = vrot.slane %v3145, 1
        %v3156 = vrot.slane %v3146, 1
        %v3157 = vrot.slane %v3147, 1
        %v3163 = vadd.f32 %v3138, %v3153
        %v3164 = vadd.f32 %v3139, %v3154
        %v3165 = vadd.f32 %v3140, %v3155
        %v3166 = vadd.f32 %v3141, %v3156
        %v3167 = vadd.f32 %v3142, %v3157
        %v3168 = vmul.f32 %v3067, %v1598
        %v3169 = vmul.f32 %v3068, %v1598
        %v3170 = vmul.f32 %v3069, %v1598
        %v3171 = vmul.f32 %v3070, %v1598
        %v3172 = vmul.f32 %v3071, %v1598
        %v3178 = vrot.slane %v3168, 2
        %v3179 = vrot.slane %v3169, 2
        %v3180 = vrot.slane %v3170, 2
        %v3181 = vrot.slane %v3171, 2
        %v3182 = vrot.slane %v3172, 2
        %v3188 = vadd.f32 %v3163, %v3178
        %v3189 = vadd.f32 %v3164, %v3179
        %v3190 = vadd.f32 %v3165, %v3180
        %v3191 = vadd.f32 %v3166, %v3181
        %v3192 = vadd.f32 %v3167, %v3182
        %v3193 = vmul.f32 %v3068, %v1625
        %v3194 = vmul.f32 %v3069, %v1625
        %v3195 = vmul.f32 %v3070, %v1625
        %v3196 = vmul.f32 %v3071, %v1625
        %v3197 = vmul.f32 %v3072, %v1625
        %v3198 = vadd.f32 %v3188, %v3193
        %v3199 = vadd.f32 %v3189, %v3194
        %v3200 = vadd.f32 %v3190, %v3195
        %v3201 = vadd.f32 %v3191, %v3196
        %v3202 = vadd.f32 %v3192, %v3197
        %v3203 = vmul.f32 %v3068, %v1637
        %v3204 = vmul.f32 %v3069, %v1637
        %v3205 = vmul.f32 %v3070, %v1637
        %v3206 = vmul.f32 %v3071, %v1637
        %v3207 = vmul.f32 %v3072, %v1637
        %v3213 = vrot.slane %v3203, 1
        %v3214 = vrot.slane %v3204, 1
        %v3215 = vrot.slane %v3205, 1
        %v3216 = vrot.slane %v3206, 1
        %v3217 = vrot.slane %v3207, 1
        %v3223 = vadd.f32 %v3198, %v3213
        %v3224 = vadd.f32 %v3199, %v3214
        %v3225 = vadd.f32 %v3200, %v3215
        %v3226 = vadd.f32 %v3201, %v3216
        %v3227 = vadd.f32 %v3202, %v3217
        %v3228 = vmul.f32 %v3068, %v1664
        %v3229 = vmul.f32 %v3069, %v1664
        %v3230 = vmul.f32 %v3070, %v1664
        %v3231 = vmul.f32 %v3071, %v1664
        %v3232 = vmul.f32 %v3072, %v1664
        %v3238 = vrot.slane %v3228, 2
        %v3239 = vrot.slane %v3229, 2
        %v3240 = vrot.slane %v3230, 2
        %v3241 = vrot.slane %v3231, 2
        %v3242 = vrot.slane %v3232, 2
        %v3248 = vadd.f32 %v3223, %v3238
        %v3249 = vadd.f32 %v3224, %v3239
        %v3250 = vadd.f32 %v3225, %v3240
        %v3251 = vadd.f32 %v3226, %v3241
        %v3252 = vadd.f32 %v3227, %v3242
        %s3253 = scalar_lea.vmem %s634, 728 [#allocation3]
        %v3254 = vld [vmem:[%s3253] sm:$0x7f]
        %v3255 = vld [vmem:[%s3253 + $0x8] sm:$0x7f]
        %v3256 = vld [vmem:[%s3253 + $0x10] sm:$0x7f]
        %v3257 = vld [vmem:[%s3253 + $0x18] sm:$0x7f]
        %v3258 = vld [vmem:[%s3253 + $0x20] sm:$0x7f]
        %v3259 = vld [vmem:[%s3253 + $0x28] sm:$0x7f]
        %v3260 = vld [vmem:[%s3253 + $0x30] sm:$0x7f]
        %v3261 = vmul.f32 %v3254, %v1699
        %v3262 = vmul.f32 %v3255, %v1699
        %v3263 = vmul.f32 %v3256, %v1699
        %v3264 = vmul.f32 %v3257, %v1699
        %v3265 = vmul.f32 %v3258, %v1699
        %v3266 = vadd.f32 %v3248, %v3261
        %v3267 = vadd.f32 %v3249, %v3262
        %v3268 = vadd.f32 %v3250, %v3263
        %v3269 = vadd.f32 %v3251, %v3264
        %v3270 = vadd.f32 %v3252, %v3265
        %v3271 = vmul.f32 %v3254, %v1711
        %v3272 = vmul.f32 %v3255, %v1711
        %v3273 = vmul.f32 %v3256, %v1711
        %v3274 = vmul.f32 %v3257, %v1711
        %v3275 = vmul.f32 %v3258, %v1711
        %v3281 = vrot.slane %v3271, 1
        %v3282 = vrot.slane %v3272, 1
        %v3283 = vrot.slane %v3273, 1
        %v3284 = vrot.slane %v3274, 1
        %v3285 = vrot.slane %v3275, 1
        %v3291 = vadd.f32 %v3266, %v3281
        %v3292 = vadd.f32 %v3267, %v3282
        %v3293 = vadd.f32 %v3268, %v3283
        %v3294 = vadd.f32 %v3269, %v3284
        %v3295 = vadd.f32 %v3270, %v3285
        %v3296 = vmul.f32 %v3254, %v1738
        %v3297 = vmul.f32 %v3255, %v1738
        %v3298 = vmul.f32 %v3256, %v1738
        %v3299 = vmul.f32 %v3257, %v1738
        %v3300 = vmul.f32 %v3258, %v1738
        %v3306 = vrot.slane %v3296, 2
        %v3307 = vrot.slane %v3297, 2
        %v3308 = vrot.slane %v3298, 2
        %v3309 = vrot.slane %v3299, 2
        %v3310 = vrot.slane %v3300, 2
        %v3316 = vadd.f32 %v3291, %v3306
        %v3317 = vadd.f32 %v3292, %v3307
        %v3318 = vadd.f32 %v3293, %v3308
        %v3319 = vadd.f32 %v3294, %v3309
        %v3320 = vadd.f32 %v3295, %v3310
        %v3321 = vmul.f32 %v3255, %v1765
        %v3322 = vmul.f32 %v3256, %v1765
        %v3323 = vmul.f32 %v3257, %v1765
        %v3324 = vmul.f32 %v3258, %v1765
        %v3325 = vmul.f32 %v3259, %v1765
        %v3326 = vadd.f32 %v3316, %v3321
        %v3327 = vadd.f32 %v3317, %v3322
        %v3328 = vadd.f32 %v3318, %v3323
        %v3329 = vadd.f32 %v3319, %v3324
        %v3330 = vadd.f32 %v3320, %v3325
        %v3331 = vmul.f32 %v3255, %v1777
        %v3332 = vmul.f32 %v3256, %v1777
        %v3333 = vmul.f32 %v3257, %v1777
        %v3334 = vmul.f32 %v3258, %v1777
        %v3335 = vmul.f32 %v3259, %v1777
        %v3341 = vrot.slane %v3331, 1
        %v3342 = vrot.slane %v3332, 1
        %v3343 = vrot.slane %v3333, 1
        %v3344 = vrot.slane %v3334, 1
        %v3345 = vrot.slane %v3335, 1
        %v3351 = vadd.f32 %v3326, %v3341
        %v3352 = vadd.f32 %v3327, %v3342
        %v3353 = vadd.f32 %v3328, %v3343
        %v3354 = vadd.f32 %v3329, %v3344
        %v3355 = vadd.f32 %v3330, %v3345
        %v3356 = vmul.f32 %v3255, %v1804
        %v3357 = vmul.f32 %v3256, %v1804
        %v3358 = vmul.f32 %v3257, %v1804
        %v3359 = vmul.f32 %v3258, %v1804
        %v3360 = vmul.f32 %v3259, %v1804
        %v3366 = vrot.slane %v3356, 2
        %v3367 = vrot.slane %v3357, 2
        %v3368 = vrot.slane %v3358, 2
        %v3369 = vrot.slane %v3359, 2
        %v3370 = vrot.slane %v3360, 2
        %v3376 = vadd.f32 %v3351, %v3366
        %v3377 = vadd.f32 %v3352, %v3367
        %v3378 = vadd.f32 %v3353, %v3368
        %v3379 = vadd.f32 %v3354, %v3369
        %v3380 = vadd.f32 %v3355, %v3370
        %v3381 = vmul.f32 %v3256, %v1831
        %v3382 = vmul.f32 %v3257, %v1831
        %v3383 = vmul.f32 %v3258, %v1831
        %v3384 = vmul.f32 %v3259, %v1831
        %v3385 = vmul.f32 %v3260, %v1831
        %v3386 = vadd.f32 %v3376, %v3381
        %v3387 = vadd.f32 %v3377, %v3382
        %v3388 = vadd.f32 %v3378, %v3383
        %v3389 = vadd.f32 %v3379, %v3384
        %v3390 = vadd.f32 %v3380, %v3385
        %v3391 = vmul.f32 %v3256, %v1843
        %v3392 = vmul.f32 %v3257, %v1843
        %v3393 = vmul.f32 %v3258, %v1843
        %v3394 = vmul.f32 %v3259, %v1843
        %v3395 = vmul.f32 %v3260, %v1843
        %v3401 = vrot.slane %v3391, 1
        %v3402 = vrot.slane %v3392, 1
        %v3403 = vrot.slane %v3393, 1
        %v3404 = vrot.slane %v3394, 1
        %v3405 = vrot.slane %v3395, 1
        %v3411 = vadd.f32 %v3386, %v3401
        %v3412 = vadd.f32 %v3387, %v3402
        %v3413 = vadd.f32 %v3388, %v3403
        %v3414 = vadd.f32 %v3389, %v3404
        %v3415 = vadd.f32 %v3390, %v3405
        %v3416 = vmul.f32 %v3256, %v1870
        %v3417 = vmul.f32 %v3257, %v1870
        %v3418 = vmul.f32 %v3258, %v1870
        %v3419 = vmul.f32 %v3259, %v1870
        %v3420 = vmul.f32 %v3260, %v1870
        %v3426 = vrot.slane %v3416, 2
        %v3427 = vrot.slane %v3417, 2
        %v3428 = vrot.slane %v3418, 2
        %v3429 = vrot.slane %v3419, 2
        %v3430 = vrot.slane %v3420, 2
        %v3436 = vadd.f32 %v3411, %v3426
        %v3437 = vadd.f32 %v3412, %v3427
        %v3438 = vadd.f32 %v3413, %v3428
        %v3439 = vadd.f32 %v3414, %v3429
        %v3440 = vadd.f32 %v3415, %v3430
        %s3441 = scalar_lea.vmem %s634, 784 [#allocation3]
        %v3442 = vld [vmem:[%s3441] sm:$0x7f]
        %v3443 = vld [vmem:[%s3441 + $0x8] sm:$0x7f]
        %v3444 = vld [vmem:[%s3441 + $0x10] sm:$0x7f]
        %v3445 = vld [vmem:[%s3441 + $0x18] sm:$0x7f]
        %v3446 = vld [vmem:[%s3441 + $0x20] sm:$0x7f]
        %v3447 = vld [vmem:[%s3441 + $0x28] sm:$0x7f]
        %v3448 = vld [vmem:[%s3441 + $0x30] sm:$0x7f]
        %v3449 = vmul.f32 %v3442, %v1905
        %v3450 = vmul.f32 %v3443, %v1905
        %v3451 = vmul.f32 %v3444, %v1905
        %v3452 = vmul.f32 %v3445, %v1905
        %v3453 = vmul.f32 %v3446, %v1905
        %v3454 = vadd.f32 %v3436, %v3449
        %v3455 = vadd.f32 %v3437, %v3450
        %v3456 = vadd.f32 %v3438, %v3451
        %v3457 = vadd.f32 %v3439, %v3452
        %v3458 = vadd.f32 %v3440, %v3453
        %v3459 = vmul.f32 %v3442, %v1917
        %v3460 = vmul.f32 %v3443, %v1917
        %v3461 = vmul.f32 %v3444, %v1917
        %v3462 = vmul.f32 %v3445, %v1917
        %v3463 = vmul.f32 %v3446, %v1917
        %v3469 = vrot.slane %v3459, 1
        %v3470 = vrot.slane %v3460, 1
        %v3471 = vrot.slane %v3461, 1
        %v3472 = vrot.slane %v3462, 1
        %v3473 = vrot.slane %v3463, 1
        %v3479 = vadd.f32 %v3454, %v3469
        %v3480 = vadd.f32 %v3455, %v3470
        %v3481 = vadd.f32 %v3456, %v3471
        %v3482 = vadd.f32 %v3457, %v3472
        %v3483 = vadd.f32 %v3458, %v3473
        %v3484 = vmul.f32 %v3442, %v1944
        %v3485 = vmul.f32 %v3443, %v1944
        %v3486 = vmul.f32 %v3444, %v1944
        %v3487 = vmul.f32 %v3445, %v1944
        %v3488 = vmul.f32 %v3446, %v1944
        %v3494 = vrot.slane %v3484, 2
        %v3495 = vrot.slane %v3485, 2
        %v3496 = vrot.slane %v3486, 2
        %v3497 = vrot.slane %v3487, 2
        %v3498 = vrot.slane %v3488, 2
        %v3504 = vadd.f32 %v3479, %v3494
        %v3505 = vadd.f32 %v3480, %v3495
        %v3506 = vadd.f32 %v3481, %v3496
        %v3507 = vadd.f32 %v3482, %v3497
        %v3508 = vadd.f32 %v3483, %v3498
        %v3509 = vmul.f32 %v3443, %v1971
        %v3510 = vmul.f32 %v3444, %v1971
        %v3511 = vmul.f32 %v3445, %v1971
        %v3512 = vmul.f32 %v3446, %v1971
        %v3513 = vmul.f32 %v3447, %v1971
        %v3514 = vadd.f32 %v3504, %v3509
        %v3515 = vadd.f32 %v3505, %v3510
        %v3516 = vadd.f32 %v3506, %v3511
        %v3517 = vadd.f32 %v3507, %v3512
        %v3518 = vadd.f32 %v3508, %v3513
        %v3519 = vmul.f32 %v3443, %v1983
        %v3520 = vmul.f32 %v3444, %v1983
        %v3521 = vmul.f32 %v3445, %v1983
        %v3522 = vmul.f32 %v3446, %v1983
        %v3523 = vmul.f32 %v3447, %v1983
        %v3529 = vrot.slane %v3519, 1
        %v3530 = vrot.slane %v3520, 1
        %v3531 = vrot.slane %v3521, 1
        %v3532 = vrot.slane %v3522, 1
        %v3533 = vrot.slane %v3523, 1
        %v3539 = vadd.f32 %v3514, %v3529
        %v3540 = vadd.f32 %v3515, %v3530
        %v3541 = vadd.f32 %v3516, %v3531
        %v3542 = vadd.f32 %v3517, %v3532
        %v3543 = vadd.f32 %v3518, %v3533
        %v3544 = vmul.f32 %v3443, %v2010
        %v3545 = vmul.f32 %v3444, %v2010
        %v3546 = vmul.f32 %v3445, %v2010
        %v3547 = vmul.f32 %v3446, %v2010
        %v3548 = vmul.f32 %v3447, %v2010
        %v3554 = vrot.slane %v3544, 2
        %v3555 = vrot.slane %v3545, 2
        %v3556 = vrot.slane %v3546, 2
        %v3557 = vrot.slane %v3547, 2
        %v3558 = vrot.slane %v3548, 2
        %v3564 = vadd.f32 %v3539, %v3554
        %v3565 = vadd.f32 %v3540, %v3555
        %v3566 = vadd.f32 %v3541, %v3556
        %v3567 = vadd.f32 %v3542, %v3557
        %v3568 = vadd.f32 %v3543, %v3558
        %v3569 = vmul.f32 %v3444, %v2037
        %v3570 = vmul.f32 %v3445, %v2037
        %v3571 = vmul.f32 %v3446, %v2037
        %v3572 = vmul.f32 %v3447, %v2037
        %v3573 = vmul.f32 %v3448, %v2037
        %v3574 = vadd.f32 %v3564, %v3569
        %v3575 = vadd.f32 %v3565, %v3570
        %v3576 = vadd.f32 %v3566, %v3571
        %v3577 = vadd.f32 %v3567, %v3572
        %v3578 = vadd.f32 %v3568, %v3573
        %v3579 = vmul.f32 %v3444, %v2049
        %v3580 = vmul.f32 %v3445, %v2049
        %v3581 = vmul.f32 %v3446, %v2049
        %v3582 = vmul.f32 %v3447, %v2049
        %v3583 = vmul.f32 %v3448, %v2049
        %v3589 = vrot.slane %v3579, 1
        %v3590 = vrot.slane %v3580, 1
        %v3591 = vrot.slane %v3581, 1
        %v3592 = vrot.slane %v3582, 1
        %v3593 = vrot.slane %v3583, 1
        %v3599 = vadd.f32 %v3574, %v3589
        %v3600 = vadd.f32 %v3575, %v3590
        %v3601 = vadd.f32 %v3576, %v3591
        %v3602 = vadd.f32 %v3577, %v3592
        %v3603 = vadd.f32 %v3578, %v3593
        %v3604 = vmul.f32 %v3444, %v2076
        %v3605 = vmul.f32 %v3445, %v2076
        %v3606 = vmul.f32 %v3446, %v2076
        %v3607 = vmul.f32 %v3447, %v2076
        %v3608 = vmul.f32 %v3448, %v2076
        %v3614 = vrot.slane %v3604, 2
        %v3615 = vrot.slane %v3605, 2
        %v3616 = vrot.slane %v3606, 2
        %v3617 = vrot.slane %v3607, 2
        %v3618 = vrot.slane %v3608, 2
        %v3624 = vadd.f32 %v3599, %v3614
        %v3625 = vadd.f32 %v3600, %v3615
        %v3626 = vadd.f32 %v3601, %v3616
        %v3627 = vadd.f32 %v3602, %v3617
        %v3628 = vadd.f32 %v3603, %v3618
        %s3629 = scalar_lea.vmem %s634, 840 [#allocation3]
        %v3630 = vld [vmem:[%s3629] sm:$0x7f]
        %v3631 = vld [vmem:[%s3629 + $0x8] sm:$0x7f]
        %v3632 = vld [vmem:[%s3629 + $0x10] sm:$0x7f]
        %v3633 = vld [vmem:[%s3629 + $0x18] sm:$0x7f]
        %v3634 = vld [vmem:[%s3629 + $0x20] sm:$0x7f]
        %v3635 = vld [vmem:[%s3629 + $0x28] sm:$0x7f]
        %v3636 = vld [vmem:[%s3629 + $0x30] sm:$0x7f]
        %v3637 = vmul.f32 %v3630, %v2111
        %v3638 = vmul.f32 %v3631, %v2111
        %v3639 = vmul.f32 %v3632, %v2111
        %v3640 = vmul.f32 %v3633, %v2111
        %v3641 = vmul.f32 %v3634, %v2111
        %v3642 = vadd.f32 %v3624, %v3637
        %v3643 = vadd.f32 %v3625, %v3638
        %v3644 = vadd.f32 %v3626, %v3639
        %v3645 = vadd.f32 %v3627, %v3640
        %v3646 = vadd.f32 %v3628, %v3641
        %v3647 = vmul.f32 %v3630, %v2123
        %v3648 = vmul.f32 %v3631, %v2123
        %v3649 = vmul.f32 %v3632, %v2123
        %v3650 = vmul.f32 %v3633, %v2123
        %v3651 = vmul.f32 %v3634, %v2123
        %v3657 = vrot.slane %v3647, 1
        %v3658 = vrot.slane %v3648, 1
        %v3659 = vrot.slane %v3649, 1
        %v3660 = vrot.slane %v3650, 1
        %v3661 = vrot.slane %v3651, 1
        %v3667 = vadd.f32 %v3642, %v3657
        %v3668 = vadd.f32 %v3643, %v3658
        %v3669 = vadd.f32 %v3644, %v3659
        %v3670 = vadd.f32 %v3645, %v3660
        %v3671 = vadd.f32 %v3646, %v3661
        %v3672 = vmul.f32 %v3630, %v2150
        %v3673 = vmul.f32 %v3631, %v2150
        %v3674 = vmul.f32 %v3632, %v2150
        %v3675 = vmul.f32 %v3633, %v2150
        %v3676 = vmul.f32 %v3634, %v2150
        %v3682 = vrot.slane %v3672, 2
        %v3683 = vrot.slane %v3673, 2
        %v3684 = vrot.slane %v3674, 2
        %v3685 = vrot.slane %v3675, 2
        %v3686 = vrot.slane %v3676, 2
        %v3692 = vadd.f32 %v3667, %v3682
        %v3693 = vadd.f32 %v3668, %v3683
        %v3694 = vadd.f32 %v3669, %v3684
        %v3695 = vadd.f32 %v3670, %v3685
        %v3696 = vadd.f32 %v3671, %v3686
        %v3697 = vmul.f32 %v3631, %v2177
        %v3698 = vmul.f32 %v3632, %v2177
        %v3699 = vmul.f32 %v3633, %v2177
        %v3700 = vmul.f32 %v3634, %v2177
        %v3701 = vmul.f32 %v3635, %v2177
        %v3702 = vadd.f32 %v3692, %v3697
        %v3703 = vadd.f32 %v3693, %v3698
        %v3704 = vadd.f32 %v3694, %v3699
        %v3705 = vadd.f32 %v3695, %v3700
        %v3706 = vadd.f32 %v3696, %v3701
        %v3707 = vmul.f32 %v3631, %v2189
        %v3708 = vmul.f32 %v3632, %v2189
        %v3709 = vmul.f32 %v3633, %v2189
        %v3710 = vmul.f32 %v3634, %v2189
        %v3711 = vmul.f32 %v3635, %v2189
        %v3717 = vrot.slane %v3707, 1
        %v3718 = vrot.slane %v3708, 1
        %v3719 = vrot.slane %v3709, 1
        %v3720 = vrot.slane %v3710, 1
        %v3721 = vrot.slane %v3711, 1
        %v3727 = vadd.f32 %v3702, %v3717
        %v3728 = vadd.f32 %v3703, %v3718
        %v3729 = vadd.f32 %v3704, %v3719
        %v3730 = vadd.f32 %v3705, %v3720
        %v3731 = vadd.f32 %v3706, %v3721
        %v3732 = vmul.f32 %v3631, %v2216
        %v3733 = vmul.f32 %v3632, %v2216
        %v3734 = vmul.f32 %v3633, %v2216
        %v3735 = vmul.f32 %v3634, %v2216
        %v3736 = vmul.f32 %v3635, %v2216
        %v3742 = vrot.slane %v3732, 2
        %v3743 = vrot.slane %v3733, 2
        %v3744 = vrot.slane %v3734, 2
        %v3745 = vrot.slane %v3735, 2
        %v3746 = vrot.slane %v3736, 2
        %v3752 = vadd.f32 %v3727, %v3742
        %v3753 = vadd.f32 %v3728, %v3743
        %v3754 = vadd.f32 %v3729, %v3744
        %v3755 = vadd.f32 %v3730, %v3745
        %v3756 = vadd.f32 %v3731, %v3746
        %v3757 = vmul.f32 %v3632, %v2243
        %v3758 = vmul.f32 %v3633, %v2243
        %v3759 = vmul.f32 %v3634, %v2243
        %v3760 = vmul.f32 %v3635, %v2243
        %v3761 = vmul.f32 %v3636, %v2243
        %v3762 = vadd.f32 %v3752, %v3757
        %v3763 = vadd.f32 %v3753, %v3758
        %v3764 = vadd.f32 %v3754, %v3759
        %v3765 = vadd.f32 %v3755, %v3760
        %v3766 = vadd.f32 %v3756, %v3761
        %v3767 = vmul.f32 %v3632, %v2255
        %v3768 = vmul.f32 %v3633, %v2255
        %v3769 = vmul.f32 %v3634, %v2255
        %v3770 = vmul.f32 %v3635, %v2255
        %v3771 = vmul.f32 %v3636, %v2255
        %v3777 = vrot.slane %v3767, 1
        %v3778 = vrot.slane %v3768, 1
        %v3779 = vrot.slane %v3769, 1
        %v3780 = vrot.slane %v3770, 1
        %v3781 = vrot.slane %v3771, 1
        %v3787 = vadd.f32 %v3762, %v3777
        %v3788 = vadd.f32 %v3763, %v3778
        %v3789 = vadd.f32 %v3764, %v3779
        %v3790 = vadd.f32 %v3765, %v3780
        %v3791 = vadd.f32 %v3766, %v3781
        %v3792 = vmul.f32 %v3632, %v2282
        %v3793 = vmul.f32 %v3633, %v2282
        %v3794 = vmul.f32 %v3634, %v2282
        %v3795 = vmul.f32 %v3635, %v2282
        %v3796 = vmul.f32 %v3636, %v2282
        %v3802 = vrot.slane %v3792, 2
        %v3803 = vrot.slane %v3793, 2
        %v3804 = vrot.slane %v3794, 2
        %v3805 = vrot.slane %v3795, 2
        %v3806 = vrot.slane %v3796, 2
        %v3812 = vadd.f32 %v3787, %v3802
        %v3813 = vadd.f32 %v3788, %v3803
        %v3814 = vadd.f32 %v3789, %v3804
        %v3815 = vadd.f32 %v3790, %v3805
        %v3816 = vadd.f32 %v3791, %v3806
        %v3817 = vtanh.pop %v3812
        %v3818 = vtanh.pop %v3813
        %v3819 = vtanh.pop %v3814
        %v3820 = vtanh.pop %v3815
        %v3821 = vtanh.pop %v3816
        %v3822 = vmax.f32 %v2308, %v3817
        %v3823 = vmax.f32 %v2309, %v3818
        %v3824 = vmax.f32 %v2310, %v3819
        %v3825 = vmax.f32 %v2311, %v3820
        %v3826 = vmax.f32 %v2312, %v3821
        %v3827 = vsub.f32 %v2308, %v3822
        %v3828 = vsub.f32 %v2309, %v3823
        %v3829 = vsub.f32 %v2310, %v3824
        %v3830 = vsub.f32 %v2311, %v3825
        %v3831 = vsub.f32 %v2312, %v3826
        %v3832 = vmul.f32 %v3827, 1.442695
        %v3833 = vpow.pop %v3832
        %v3834 = vmul.f32 %v3828, 1.442695
        %v3835 = vpow.pop %v3834
        %v3836 = vmul.f32 %v3829, 1.442695
        %v3837 = vpow.pop %v3836
        %v3838 = vmul.f32 %v3830, 1.442695
        %v3839 = vpow.pop %v3838
        %v3840 = vmul.f32 %v3831, 1.442695
        %v3841 = vpow.pop %v3840
        %v3842 = vsub.f32 %v3817, %v3822
        %v3843 = vsub.f32 %v3818, %v3823
        %v3844 = vsub.f32 %v3819, %v3824
        %v3845 = vsub.f32 %v3820, %v3825
        %v3846 = vsub.f32 %v3821, %v3826
        %v3847 = vmul.f32 %v3842, 1.442695
        %v3848 = vpow.pop %v3847
        %v3849 = vmul.f32 %v3843, 1.442695
        %v3850 = vpow.pop %v3849
        %v3851 = vmul.f32 %v3844, 1.442695
        %v3852 = vpow.pop %v3851
        %v3853 = vmul.f32 %v3845, 1.442695
        %v3854 = vpow.pop %v3853
        %v3855 = vmul.f32 %v3846, 1.442695
        %v3856 = vpow.pop %v3855
        %v3857 = vadd.f32 %v3833, %v3848
        %v3858 = vadd.f32 %v3835, %v3850
        %v3859 = vadd.f32 %v3837, %v3852
        %v3860 = vadd.f32 %v3839, %v3854
        %v3861 = vadd.f32 %v3841, %v3856
        %v3862 = vrcp.pop %v3857
        %v3863 = vmul.f32 1.0, %v3862
        %v3864 = vrcp.pop %v3858
        %v3865 = vmul.f32 1.0, %v3864
        %v3866 = vrcp.pop %v3859
        %v3867 = vmul.f32 1.0, %v3866
        %v3868 = vrcp.pop %v3860
        %v3869 = vmul.f32 1.0, %v3868
        %v3870 = vrcp.pop %v3861
        %v3871 = vmul.f32 1.0, %v3870
        %v3872 = vmul.f32 %v3833, %v3863
        %v3873 = vmul.f32 %v3835, %v3865
        %v3874 = vmul.f32 %v3837, %v3867
        %v3875 = vmul.f32 %v3839, %v3869
        %v3876 = vmul.f32 %v3841, %v3871
        %3877 = vst [vmem:[%s658] sm:$0x1f] %v3872
        %3878 = vst [vmem:[%s658 + $0x8] sm:$0x1f] %v3873
        %3879 = vst [vmem:[%s658 + $0x10] sm:$0x1f] %v3874
        %3880 = vst [vmem:[%s658 + $0x18] sm:$0x1f] %v3875
        %3881 = vst [vmem:[%s658 + $0x20] sm:$0x1f] %v3876
        %v3882 = vmul.f32 %v3848, %v3863
        %v3883 = vmul.f32 %v3850, %v3865
        %v3884 = vmul.f32 %v3852, %v3867
        %v3885 = vmul.f32 %v3854, %v3869
        %v3886 = vmul.f32 %v3856, %v3871
        %s3887 = scalar_lea.vmem %s658, 40 [#allocation6]
        %3888 = vst [vmem:[%s3887] sm:$0x1f] %v3882
        %3889 = vst [vmem:[%s3887 + $0x8] sm:$0x1f] %v3883
        %3890 = vst [vmem:[%s3887 + $0x10] sm:$0x1f] %v3884
        %3891 = vst [vmem:[%s3887 + $0x18] sm:$0x1f] %v3885
        %3892 = vst [vmem:[%s3887 + $0x20] sm:$0x1f] %v3886
        %s3893 = sand.u32 %s92, 1
        %s3894 = sand.u32 %s92, 1
        %s3895 = smul.addr %s3894, 80
        %s3896 = scalar_lea.vmem [#allocation6], %s3895
        // Predicated region
        $region75: #{tpu_custom_call.1} parent=65 // pred_check
          %p3897 = pneg %p102
        $region76: #{tpu_custom_call.1} parent=65 // pred_check_branch
          %3899 = sbr.rel (%p3897) target = $region78
        $region77: #{tpu_custom_call.1} parent=65 // pred_region
          %s3900 = smul.addr %s16, 8
          %s3901 = scalar_lea.vmem %s3, %s3900
          // Predicated region
          $region79: #{tpu_custom_call.1} parent=77 // pred_check
            _
          $region80: #{tpu_custom_call.1} parent=77 // pred_check_branch
            %3903 = sbr.rel (0) target = $region82
          $region81: #{tpu_custom_call.1} parent=77 // pred_region
            // Predicated region
            $region83: #{tpu_custom_call.1} parent=81 // pred_check
              _
            $region84: #{tpu_custom_call.1} parent=81 // pred_check_branch
              %3905 = sbr.rel (0) target = $region86
            $region85: #{tpu_custom_call.1} parent=81 // pred_region
              // Predicated region
              $region98: #{tpu_custom_call.1} parent=85 // pred_check
                _
              $region99: #{tpu_custom_call.1} parent=85 // pred_check_branch
                %3939 = sbr.rel (0) target = $region101
              $region100: #{tpu_custom_call.1} parent=85 // pred_region
                loop: start=0, step=1, limit=1
                $region102: #{tpu_custom_call.1} parent=100 // loop_pre_header
                  _
                $region103: #{tpu_custom_call.1} parent=100 // loop_header
                  %s3941 = sphi 0, %s3945
                  %p3942 = scmp.ge.s32.totalorder %s3941, 1
                  %s3946 = sphi %s3896, %s3896
                  %s3947 = sphi %s3901, %s3901
                $region104: #{tpu_custom_call.1} parent=100 // loop_header_branch
                  %3944 = sbr.rel (%p3942) target = $region108
                $region105: #{tpu_custom_call.1} parent=100 // loop_body
                  %v3948 = vld [vmem:[%s3946] sm:$0xff]
                  %3949 = vst [vmem:[%s3947] sm:$0xff] %v3948
                  %v3950 = vld [vmem:[%s3946 + $0x8] sm:$0xff]
                  %3951 = vst [vmem:[%s3947 + $0x10] sm:$0xff] %v3950
                  %v3952 = vld [vmem:[%s3946 + $0x10] sm:$0xff]
                  %3953 = vst [vmem:[%s3947 + $0x20] sm:$0xff] %v3952
                  %v3954 = vld [vmem:[%s3946 + $0x18] sm:$0xff]
                  %3955 = vst [vmem:[%s3947 + $0x30] sm:$0xff] %v3954
                  %v3956 = vld [vmem:[%s3946 + $0x20] sm:$0xff]
                  %3957 = vst [vmem:[%s3947 + $0x40] sm:$0xff] %v3956
                  %v3958 = vld [vmem:[%s3946 + $0x28] sm:$0xff]
                  %3959 = vst [vmem:[%s3947 + $0x50] sm:$0xff] %v3958
                  %v3960 = vld [vmem:[%s3946 + $0x30] sm:$0xff]
                  %3961 = vst [vmem:[%s3947 + $0x60] sm:$0xff] %v3960
                  %v3962 = vld [vmem:[%s3946 + $0x38] sm:$0xff]
                  %3963 = vst [vmem:[%s3947 + $0x70] sm:$0xff] %v3962
                  %v3964 = vld [vmem:[%s3946 + $0x40] sm:$0xff]
                  %3965 = vst [vmem:[%s3947 + $0x80] sm:$0xff] %v3964
                  %v3966 = vld [vmem:[%s3946 + $0x48] sm:$0xff]
                  %3967 = vst [vmem:[%s3947 + $0x90] sm:$0xff] %v3966
                $region106: #{tpu_custom_call.1} parent=100 // loop_footer
                  %s3945 = sadd.s32 1, %s3941
                $region107: #{tpu_custom_call.1} parent=100 // loop_footer_branch
                  %3940 = sbr.rel target = $region103
                $region108: #{tpu_custom_call.1} parent=100 // loop_exit
                  _
              $region101: #{tpu_custom_call.1} parent=85 // pred_fallthru
                _
              // Predicated region
              $region109: #{tpu_custom_call.1} parent=85 // pred_check
                _
              $region110: #{tpu_custom_call.1} parent=85 // pred_check_branch
                %3969 = sbr.rel target = $region112
              $region111: #{tpu_custom_call.1} parent=85 // pred_region
                _
              $region112: #{tpu_custom_call.1} parent=85 // pred_fallthru
                _
            $region86: #{tpu_custom_call.1} parent=81 // pred_fallthru
              _
            // Predicated region
            $region87: #{tpu_custom_call.1} parent=81 // pred_check
              _
            $region88: #{tpu_custom_call.1} parent=81 // pred_check_branch
              %3907 = sbr.rel target = $region90
            $region89: #{tpu_custom_call.1} parent=81 // pred_region
              %s3909 = ssub.s32 256, 1
              loop: start=0, step=1, limit=1
              $region91: #{tpu_custom_call.1} parent=89 // loop_pre_header
                _
              $region92: #{tpu_custom_call.1} parent=89 // loop_header
                %s3911 = sphi 0, %s3915
                %p3912 = scmp.ge.s32.totalorder %s3911, 1
                %s3916 = sphi %s3896, %s3896
                %s3917 = sphi %s3901, %s3901
              $region93: #{tpu_custom_call.1} parent=89 // loop_header_branch
                %3914 = sbr.rel (%p3912) target = $region97
              $region94: #{tpu_custom_call.1} parent=89 // loop_body
                %v3918 = vld [vmem:[%s3916] sm:%s3909]
                %3919 = vst [vmem:[%s3917] sm:%s3909] %v3918
                %v3920 = vld [vmem:[%s3916 + $0x8] sm:%s3909]
                %3921 = vst [vmem:[%s3917 + $0x10] sm:%s3909] %v3920
                %v3922 = vld [vmem:[%s3916 + $0x10] sm:%s3909]
                %3923 = vst [vmem:[%s3917 + $0x20] sm:%s3909] %v3922
                %v3924 = vld [vmem:[%s3916 + $0x18] sm:%s3909]
                %3925 = vst [vmem:[%s3917 + $0x30] sm:%s3909] %v3924
                %v3926 = vld [vmem:[%s3916 + $0x20] sm:%s3909]
                %3927 = vst [vmem:[%s3917 + $0x40] sm:%s3909] %v3926
                %v3928 = vld [vmem:[%s3916 + $0x28] sm:%s3909]
                %3929 = vst [vmem:[%s3917 + $0x50] sm:%s3909] %v3928
                %v3930 = vld [vmem:[%s3916 + $0x30] sm:%s3909]
                %3931 = vst [vmem:[%s3917 + $0x60] sm:%s3909] %v3930
                %v3932 = vld [vmem:[%s3916 + $0x38] sm:%s3909]
                %3933 = vst [vmem:[%s3917 + $0x70] sm:%s3909] %v3932
                %v3934 = vld [vmem:[%s3916 + $0x40] sm:%s3909]
                %3935 = vst [vmem:[%s3917 + $0x80] sm:%s3909] %v3934
                %v3936 = vld [vmem:[%s3916 + $0x48] sm:%s3909]
                %3937 = vst [vmem:[%s3917 + $0x90] sm:%s3909] %v3936
              $region95: #{tpu_custom_call.1} parent=89 // loop_footer
                %s3915 = sadd.s32 1, %s3911
              $region96: #{tpu_custom_call.1} parent=89 // loop_footer_branch
                %3910 = sbr.rel target = $region92
              $region97: #{tpu_custom_call.1} parent=89 // loop_exit
                _
            $region90: #{tpu_custom_call.1} parent=81 // pred_fallthru
              _
          $region82: #{tpu_custom_call.1} parent=77 // pred_fallthru
            _
          %3970 = vnop
        $region78: #{tpu_custom_call.1} parent=65 // pred_fallthru
          _
      $region66: #{tpu_custom_call.1} parent=5 // pred_fallthru
        _
      %p3971 = scmp.le.s32.totalorder 2, %s11
      // Predicated region
      $region113: #{tpu_custom_call.1} parent=5 // pred_check
        %p3972 = pneg %p3971
      $region114: #{tpu_custom_call.1} parent=5 // pred_check_branch
        %3974 = sbr.rel (%p3972) target = $region116
      $region115: #{tpu_custom_call.1} parent=5 // pred_region
        %s3975 = ssub.s32 %s11, 2
        // Predicated region
        $region117: #{tpu_custom_call.1} parent=115 // pred_check
          %p3976 = pneg %p108
        $region118: #{tpu_custom_call.1} parent=115 // pred_check_branch
          %3978 = sbr.rel (%p3976) target = $region120
        $region119: #{tpu_custom_call.1} parent=115 // pred_region
          %s3979 = sand.u32 %s93, 1
          %s3980 = sand.u32 %s93, 1
          %s3981 = smul.addr %s3980, 80
          %s3982 = scalar_lea.vmem [#allocation6], %s3981
        $region120: #{tpu_custom_call.1} parent=115 // pred_fallthru
          _
      $region116: #{tpu_custom_call.1} parent=5 // pred_fallthru
        _
    $region6: #{tpu_custom_call.1} parent=1 // loop_footer
      %s15 = sadd.s32 1, %s11
    $region7: #{tpu_custom_call.1} parent=1 // loop_footer_branch
      %10 = sbr.rel target = $region3
    $region8: #{tpu_custom_call.1} parent=1 // loop_exit
      _
    %3983 = vsyncpa [#allocation5], 1
    %s3984 = scalar_lea.sflag [#allocation5], 1
    %3985 = vsyncpa %s3984, 1

</llo_original>
